<compile_context>
chip_gen: v6e
topology: v6e:2x2x1
jax: 0.10.0
libtpu: 0.0.40
codegen_flags: <defaults>
</compile_context>

<pallas_src>
import math

import jax
import jax.numpy as jnp
from jax import lax
from jax.experimental import pallas as pl
from jax.experimental.pallas import tpu as pltpu

# ----------------------------------------------------------------------------
# Model hyper-parameters (small, but consistent with the reference forward).
# ----------------------------------------------------------------------------
WINDOW_SIZE = 24
B = 2                      # number of graphs (batch)
DIM_EMB = 16               # PASGeN dim_emb -> decoder dim_emb = 2*DIM_EMB
DIM_STATE = 8
DIM_STATE_ENC = 5
LEN_SPECT = 107
DIM_EMB_DEC = 2 * DIM_EMB  # 32

F_ATOM = 9                 # atom feature size
F_EDGE = 4                 # raw edge feature size (before concatenating state)

# unfold(size=24, step=1) on (LEN_SPECT + 12) then [::WINDOW_SIZE]
N_WIN = len(range(0, LEN_SPECT + 12 - WINDOW_SIZE + 1, WINDOW_SIZE))  # = 4
# NOTE: the reference hardcodes fc1 = Linear(125, 32), which implies
# len_spect ~= 3000 in the original checkpoint; here fc1's in_features is
# derived from LEN_SPECT so the forward is shape-consistent at small sizes.

N_HEADS = 4
DIM_HEAD = 32
QKV_DIM = 3 * N_HEADS * DIM_HEAD   # 384

NEG_SLOPE = 0.01           # torch.nn.LeakyReLU default

LEN_PAD = 128              # lane-padded spectrum width (107 -> 128)
Z_LAST_PAD = 128           # lane-padded z last dim (56 -> 128)


def _leaky(x):
    return jnp.where(x >= 0, x, NEG_SLOPE * x)


# ----------------------------------------------------------------------------
# Single fused kernel: graph encoder + fc_attn pool + SpectrumDecoder.
# Window-token rows are ordered window-major: row = w * G + g.
# ----------------------------------------------------------------------------
def _pasgen_kernel(
        x_ref, ea_ref, zst_ref, dsto_ref, pool_ref, oht_ref,
        wn_ref, bn_ref, we_ref, be_ref,
        wa1a_ref, wa1s_ref, ba1_ref, wa2t_ref, ba2_ref,
        zengt_ref, wqkv_ref, bqkv_ref, wo_ref, bo_ref, amask_ref,
        w1zt_ref, w1x_ref, b1_ref, w2_ref, b2_ref,
        fc1blk_ref, fc1b_ref, fc2blk_ref, fc2we_ref, fc2b_ref,
        out_ref, z_ref):
    f32 = jnp.float32
    num_g = out_ref.shape[0]
    rows = z_ref.shape[0]
    n_win = rows // num_g

    # ------------------ graph encoder ------------------
    # TODO(synk): mol_encoder is a constructor-injected dependency (not defined
    # in the reference); deterministic one-layer GNN stand-in.
    h_node = _leaky(jnp.dot(x_ref[...], wn_ref[...],
                            preferred_element_type=f32) + bn_ref[...])      # (N,16)
    msg = _leaky(jnp.dot(ea_ref[...], we_ref[...],
                         preferred_element_type=f32) + be_ref[...])         # (E,16)
    agg = jnp.dot(dsto_ref[...], msg, preferred_element_type=f32)           # (N,16)
    z_atom = _leaky(h_node + agg)                                           # (N,16)
    z_mol = jnp.dot(pool_ref[...], z_atom, preferred_element_type=f32)      # (G,16)

    # fc_attn MLP (w1 split by feature group -> no in-kernel concat needed).
    h = _leaky(jnp.dot(z_atom, wa1a_ref[...], preferred_element_type=f32)
               + jnp.dot(zst_ref[...], wa1s_ref[...], preferred_element_type=f32)
               + ba1_ref[...])                                              # (N,32)
    # scores as a (1, N) lane-vector so the per-graph softmax is a lane
    # reduction and the weighted pool is a plain (G,N)@(N,16) matmul.
    scores = lax.dot_general(wa2t_ref[...], h, (((1,), (1,)), ((), ())),
                             preferred_element_type=f32) + ba2_ref[...]     # (1,N)

    member = oht_ref[...] > 0                                               # (G,N)
    masked = jnp.where(member, scores, jnp.float32(-1e30))                  # (G,N)
    seg_max = jnp.max(masked, axis=1, keepdims=True)                        # (G,1)
    e = jnp.where(member, jnp.exp(masked - seg_max), 0.0)
    seg_sum = jnp.sum(e, axis=1, keepdims=True) + 1e-16
    attn = e * pl.reciprocal(seg_sum, approx=True)                          # (G,N)
    z_mol_state = jnp.dot(attn, z_atom, preferred_element_type=f32)         # (G,16)
    dec_in = jnp.concatenate([z_mol, z_mol_state], axis=1)                  # (G,32)

    # ------------------ spectrum decoder ------------------
    zengt = zengt_ref[...]                              # (32, 128) lane-padded
    # z = leaky_relu(sum(x * z_eng, dim=-1)) == leaky_relu(x @ z_eng^T)
    z0 = _leaky(jnp.dot(dec_in, zengt, preferred_element_type=f32))         # (G,128)

    # pad 6 zeros on the left, windows of 24 at stride 24 (only window 0 sees
    # the padding; the right padding is never read by the strided unfold).
    win_rows = [jnp.concatenate(
        [jnp.zeros((num_g, 6), f32), z0[:, :WINDOW_SIZE - 6]], axis=1)]
    for w in range(1, n_win):
        lo = w * WINDOW_SIZE - 6
        win_rows.append(z0[:, lo:lo + WINDOW_SIZE])
    zw = jnp.concatenate(win_rows, axis=0)              # (rows, 24) window-major

    # TODO(synk): TransformerBlock class is not provided in the reference;
    # stand-in = residual multi-head self-attention (num_heads=4, dim_head=32)
    # over each graph's window tokens, with a fused QKV projection and a
    # block-diagonal graph mask (graphs batched in the row axis).
    qkv = (jnp.dot(zw, wqkv_ref[...], preferred_element_type=f32)
           + bqkv_ref[...])                                                 # (rows,384)
    hd = N_HEADS * DIM_HEAD
    amask = amask_ref[...]                                                  # (rows,rows)
    wo = wo_ref[...]                                                        # (128,24)
    scale = 1.0 / math.sqrt(DIM_HEAD)
    attn_acc = jnp.zeros((rows, WINDOW_SIZE), f32)
    for hh in range(N_HEADS):
        lo, hi = hh * DIM_HEAD, (hh + 1) * DIM_HEAD
        qh = qkv[:, lo:hi]
        kh = qkv[:, hd + lo:hd + hi]
        vh = qkv[:, 2 * hd + lo:2 * hd + hi]
        s = lax.dot_general(qh, kh, (((1,), (1,)), ((), ())),
                            preferred_element_type=f32) * scale + amask     # (rows,rows)
        s = s - jnp.max(s, axis=-1, keepdims=True)
        p = jnp.exp(s)
        a = p * pl.reciprocal(jnp.sum(p, axis=-1, keepdims=True), approx=True)
        head = jnp.dot(a, vh, preferred_element_type=f32)                   # (rows,32)
        # contract each head against its own W_o slice -> no lane concat.
        attn_acc = attn_acc + jnp.dot(head, wo[lo:hi, :],
                                      preferred_element_type=f32)           # (rows,24)
    zt = zw + attn_acc + bo_ref[...]                                        # (rows,24)

    # z = cat([zt, x]) along features; x repeated over windows (window-major).
    x_rep = jnp.concatenate([dec_in] * n_win, axis=0)                       # (rows,32)

    # pred_layer (Linear 56->512, LeakyReLU, Linear 512->107) with w1 split so
    # no lane concat is needed; w2/b2 are lane-padded to 128 (pad cols -> 0).
    h1 = _leaky(jnp.dot(zt, w1zt_ref[...], preferred_element_type=f32)
                + jnp.dot(x_rep, w1x_ref[...], preferred_element_type=f32)
                + b1_ref[...])                                              # (rows,512)
    h2 = _leaky(jnp.dot(h1, w2_ref[...], preferred_element_type=f32)
                + b2_ref[...])                                              # (rows,128)

    # fc1 over the window axis for ALL graphs in one block-diagonal MXU pass.
    ht = _leaky(jnp.dot(fc1blk_ref[...], h2, preferred_element_type=f32)
                + fc1b_ref[...])                                            # (G*32,128)
    # fc2 on cat([h, z_eng]): h half via a block-diagonal matrix, z_eng half is
    # shared across graphs.
    out = (jnp.dot(fc2blk_ref[...], ht, preferred_element_type=f32)
           + jnp.dot(fc2we_ref[...], zengt, preferred_element_type=f32)
           + fc2b_ref[...])                                                 # (G,128)
    out_ref[...] = out.astype(out_ref.dtype)

    pad = z_ref.shape[1] - (WINDOW_SIZE + dec_in.shape[1])
    z_ref[...] = jnp.concatenate(
        [zt, x_rep, jnp.zeros((rows, pad), f32)], axis=1).astype(z_ref.dtype)


# ----------------------------------------------------------------------------
# Full forward (wrapper does gathers / one-hot / weight re-blocking only).
# ----------------------------------------------------------------------------
def pasgen_forward(params, x_atom, edge_index, edge_attr, batch, state):
    f32 = jnp.float32
    num_graphs = state.shape[0]
    n_atoms = x_atom.shape[0]
    rows = num_graphs * N_WIN

    # --- graph-side glue (embedding gathers, edge concat, one-hot) ---
    z_state = params["state_table"][state]                                  # (G,8)
    e_state = z_state[batch[edge_index[0]]]                                 # (E,8)
    ea = jnp.concatenate([edge_attr, e_state], axis=1).astype(f32)          # (E,12)
    zst = z_state[batch].astype(f32)                                        # (N,8)

    dst = edge_index[1]
    # TODO(synk): at real graph sizes, replace these dense one-hot scatter/pool
    # matrices with scalar-prefetched index tables or wrapper segment_sum.
    dst_onehot = (dst[None, :] ==
                  jnp.arange(n_atoms)[:, None]).astype(f32)                 # (N,E)
    onehot = (batch[None, :] ==
              jnp.arange(num_graphs)[:, None]).astype(f32)                  # (G,N)
    counts = jnp.maximum(jnp.sum(onehot, axis=1, keepdims=True), 1.0)
    pool_mat = onehot / counts                                              # (G,N)

    me = params["mol_encoder"]
    wa1 = params["fc_attn_w1"]

    dp = params["decoder"]
    tr = dp["transformer"]
    zengt = jnp.pad(dp["emb_eng"].T.astype(f32),
                    ((0, 0), (0, LEN_PAD - LEN_SPECT)))                     # (32,128)
    wqkv = jnp.concatenate([tr["wq"], tr["wk"], tr["wv"]], axis=1).astype(f32)
    bqkv = jnp.concatenate([tr["bq"], tr["bk"], tr["bv"]],
                           axis=0).reshape(1, QKV_DIM).astype(f32)
    wo = tr["wo"].astype(f32)                                               # (128,24)
    bo = tr["bo"].reshape(1, WINDOW_SIZE).astype(f32)
    w1 = dp["pred_w1"].astype(f32)                                          # (56,512)
    w1zt, w1x = w1[:WINDOW_SIZE], w1[WINDOW_SIZE:]
    b1 = dp["pred_b1"].reshape(1, -1).astype(f32)
    w2p = jnp.pad(dp["pred_w2"].astype(f32),
                  ((0, 0), (0, LEN_PAD - LEN_SPECT)))                       # (512,128)
    b2p = jnp.pad(dp["pred_b2"].reshape(1, LEN_SPECT).astype(f32),
                  ((0, 0), (0, LEN_PAD - LEN_SPECT)))

    eye = jnp.eye(num_graphs, dtype=f32)
    # fc1 block-diagonal: row (g*32+c), col (w*G+g')  ->  fc1_w[c,w] * [g==g']
    fc1w_co = dp["fc1_w"].T.astype(f32)                                     # (32,N_WIN)
    fc1blk = jnp.einsum('cw,gk->gcwk', fc1w_co, eye).reshape(
        num_graphs * 32, N_WIN * num_graphs)
    fc1b_rep = jnp.tile(dp["fc1_b"].reshape(1, 32).astype(f32),
                        (num_graphs, 1)).reshape(num_graphs * 32, 1)
    # fc2 block-diagonal (h half) and shared z_eng half.
    fc2wh = dp["fc2_w"][:32, 0].astype(f32)                                 # (32,)
    fc2blk = jnp.einsum('gk,c->gkc', eye, fc2wh).reshape(
        num_graphs, num_graphs * 32)
    fc2we = dp["fc2_w"][32:].T.astype(f32)                                  # (1,32)
    fc2b = dp["fc2_b"].reshape(1, 1).astype(f32)

    # block-diagonal (per-graph) additive attention mask, window-major rows.
    ridx = jnp.arange(rows)
    same = (ridx[:, None] % num_graphs) == (ridx[None, :] % num_graphs)
    amask = jnp.where(same, 0.0, -1e30).astype(f32)

    inputs = (
        x_atom.astype(f32), ea, zst, dst_onehot, pool_mat, onehot,
        me["w_node"].astype(f32), me["b_node"].reshape(1, DIM_EMB).astype(f32),
        me["w_edge"].astype(f32), me["b_edge"].reshape(1, DIM_EMB).astype(f32),
        wa1[:DIM_EMB].astype(f32), wa1[DIM_EMB:].astype(f32),
        params["fc_attn_b1"].reshape(1, 32).astype(f32),
        params["fc_attn_w2"].T.astype(f32),
        params["fc_attn_b2"].reshape(1, 1).astype(f32),
        zengt, wqkv, bqkv, wo, bo, amask,
        w1zt, w1x, b1, w2p, b2p,
        fc1blk, fc1b_rep, fc2blk, fc2we, fc2b,
    )
    const2 = lambda i: (0, 0)
    out_pad, z_pad = pl.pallas_call(
        _pasgen_kernel,
        out_shape=(
            jax.ShapeDtypeStruct((num_graphs, LEN_PAD), f32),
            jax.ShapeDtypeStruct((rows, Z_LAST_PAD), f32),
        ),
        grid=(1,),
        in_specs=[pl.BlockSpec(a.shape, const2) for a in inputs],
        out_specs=(
            pl.BlockSpec((num_graphs, LEN_PAD), const2),
            pl.BlockSpec((rows, Z_LAST_PAD), const2),
        ),
        compiler_params=pltpu.CompilerParams(
            dimension_semantics=("arbitrary",)),
    )(*inputs)

    out = out_pad[:, :LEN_SPECT]                                            # (G,107)
    z = (z_pad.reshape(N_WIN, num_graphs, Z_LAST_PAD)
         .transpose(1, 0, 2)[:, :, :WINDOW_SIZE + DIM_EMB_DEC])             # (G,4,56)
    return out, z


# ----------------------------------------------------------------------------
# Deterministic parameter initialization
# ----------------------------------------------------------------------------
def _init_linear(key, fan_in, fan_out):
    k1, k2 = jax.random.split(key)
    w = jax.random.normal(k1, (fan_in, fan_out), jnp.float32) / math.sqrt(fan_in)
    b = jax.random.normal(k2, (fan_out,), jnp.float32) * 0.01
    return w, b


def init_params(key):
    ks = jax.random.split(key, 16)
    p = {}
    p["state_table"] = jax.random.normal(ks[0], (DIM_STATE_ENC, DIM_STATE),
                                         jnp.float32)
    wn, bn = _init_linear(ks[1], F_ATOM, DIM_EMB)
    we, be = _init_linear(ks[2], F_EDGE + DIM_STATE, DIM_EMB)
    p["mol_encoder"] = {"w_node": wn, "b_node": bn, "w_edge": we, "b_edge": be}

    p["fc_attn_w1"], p["fc_attn_b1"] = _init_linear(ks[3], DIM_EMB + DIM_STATE, 32)
    p["fc_attn_w2"], p["fc_attn_b2"] = _init_linear(ks[4], 32, 1)

    dec = {}
    dec["emb_eng"] = jax.random.normal(ks[5], (LEN_SPECT, DIM_EMB_DEC), jnp.float32)
    tr = {}
    tr["wq"], tr["bq"] = _init_linear(ks[6], WINDOW_SIZE, N_HEADS * DIM_HEAD)
    tr["wk"], tr["bk"] = _init_linear(ks[7], WINDOW_SIZE, N_HEADS * DIM_HEAD)
    tr["wv"], tr["bv"] = _init_linear(ks[8], WINDOW_SIZE, N_HEADS * DIM_HEAD)
    tr["wo"], tr["bo"] = _init_linear(ks[9], N_HEADS * DIM_HEAD, WINDOW_SIZE)
    dec["transformer"] = tr
    dec["pred_w1"], dec["pred_b1"] = _init_linear(ks[10],
                                                  WINDOW_SIZE + DIM_EMB_DEC, 512)
    dec["pred_w2"], dec["pred_b2"] = _init_linear(ks[11], 512, LEN_SPECT)
    dec["fc1_w"], dec["fc1_b"] = _init_linear(ks[12], N_WIN, 32)
    dec["fc2_w"], dec["fc2_b"] = _init_linear(ks[13], 32 + DIM_EMB_DEC, 1)
    p["decoder"] = dec
    return p


# ----------------------------------------------------------------------------
# Main
# ----------------------------------------------------------------------------
if __name__ == "__main__":
    key = jax.random.PRNGKey(0)
    kp, kx, ke, ks = jax.random.split(key, 4)
    params = init_params(kp)

    # Two small graphs of 5 atoms each, ring topology (one directed edge/node).
    atoms_per_graph = 5
    n_atoms = B * atoms_per_graph
    x_atom = jax.random.normal(kx, (n_atoms, F_ATOM), jnp.float32)
    src, dst = [], []
    for g in range(B):
        off = g * atoms_per_graph
        for i in range(atoms_per_graph):
            src.append(off + i)
            dst.append(off + (i + 1) % atoms_per_graph)
    edge_index = jnp.array([src, dst], dtype=jnp.int32)                     # (2,E)
    edge_attr = jax.random.normal(ke, (edge_index.shape[1], F_EDGE), jnp.float32)
    batch = jnp.array([0] * atoms_per_graph + [1] * atoms_per_graph,
                      dtype=jnp.int32)
    state = jnp.array([1, 3], dtype=jnp.int32)                              # (B,)

    fwd = jax.jit(pasgen_forward)
    out, z = fwd(params, x_atom, edge_index, edge_attr, batch, state)
    jax.block_until_ready((out, z))

    assert out.shape == (B, LEN_SPECT), out.shape
    assert z.shape == (B, N_WIN, WINDOW_SIZE + DIM_EMB_DEC), z.shape
    assert jnp.all(jnp.isfinite(out)) and jnp.all(jnp.isfinite(z))
    print("KERNEL_OK")
</pallas_src>

<mosaic_0001>
module attributes {stable_mosaic.version = 11 : i64} {
  func.func @_pasgen_kernel(%arg0: i32, %arg1: memref<10x9xf32, #tpu.memory_space<vmem>>, %arg2: memref<10x12xf32, #tpu.memory_space<vmem>>, %arg3: memref<10x8xf32, #tpu.memory_space<vmem>>, %arg4: memref<10x10xf32, #tpu.memory_space<vmem>>, %arg5: memref<2x10xf32, #tpu.memory_space<vmem>>, %arg6: memref<2x10xf32, #tpu.memory_space<vmem>>, %arg7: memref<9x16xf32, #tpu.memory_space<vmem>>, %arg8: memref<1x16xf32, #tpu.memory_space<vmem>>, %arg9: memref<12x16xf32, #tpu.memory_space<vmem>>, %arg10: memref<1x16xf32, #tpu.memory_space<vmem>>, %arg11: memref<16x32xf32, #tpu.memory_space<vmem>>, %arg12: memref<8x32xf32, #tpu.memory_space<vmem>>, %arg13: memref<1x32xf32, #tpu.memory_space<vmem>>, %arg14: memref<1x32xf32, #tpu.memory_space<vmem>>, %arg15: memref<1x1xf32, #tpu.memory_space<vmem>>, %arg16: memref<32x128xf32, #tpu.memory_space<vmem>>, %arg17: memref<24x384xf32, #tpu.memory_space<vmem>>, %arg18: memref<1x384xf32, #tpu.memory_space<vmem>>, %arg19: memref<128x24xf32, #tpu.memory_space<vmem>>, %arg20: memref<1x24xf32, #tpu.memory_space<vmem>>, %arg21: memref<8x8xf32, #tpu.memory_space<vmem>>, %arg22: memref<24x512xf32, #tpu.memory_space<vmem>>, %arg23: memref<32x512xf32, #tpu.memory_space<vmem>>, %arg24: memref<1x512xf32, #tpu.memory_space<vmem>>, %arg25: memref<512x128xf32, #tpu.memory_space<vmem>>, %arg26: memref<1x128xf32, #tpu.memory_space<vmem>>, %arg27: memref<64x8xf32, #tpu.memory_space<vmem>>, %arg28: memref<64x1xf32, #tpu.memory_space<vmem>>, %arg29: memref<2x64xf32, #tpu.memory_space<vmem>>, %arg30: memref<1x32xf32, #tpu.memory_space<vmem>>, %arg31: memref<1x1xf32, #tpu.memory_space<vmem>>, %arg32: memref<2x128xf32, #tpu.memory_space<vmem>>, %arg33: memref<8x128xf32, #tpu.memory_space<vmem>>) attributes {dimension_semantics = [#tpu.dimension_semantics<arbitrary>], iteration_bounds = array<i64: 1>, scalar_prefetch = 0 : i64, scratch_operands = 0 : i64, tpu.core_type = #tpu.core_type<tc>, window_params = [{pipeline_mode = #tpu.pipeline_mode<synchronous>, transform_indices = @transform_0, window_bounds = array<i64: 10, 9>}, {pipeline_mode = #tpu.pipeline_mode<synchronous>, transform_indices = @transform_1, window_bounds = array<i64: 10, 12>}, {pipeline_mode = #tpu.pipeline_mode<synchronous>, transform_indices = @transform_2, window_bounds = array<i64: 10, 8>}, {pipeline_mode = #tpu.pipeline_mode<synchronous>, transform_indices = @transform_3, window_bounds = array<i64: 10, 10>}, {pipeline_mode = #tpu.pipeline_mode<synchronous>, transform_indices = @transform_4, window_bounds = array<i64: 2, 10>}, {pipeline_mode = #tpu.pipeline_mode<synchronous>, transform_indices = @transform_5, window_bounds = array<i64: 2, 10>}, {pipeline_mode = #tpu.pipeline_mode<synchronous>, transform_indices = @transform_6, window_bounds = array<i64: 9, 16>}, {pipeline_mode = #tpu.pipeline_mode<synchronous>, transform_indices = @transform_7, window_bounds = array<i64: 1, 16>}, {pipeline_mode = #tpu.pipeline_mode<synchronous>, transform_indices = @transform_8, window_bounds = array<i64: 12, 16>}, {pipeline_mode = #tpu.pipeline_mode<synchronous>, transform_indices = @transform_9, window_bounds = array<i64: 1, 16>}, {pipeline_mode = #tpu.pipeline_mode<synchronous>, transform_indices = @transform_10, window_bounds = array<i64: 16, 32>}, {pipeline_mode = #tpu.pipeline_mode<synchronous>, transform_indices = @transform_11, window_bounds = array<i64: 8, 32>}, {pipeline_mode = #tpu.pipeline_mode<synchronous>, transform_indices = @transform_12, window_bounds = array<i64: 1, 32>}, {pipeline_mode = #tpu.pipeline_mode<synchronous>, transform_indices = @transform_13, window_bounds = array<i64: 1, 32>}, {pipeline_mode = #tpu.pipeline_mode<synchronous>, transform_indices = @transform_14, window_bounds = array<i64: 1, 1>}, {pipeline_mode = #tpu.pipeline_mode<synchronous>, transform_indices = @transform_15, window_bounds = array<i64: 32, 128>}, {pipeline_mode = #tpu.pipeline_mode<synchronous>, transform_indices = @transform_16, window_bounds = array<i64: 24, 384>}, {pipeline_mode = #tpu.pipeline_mode<synchronous>, transform_indices = @transform_17, window_bounds = array<i64: 1, 384>}, {pipeline_mode = #tpu.pipeline_mode<synchronous>, transform_indices = @transform_18, window_bounds = array<i64: 128, 24>}, {pipeline_mode = #tpu.pipeline_mode<synchronous>, transform_indices = @transform_19, window_bounds = array<i64: 1, 24>}, {pipeline_mode = #tpu.pipeline_mode<synchronous>, transform_indices = @transform_20, window_bounds = array<i64: 8, 8>}, {pipeline_mode = #tpu.pipeline_mode<synchronous>, transform_indices = @transform_21, window_bounds = array<i64: 24, 512>}, {pipeline_mode = #tpu.pipeline_mode<synchronous>, transform_indices = @transform_22, window_bounds = array<i64: 32, 512>}, {pipeline_mode = #tpu.pipeline_mode<synchronous>, transform_indices = @transform_23, window_bounds = array<i64: 1, 512>}, {pipeline_mode = #tpu.pipeline_mode<synchronous>, transform_indices = @transform_24, window_bounds = array<i64: 512, 128>}, {pipeline_mode = #tpu.pipeline_mode<synchronous>, transform_indices = @transform_25, window_bounds = array<i64: 1, 128>}, {pipeline_mode = #tpu.pipeline_mode<synchronous>, transform_indices = @transform_26, window_bounds = array<i64: 64, 8>}, {pipeline_mode = #tpu.pipeline_mode<synchronous>, transform_indices = @transform_27, window_bounds = array<i64: 64, 1>}, {pipeline_mode = #tpu.pipeline_mode<synchronous>, transform_indices = @transform_28, window_bounds = array<i64: 2, 64>}, {pipeline_mode = #tpu.pipeline_mode<synchronous>, transform_indices = @transform_29, window_bounds = array<i64: 1, 32>}, {pipeline_mode = #tpu.pipeline_mode<synchronous>, transform_indices = @transform_30, window_bounds = array<i64: 1, 1>}, {pipeline_mode = #tpu.pipeline_mode<synchronous>, transform_indices = @transform_31, window_bounds = array<i64: 2, 128>}, {pipeline_mode = #tpu.pipeline_mode<synchronous>, transform_indices = @transform_32, window_bounds = array<i64: 8, 128>}]} {
    %c0 = arith.constant 0 : index
    %c0_0 = arith.constant 0 : index
    %0 = vector.load %arg1[%c0, %c0_0] : memref<10x9xf32, #tpu.memory_space<vmem>>, vector<10x9xf32>
    %c0_1 = arith.constant 0 : index
    %c0_2 = arith.constant 0 : index
    %1 = vector.load %arg7[%c0_1, %c0_2] : memref<9x16xf32, #tpu.memory_space<vmem>>, vector<9x16xf32>
    %cst = arith.constant dense<0.000000e+00> : vector<10x16xf32>
    %2 = tpu.matmul %0, %1, %cst {dimension_numbers = #tpu.dot_dimension_numbers<[1], [0], [0], [1], [0, 0, 1, 1], [], []>} : vector<10x9xf32>, vector<9x16xf32>, vector<10x16xf32> -> vector<10x16xf32>
    %c0_3 = arith.constant 0 : index
    %c0_4 = arith.constant 0 : index
    %3 = vector.load %arg8[%c0_3, %c0_4] : memref<1x16xf32, #tpu.memory_space<vmem>>, vector<1x16xf32>
    %4 = vector.broadcast %3 : vector<1x16xf32> to vector<10x16xf32>
    %5 = arith.addf %2, %4 : vector<10x16xf32>
    %cst_5 = arith.constant 0.000000e+00 : f32
    %6 = vector.broadcast %cst_5 : f32 to vector<10x16xf32>
    %7 = arith.cmpf oge, %5, %6 : vector<10x16xf32>
    %cst_6 = arith.constant 0.00999999977 : f32
    %8 = vector.broadcast %cst_6 : f32 to vector<10x16xf32>
    %9 = arith.mulf %8, %5 : vector<10x16xf32>
    %10 = arith.select %7, %5, %9 : vector<10x16xi1>, vector<10x16xf32>
    %c0_7 = arith.constant 0 : index
    %c0_8 = arith.constant 0 : index
    %11 = vector.load %arg2[%c0_7, %c0_8] : memref<10x12xf32, #tpu.memory_space<vmem>>, vector<10x12xf32>
    %c0_9 = arith.constant 0 : index
    %c0_10 = arith.constant 0 : index
    %12 = vector.load %arg9[%c0_9, %c0_10] : memref<12x16xf32, #tpu.memory_space<vmem>>, vector<12x16xf32>
    %cst_11 = arith.constant dense<0.000000e+00> : vector<10x16xf32>
    %13 = tpu.matmul %11, %12, %cst_11 {dimension_numbers = #tpu.dot_dimension_numbers<[1], [0], [0], [1], [0, 0, 1, 1], [], []>} : vector<10x12xf32>, vector<12x16xf32>, vector<10x16xf32> -> vector<10x16xf32>
    %c0_12 = arith.constant 0 : index
    %c0_13 = arith.constant 0 : index
    %14 = vector.load %arg10[%c0_12, %c0_13] : memref<1x16xf32, #tpu.memory_space<vmem>>, vector<1x16xf32>
    %15 = vector.broadcast %14 : vector<1x16xf32> to vector<10x16xf32>
    %16 = arith.addf %13, %15 : vector<10x16xf32>
    %cst_14 = arith.constant 0.000000e+00 : f32
    %17 = vector.broadcast %cst_14 : f32 to vector<10x16xf32>
    %18 = arith.cmpf oge, %16, %17 : vector<10x16xf32>
    %cst_15 = arith.constant 0.00999999977 : f32
    %19 = vector.broadcast %cst_15 : f32 to vector<10x16xf32>
    %20 = arith.mulf %19, %16 : vector<10x16xf32>
    %21 = arith.select %18, %16, %20 : vector<10x16xi1>, vector<10x16xf32>
    %c0_16 = arith.constant 0 : index
    %c0_17 = arith.constant 0 : index
    %22 = vector.load %arg4[%c0_16, %c0_17] : memref<10x10xf32, #tpu.memory_space<vmem>>, vector<10x10xf32>
    %cst_18 = arith.constant dense<0.000000e+00> : vector<10x16xf32>
    %23 = tpu.matmul %22, %21, %cst_18 {dimension_numbers = #tpu.dot_dimension_numbers<[1], [0], [0], [1], [0, 0, 1, 1], [], []>} : vector<10x10xf32>, vector<10x16xf32>, vector<10x16xf32> -> vector<10x16xf32>
    %24 = arith.addf %10, %23 : vector<10x16xf32>
    %cst_19 = arith.constant 0.000000e+00 : f32
    %25 = vector.broadcast %cst_19 : f32 to vector<10x16xf32>
    %26 = arith.cmpf oge, %24, %25 : vector<10x16xf32>
    %cst_20 = arith.constant 0.00999999977 : f32
    %27 = vector.broadcast %cst_20 : f32 to vector<10x16xf32>
    %28 = arith.mulf %27, %24 : vector<10x16xf32>
    %29 = arith.select %26, %24, %28 : vector<10x16xi1>, vector<10x16xf32>
    %c0_21 = arith.constant 0 : index
    %c0_22 = arith.constant 0 : index
    %30 = vector.load %arg5[%c0_21, %c0_22] : memref<2x10xf32, #tpu.memory_space<vmem>>, vector<2x10xf32>
    %cst_23 = arith.constant dense<0.000000e+00> : vector<2x16xf32>
    %31 = tpu.matmul %30, %29, %cst_23 {dimension_numbers = #tpu.dot_dimension_numbers<[1], [0], [0], [1], [0, 0, 1, 1], [], []>} : vector<2x10xf32>, vector<10x16xf32>, vector<2x16xf32> -> vector<2x16xf32>
    %c0_24 = arith.constant 0 : index
    %c0_25 = arith.constant 0 : index
    %32 = vector.load %arg11[%c0_24, %c0_25] : memref<16x32xf32, #tpu.memory_space<vmem>>, vector<16x32xf32>
    %cst_26 = arith.constant dense<0.000000e+00> : vector<10x32xf32>
    %33 = tpu.matmul %29, %32, %cst_26 {dimension_numbers = #tpu.dot_dimension_numbers<[1], [0], [0], [1], [0, 0, 1, 1], [], []>} : vector<10x16xf32>, vector<16x32xf32>, vector<10x32xf32> -> vector<10x32xf32>
    %c0_27 = arith.constant 0 : index
    %c0_28 = arith.constant 0 : index
    %34 = vector.load %arg3[%c0_27, %c0_28] : memref<10x8xf32, #tpu.memory_space<vmem>>, vector<10x8xf32>
    %c0_29 = arith.constant 0 : index
    %c0_30 = arith.constant 0 : index
    %35 = vector.load %arg12[%c0_29, %c0_30] : memref<8x32xf32, #tpu.memory_space<vmem>>, vector<8x32xf32>
    %cst_31 = arith.constant dense<0.000000e+00> : vector<10x32xf32>
    %36 = tpu.matmul %34, %35, %cst_31 {dimension_numbers = #tpu.dot_dimension_numbers<[1], [0], [0], [1], [0, 0, 1, 1], [], []>} : vector<10x8xf32>, vector<8x32xf32>, vector<10x32xf32> -> vector<10x32xf32>
    %37 = arith.addf %33, %36 : vector<10x32xf32>
    %c0_32 = arith.constant 0 : index
    %c0_33 = arith.constant 0 : index
    %38 = vector.load %arg13[%c0_32, %c0_33] : memref<1x32xf32, #tpu.memory_space<vmem>>, vector<1x32xf32>
    %39 = vector.broadcast %38 : vector<1x32xf32> to vector<10x32xf32>
    %40 = arith.addf %37, %39 : vector<10x32xf32>
    %cst_34 = arith.constant 0.000000e+00 : f32
    %41 = vector.broadcast %cst_34 : f32 to vector<10x32xf32>
    %42 = arith.cmpf oge, %40, %41 : vector<10x32xf32>
    %cst_35 = arith.constant 0.00999999977 : f32
    %43 = vector.broadcast %cst_35 : f32 to vector<10x32xf32>
    %44 = arith.mulf %43, %40 : vector<10x32xf32>
    %45 = arith.select %42, %40, %44 : vector<10x32xi1>, vector<10x32xf32>
    %c0_36 = arith.constant 0 : index
    %c0_37 = arith.constant 0 : index
    %46 = vector.load %arg14[%c0_36, %c0_37] : memref<1x32xf32, #tpu.memory_space<vmem>>, vector<1x32xf32>
    %cst_38 = arith.constant dense<0.000000e+00> : vector<1x10xf32>
    %47 = tpu.matmul %46, %45, %cst_38 {dimension_numbers = #tpu.dot_dimension_numbers<[1], [1], [0], [0], [0, 0, 1, 0], [], []>} : vector<1x32xf32>, vector<10x32xf32>, vector<1x10xf32> -> vector<1x10xf32>
    %c0_39 = arith.constant 0 : index
    %c0_40 = arith.constant 0 : index
    %48 = vector.load %arg15[%c0_39, %c0_40] : memref<1x1xf32, #tpu.memory_space<vmem>>, vector<1x1xf32>
    %49 = vector.broadcast %48 : vector<1x1xf32> to vector<1x10xf32>
    %50 = arith.addf %47, %49 : vector<1x10xf32>
    %c0_41 = arith.constant 0 : index
    %c0_42 = arith.constant 0 : index
    %51 = vector.load %arg6[%c0_41, %c0_42] : memref<2x10xf32, #tpu.memory_space<vmem>>, vector<2x10xf32>
    %cst_43 = arith.constant 0.000000e+00 : f32
    %52 = vector.broadcast %cst_43 : f32 to vector<2x10xf32>
    %53 = arith.cmpf ogt, %51, %52 : vector<2x10xf32>
    %cst_44 = arith.constant -1.000000e+30 : f32
    %54 = vector.shape_cast %50 : vector<1x10xf32> to vector<1x10xf32>
    %55 = vector.broadcast %54 : vector<1x10xf32> to vector<2x10xf32>
    %56 = vector.broadcast %cst_44 : f32 to vector<2x10xf32>
    %57 = arith.select %53, %55, %56 : vector<2x10xi1>, vector<2x10xf32>
    %cst_45 = arith.constant dense<0xFF800000> : vector<2xf32>
    %58 = vector.multi_reduction <maximumf>, %57, %cst_45 [1] : vector<2x10xf32> to vector<2xf32>
    %59 = vector.shape_cast %58 : vector<2xf32> to vector<2x1xf32>
    %60 = vector.broadcast %59 : vector<2x1xf32> to vector<2x10xf32>
    %61 = arith.subf %57, %60 : vector<2x10xf32>
    %62 = math.exp %61 : vector<2x10xf32>
    %cst_46 = arith.constant 0.000000e+00 : f32
    %63 = vector.broadcast %cst_46 : f32 to vector<2x10xf32>
    %64 = arith.select %53, %62, %63 : vector<2x10xi1>, vector<2x10xf32>
    %cst_47 = arith.constant dense<0.000000e+00> : vector<2xf32>
    %65 = vector.multi_reduction <add>, %64, %cst_47 [1] : vector<2x10xf32> to vector<2xf32>
    %66 = vector.shape_cast %65 : vector<2xf32> to vector<2x1xf32>
    %cst_48 = arith.constant 1.000000e-16 : f32
    %67 = vector.broadcast %cst_48 : f32 to vector<2x1xf32>
    %68 = arith.addf %66, %67 : vector<2x1xf32>
    %69 = tpu.reciprocal %68 {approx = true} : vector<2x1xf32> -> vector<2x1xf32>
    %70 = vector.broadcast %69 : vector<2x1xf32> to vector<2x10xf32>
    %71 = arith.mulf %64, %70 : vector<2x10xf32>
    %cst_49 = arith.constant dense<0.000000e+00> : vector<2x16xf32>
    %72 = tpu.matmul %71, %29, %cst_49 {dimension_numbers = #tpu.dot_dimension_numbers<[1], [0], [0], [1], [0, 0, 1, 1], [], []>} : vector<2x10xf32>, vector<10x16xf32>, vector<2x16xf32> -> vector<2x16xf32>
    %73 = tpu.concatenate %31, %72 in 1 : vector<2x16xf32>, vector<2x16xf32> -> vector<2x32xf32>
    %c0_50 = arith.constant 0 : index
    %c0_51 = arith.constant 0 : index
    %74 = vector.load %arg16[%c0_50, %c0_51] : memref<32x128xf32, #tpu.memory_space<vmem>>, vector<32x128xf32>
    %cst_52 = arith.constant dense<0.000000e+00> : vector<2x128xf32>
    %75 = tpu.matmul %73, %74, %cst_52 {dimension_numbers = #tpu.dot_dimension_numbers<[1], [0], [0], [1], [0, 0, 1, 1], [], []>} : vector<2x32xf32>, vector<32x128xf32>, vector<2x128xf32> -> vector<2x128xf32>
    %cst_53 = arith.constant 0.000000e+00 : f32
    %76 = vector.broadcast %cst_53 : f32 to vector<2x128xf32>
    %77 = arith.cmpf oge, %75, %76 : vector<2x128xf32>
    %cst_54 = arith.constant 0.00999999977 : f32
    %78 = vector.broadcast %cst_54 : f32 to vector<2x128xf32>
    %79 = arith.mulf %78, %75 : vector<2x128xf32>
    %80 = arith.select %77, %75, %79 : vector<2x128xi1>, vector<2x128xf32>
    %cst_55 = arith.constant 0.000000e+00 : f32
    %81 = vector.broadcast %cst_55 : f32 to vector<2x6xf32>
    %82 = vector.extract_strided_slice %80 {offsets = [0, 0], sizes = [2, 18], strides = [1, 1]} : vector<2x128xf32> to vector<2x18xf32>
    %83 = tpu.concatenate %81, %82 in 1 : vector<2x6xf32>, vector<2x18xf32> -> vector<2x24xf32>
    %84 = vector.extract_strided_slice %80 {offsets = [0, 18], sizes = [2, 24], strides = [1, 1]} : vector<2x128xf32> to vector<2x24xf32>
    %85 = vector.extract_strided_slice %80 {offsets = [0, 42], sizes = [2, 24], strides = [1, 1]} : vector<2x128xf32> to vector<2x24xf32>
    %86 = vector.extract_strided_slice %80 {offsets = [0, 66], sizes = [2, 24], strides = [1, 1]} : vector<2x128xf32> to vector<2x24xf32>
    %87 = tpu.concatenate %83, %84, %85, %86 in 0 : vector<2x24xf32>, vector<2x24xf32>, vector<2x24xf32>, vector<2x24xf32> -> vector<8x24xf32>
    %c0_56 = arith.constant 0 : index
    %c0_57 = arith.constant 0 : index
    %88 = vector.load %arg17[%c0_56, %c0_57] : memref<24x384xf32, #tpu.memory_space<vmem>>, vector<24x384xf32>
    %cst_58 = arith.constant dense<0.000000e+00> : vector<8x384xf32>
    %89 = tpu.matmul %87, %88, %cst_58 {dimension_numbers = #tpu.dot_dimension_numbers<[1], [0], [0], [1], [0, 0, 1, 1], [], []>} : vector<8x24xf32>, vector<24x384xf32>, vector<8x384xf32> -> vector<8x384xf32>
    %c0_59 = arith.constant 0 : index
    %c0_60 = arith.constant 0 : index
    %90 = vector.load %arg18[%c0_59, %c0_60] : memref<1x384xf32, #tpu.memory_space<vmem>>, vector<1x384xf32>
    %91 = vector.broadcast %90 : vector<1x384xf32> to vector<8x384xf32>
    %92 = arith.addf %89, %91 : vector<8x384xf32>
    %c0_61 = arith.constant 0 : index
    %c0_62 = arith.constant 0 : index
    %93 = vector.load %arg21[%c0_61, %c0_62] : memref<8x8xf32, #tpu.memory_space<vmem>>, vector<8x8xf32>
    %c0_63 = arith.constant 0 : index
    %c0_64 = arith.constant 0 : index
    %94 = vector.load %arg19[%c0_63, %c0_64] : memref<128x24xf32, #tpu.memory_space<vmem>>, vector<128x24xf32>
    %cst_65 = arith.constant 0.000000e+00 : f32
    %95 = vector.broadcast %cst_65 : f32 to vector<8x24xf32>
    %96 = vector.extract_strided_slice %92 {offsets = [0, 0], sizes = [8, 32], strides = [1, 1]} : vector<8x384xf32> to vector<8x32xf32>
    %97 = vector.extract_strided_slice %92 {offsets = [0, 128], sizes = [8, 32], strides = [1, 1]} : vector<8x384xf32> to vector<8x32xf32>
    %98 = vector.extract_strided_slice %92 {offsets = [0, 256], sizes = [8, 32], strides = [1, 1]} : vector<8x384xf32> to vector<8x32xf32>
    %cst_66 = arith.constant dense<0.000000e+00> : vector<8x8xf32>
    %99 = tpu.matmul %96, %97, %cst_66 {dimension_numbers = #tpu.dot_dimension_numbers<[1], [1], [0], [0], [0, 0, 1, 0], [], []>} : vector<8x32xf32>, vector<8x32xf32>, vector<8x8xf32> -> vector<8x8xf32>
    %cst_67 = arith.constant 0.176776692 : f32
    %100 = vector.broadcast %cst_67 : f32 to vector<8x8xf32>
    %101 = arith.mulf %99, %100 : vector<8x8xf32>
    %102 = arith.addf %101, %93 : vector<8x8xf32>
    %cst_68 = arith.constant dense<0xFF800000> : vector<8xf32>
    %103 = vector.multi_reduction <maximumf>, %102, %cst_68 [1] : vector<8x8xf32> to vector<8xf32>
    %104 = vector.shape_cast %103 : vector<8xf32> to vector<8x1xf32>
    %105 = vector.broadcast %104 : vector<8x1xf32> to vector<8x8xf32>
    %106 = arith.subf %102, %105 : vector<8x8xf32>
    %107 = math.exp %106 : vector<8x8xf32>
    %cst_69 = arith.constant dense<0.000000e+00> : vector<8xf32>
    %108 = vector.multi_reduction <add>, %107, %cst_69 [1] : vector<8x8xf32> to vector<8xf32>
    %109 = vector.shape_cast %108 : vector<8xf32> to vector<8x1xf32>
    %110 = tpu.reciprocal %109 {approx = true} : vector<8x1xf32> -> vector<8x1xf32>
    %111 = vector.broadcast %110 : vector<8x1xf32> to vector<8x8xf32>
    %112 = arith.mulf %107, %111 : vector<8x8xf32>
    %cst_70 = arith.constant dense<0.000000e+00> : vector<8x32xf32>
    %113 = tpu.matmul %112, %98, %cst_70 {dimension_numbers = #tpu.dot_dimension_numbers<[1], [0], [0], [1], [0, 0, 1, 1], [], []>} : vector<8x8xf32>, vector<8x32xf32>, vector<8x32xf32> -> vector<8x32xf32>
    %114 = vector.extract_strided_slice %94 {offsets = [0, 0], sizes = [32, 24], strides = [1, 1]} : vector<128x24xf32> to vector<32x24xf32>
    %cst_71 = arith.constant dense<0.000000e+00> : vector<8x24xf32>
    %115 = tpu.matmul %113, %114, %cst_71 {dimension_numbers = #tpu.dot_dimension_numbers<[1], [0], [0], [1], [0, 0, 1, 1], [], []>} : vector<8x32xf32>, vector<32x24xf32>, vector<8x24xf32> -> vector<8x24xf32>
    %116 = arith.addf %95, %115 : vector<8x24xf32>
    %117 = vector.extract_strided_slice %92 {offsets = [0, 32], sizes = [8, 32], strides = [1, 1]} : vector<8x384xf32> to vector<8x32xf32>
    %118 = vector.extract_strided_slice %92 {offsets = [0, 160], sizes = [8, 32], strides = [1, 1]} : vector<8x384xf32> to vector<8x32xf32>
    %119 = vector.extract_strided_slice %92 {offsets = [0, 288], sizes = [8, 32], strides = [1, 1]} : vector<8x384xf32> to vector<8x32xf32>
    %cst_72 = arith.constant dense<0.000000e+00> : vector<8x8xf32>
    %120 = tpu.matmul %117, %118, %cst_72 {dimension_numbers = #tpu.dot_dimension_numbers<[1], [1], [0], [0], [0, 0, 1, 0], [], []>} : vector<8x32xf32>, vector<8x32xf32>, vector<8x8xf32> -> vector<8x8xf32>
    %cst_73 = arith.constant 0.176776692 : f32
    %121 = vector.broadcast %cst_73 : f32 to vector<8x8xf32>
    %122 = arith.mulf %120, %121 : vector<8x8xf32>
    %123 = arith.addf %122, %93 : vector<8x8xf32>
    %cst_74 = arith.constant dense<0xFF800000> : vector<8xf32>
    %124 = vector.multi_reduction <maximumf>, %123, %cst_74 [1] : vector<8x8xf32> to vector<8xf32>
    %125 = vector.shape_cast %124 : vector<8xf32> to vector<8x1xf32>
    %126 = vector.broadcast %125 : vector<8x1xf32> to vector<8x8xf32>
    %127 = arith.subf %123, %126 : vector<8x8xf32>
    %128 = math.exp %127 : vector<8x8xf32>
    %cst_75 = arith.constant dense<0.000000e+00> : vector<8xf32>
    %129 = vector.multi_reduction <add>, %128, %cst_75 [1] : vector<8x8xf32> to vector<8xf32>
    %130 = vector.shape_cast %129 : vector<8xf32> to vector<8x1xf32>
    %131 = tpu.reciprocal %130 {approx = true} : vector<8x1xf32> -> vector<8x1xf32>
    %132 = vector.broadcast %131 : vector<8x1xf32> to vector<8x8xf32>
    %133 = arith.mulf %128, %132 : vector<8x8xf32>
    %cst_76 = arith.constant dense<0.000000e+00> : vector<8x32xf32>
    %134 = tpu.matmul %133, %119, %cst_76 {dimension_numbers = #tpu.dot_dimension_numbers<[1], [0], [0], [1], [0, 0, 1, 1], [], []>} : vector<8x8xf32>, vector<8x32xf32>, vector<8x32xf32> -> vector<8x32xf32>
    %135 = vector.extract_strided_slice %94 {offsets = [32, 0], sizes = [32, 24], strides = [1, 1]} : vector<128x24xf32> to vector<32x24xf32>
    %cst_77 = arith.constant dense<0.000000e+00> : vector<8x24xf32>
    %136 = tpu.matmul %134, %135, %cst_77 {dimension_numbers = #tpu.dot_dimension_numbers<[1], [0], [0], [1], [0, 0, 1, 1], [], []>} : vector<8x32xf32>, vector<32x24xf32>, vector<8x24xf32> -> vector<8x24xf32>
    %137 = arith.addf %116, %136 : vector<8x24xf32>
    %138 = vector.extract_strided_slice %92 {offsets = [0, 64], sizes = [8, 32], strides = [1, 1]} : vector<8x384xf32> to vector<8x32xf32>
    %139 = vector.extract_strided_slice %92 {offsets = [0, 192], sizes = [8, 32], strides = [1, 1]} : vector<8x384xf32> to vector<8x32xf32>
    %140 = vector.extract_strided_slice %92 {offsets = [0, 320], sizes = [8, 32], strides = [1, 1]} : vector<8x384xf32> to vector<8x32xf32>
    %cst_78 = arith.constant dense<0.000000e+00> : vector<8x8xf32>
    %141 = tpu.matmul %138, %139, %cst_78 {dimension_numbers = #tpu.dot_dimension_numbers<[1], [1], [0], [0], [0, 0, 1, 0], [], []>} : vector<8x32xf32>, vector<8x32xf32>, vector<8x8xf32> -> vector<8x8xf32>
    %cst_79 = arith.constant 0.176776692 : f32
    %142 = vector.broadcast %cst_79 : f32 to vector<8x8xf32>
    %143 = arith.mulf %141, %142 : vector<8x8xf32>
    %144 = arith.addf %143, %93 : vector<8x8xf32>
    %cst_80 = arith.constant dense<0xFF800000> : vector<8xf32>
    %145 = vector.multi_reduction <maximumf>, %144, %cst_80 [1] : vector<8x8xf32> to vector<8xf32>
    %146 = vector.shape_cast %145 : vector<8xf32> to vector<8x1xf32>
    %147 = vector.broadcast %146 : vector<8x1xf32> to vector<8x8xf32>
    %148 = arith.subf %144, %147 : vector<8x8xf32>
    %149 = math.exp %148 : vector<8x8xf32>
    %cst_81 = arith.constant dense<0.000000e+00> : vector<8xf32>
    %150 = vector.multi_reduction <add>, %149, %cst_81 [1] : vector<8x8xf32> to vector<8xf32>
    %151 = vector.shape_cast %150 : vector<8xf32> to vector<8x1xf32>
    %152 = tpu.reciprocal %151 {approx = true} : vector<8x1xf32> -> vector<8x1xf32>
    %153 = vector.broadcast %152 : vector<8x1xf32> to vector<8x8xf32>
    %154 = arith.mulf %149, %153 : vector<8x8xf32>
    %cst_82 = arith.constant dense<0.000000e+00> : vector<8x32xf32>
    %155 = tpu.matmul %154, %140, %cst_82 {dimension_numbers = #tpu.dot_dimension_numbers<[1], [0], [0], [1], [0, 0, 1, 1], [], []>} : vector<8x8xf32>, vector<8x32xf32>, vector<8x32xf32> -> vector<8x32xf32>
    %156 = vector.extract_strided_slice %94 {offsets = [64, 0], sizes = [32, 24], strides = [1, 1]} : vector<128x24xf32> to vector<32x24xf32>
    %cst_83 = arith.constant dense<0.000000e+00> : vector<8x24xf32>
    %157 = tpu.matmul %155, %156, %cst_83 {dimension_numbers = #tpu.dot_dimension_numbers<[1], [0], [0], [1], [0, 0, 1, 1], [], []>} : vector<8x32xf32>, vector<32x24xf32>, vector<8x24xf32> -> vector<8x24xf32>
    %158 = arith.addf %137, %157 : vector<8x24xf32>
    %159 = vector.extract_strided_slice %92 {offsets = [0, 96], sizes = [8, 32], strides = [1, 1]} : vector<8x384xf32> to vector<8x32xf32>
    %160 = vector.extract_strided_slice %92 {offsets = [0, 224], sizes = [8, 32], strides = [1, 1]} : vector<8x384xf32> to vector<8x32xf32>
    %161 = vector.extract_strided_slice %92 {offsets = [0, 352], sizes = [8, 32], strides = [1, 1]} : vector<8x384xf32> to vector<8x32xf32>
    %cst_84 = arith.constant dense<0.000000e+00> : vector<8x8xf32>
    %162 = tpu.matmul %159, %160, %cst_84 {dimension_numbers = #tpu.dot_dimension_numbers<[1], [1], [0], [0], [0, 0, 1, 0], [], []>} : vector<8x32xf32>, vector<8x32xf32>, vector<8x8xf32> -> vector<8x8xf32>
    %cst_85 = arith.constant 0.176776692 : f32
    %163 = vector.broadcast %cst_85 : f32 to vector<8x8xf32>
    %164 = arith.mulf %162, %163 : vector<8x8xf32>
    %165 = arith.addf %164, %93 : vector<8x8xf32>
    %cst_86 = arith.constant dense<0xFF800000> : vector<8xf32>
    %166 = vector.multi_reduction <maximumf>, %165, %cst_86 [1] : vector<8x8xf32> to vector<8xf32>
    %167 = vector.shape_cast %166 : vector<8xf32> to vector<8x1xf32>
    %168 = vector.broadcast %167 : vector<8x1xf32> to vector<8x8xf32>
    %169 = arith.subf %165, %168 : vector<8x8xf32>
    %170 = math.exp %169 : vector<8x8xf32>
    %cst_87 = arith.constant dense<0.000000e+00> : vector<8xf32>
    %171 = vector.multi_reduction <add>, %170, %cst_87 [1] : vector<8x8xf32> to vector<8xf32>
    %172 = vector.shape_cast %171 : vector<8xf32> to vector<8x1xf32>
    %173 = tpu.reciprocal %172 {approx = true} : vector<8x1xf32> -> vector<8x1xf32>
    %174 = vector.broadcast %173 : vector<8x1xf32> to vector<8x8xf32>
    %175 = arith.mulf %170, %174 : vector<8x8xf32>
    %cst_88 = arith.constant dense<0.000000e+00> : vector<8x32xf32>
    %176 = tpu.matmul %175, %161, %cst_88 {dimension_numbers = #tpu.dot_dimension_numbers<[1], [0], [0], [1], [0, 0, 1, 1], [], []>} : vector<8x8xf32>, vector<8x32xf32>, vector<8x32xf32> -> vector<8x32xf32>
    %177 = vector.extract_strided_slice %94 {offsets = [96, 0], sizes = [32, 24], strides = [1, 1]} : vector<128x24xf32> to vector<32x24xf32>
    %cst_89 = arith.constant dense<0.000000e+00> : vector<8x24xf32>
    %178 = tpu.matmul %176, %177, %cst_89 {dimension_numbers = #tpu.dot_dimension_numbers<[1], [0], [0], [1], [0, 0, 1, 1], [], []>} : vector<8x32xf32>, vector<32x24xf32>, vector<8x24xf32> -> vector<8x24xf32>
    %179 = arith.addf %158, %178 : vector<8x24xf32>
    %180 = arith.addf %87, %179 : vector<8x24xf32>
    %c0_90 = arith.constant 0 : index
    %c0_91 = arith.constant 0 : index
    %181 = vector.load %arg20[%c0_90, %c0_91] : memref<1x24xf32, #tpu.memory_space<vmem>>, vector<1x24xf32>
    %182 = vector.broadcast %181 : vector<1x24xf32> to vector<8x24xf32>
    %183 = arith.addf %180, %182 : vector<8x24xf32>
    %184 = tpu.concatenate %73, %73, %73, %73 in 0 : vector<2x32xf32>, vector<2x32xf32>, vector<2x32xf32>, vector<2x32xf32> -> vector<8x32xf32>
    %c0_92 = arith.constant 0 : index
    %c0_93 = arith.constant 0 : index
    %185 = vector.load %arg22[%c0_92, %c0_93] : memref<24x512xf32, #tpu.memory_space<vmem>>, vector<24x512xf32>
    %cst_94 = arith.constant dense<0.000000e+00> : vector<8x512xf32>
    %186 = tpu.matmul %183, %185, %cst_94 {dimension_numbers = #tpu.dot_dimension_numbers<[1], [0], [0], [1], [0, 0, 1, 1], [], []>} : vector<8x24xf32>, vector<24x512xf32>, vector<8x512xf32> -> vector<8x512xf32>
    %c0_95 = arith.constant 0 : index
    %c0_96 = arith.constant 0 : index
    %187 = vector.load %arg23[%c0_95, %c0_96] : memref<32x512xf32, #tpu.memory_space<vmem>>, vector<32x512xf32>
    %cst_97 = arith.constant dense<0.000000e+00> : vector<8x512xf32>
    %188 = tpu.matmul %184, %187, %cst_97 {dimension_numbers = #tpu.dot_dimension_numbers<[1], [0], [0], [1], [0, 0, 1, 1], [], []>} : vector<8x32xf32>, vector<32x512xf32>, vector<8x512xf32> -> vector<8x512xf32>
    %189 = arith.addf %186, %188 : vector<8x512xf32>
    %c0_98 = arith.constant 0 : index
    %c0_99 = arith.constant 0 : index
    %190 = vector.load %arg24[%c0_98, %c0_99] : memref<1x512xf32, #tpu.memory_space<vmem>>, vector<1x512xf32>
    %191 = vector.broadcast %190 : vector<1x512xf32> to vector<8x512xf32>
    %192 = arith.addf %189, %191 : vector<8x512xf32>
    %cst_100 = arith.constant 0.000000e+00 : f32
    %193 = vector.broadcast %cst_100 : f32 to vector<8x512xf32>
    %194 = arith.cmpf oge, %192, %193 : vector<8x512xf32>
    %cst_101 = arith.constant 0.00999999977 : f32
    %195 = vector.broadcast %cst_101 : f32 to vector<8x512xf32>
    %196 = arith.mulf %195, %192 : vector<8x512xf32>
    %197 = arith.select %194, %192, %196 : vector<8x512xi1>, vector<8x512xf32>
    %c0_102 = arith.constant 0 : index
    %c0_103 = arith.constant 0 : index
    %198 = vector.load %arg25[%c0_102, %c0_103] : memref<512x128xf32, #tpu.memory_space<vmem>>, vector<512x128xf32>
    %cst_104 = arith.constant dense<0.000000e+00> : vector<8x128xf32>
    %199 = tpu.matmul %197, %198, %cst_104 {dimension_numbers = #tpu.dot_dimension_numbers<[1], [0], [0], [1], [0, 0, 1, 1], [], []>} : vector<8x512xf32>, vector<512x128xf32>, vector<8x128xf32> -> vector<8x128xf32>
    %c0_105 = arith.constant 0 : index
    %c0_106 = arith.constant 0 : index
    %200 = vector.load %arg26[%c0_105, %c0_106] : memref<1x128xf32, #tpu.memory_space<vmem>>, vector<1x128xf32>
    %201 = vector.broadcast %200 : vector<1x128xf32> to vector<8x128xf32>
    %202 = arith.addf %199, %201 : vector<8x128xf32>
    %cst_107 = arith.constant 0.000000e+00 : f32
    %203 = vector.broadcast %cst_107 : f32 to vector<8x128xf32>
    %204 = arith.cmpf oge, %202, %203 : vector<8x128xf32>
    %cst_108 = arith.constant 0.00999999977 : f32
    %205 = vector.broadcast %cst_108 : f32 to vector<8x128xf32>
    %206 = arith.mulf %205, %202 : vector<8x128xf32>
    %207 = arith.select %204, %202, %206 : vector<8x128xi1>, vector<8x128xf32>
    %c0_109 = arith.constant 0 : index
    %c0_110 = arith.constant 0 : index
    %208 = vector.load %arg27[%c0_109, %c0_110] : memref<64x8xf32, #tpu.memory_space<vmem>>, vector<64x8xf32>
    %cst_111 = arith.constant dense<0.000000e+00> : vector<64x128xf32>
    %209 = tpu.matmul %208, %207, %cst_111 {dimension_numbers = #tpu.dot_dimension_numbers<[1], [0], [0], [1], [0, 0, 1, 1], [], []>} : vector<64x8xf32>, vector<8x128xf32>, vector<64x128xf32> -> vector<64x128xf32>
    %c0_112 = arith.constant 0 : index
    %c0_113 = arith.constant 0 : index
    %210 = vector.load %arg28[%c0_112, %c0_113] : memref<64x1xf32, #tpu.memory_space<vmem>>, vector<64x1xf32>
    %211 = vector.broadcast %210 : vector<64x1xf32> to vector<64x128xf32>
    %212 = arith.addf %209, %211 : vector<64x128xf32>
    %cst_114 = arith.constant 0.000000e+00 : f32
    %213 = vector.broadcast %cst_114 : f32 to vector<64x128xf32>
    %214 = arith.cmpf oge, %212, %213 : vector<64x128xf32>
    %cst_115 = arith.constant 0.00999999977 : f32
    %215 = vector.broadcast %cst_115 : f32 to vector<64x128xf32>
    %216 = arith.mulf %215, %212 : vector<64x128xf32>
    %217 = arith.select %214, %212, %216 : vector<64x128xi1>, vector<64x128xf32>
    %c0_116 = arith.constant 0 : index
    %c0_117 = arith.constant 0 : index
    %218 = vector.load %arg29[%c0_116, %c0_117] : memref<2x64xf32, #tpu.memory_space<vmem>>, vector<2x64xf32>
    %cst_118 = arith.constant dense<0.000000e+00> : vector<2x128xf32>
    %219 = tpu.matmul %218, %217, %cst_118 {dimension_numbers = #tpu.dot_dimension_numbers<[1], [0], [0], [1], [0, 0, 1, 1], [], []>} : vector<2x64xf32>, vector<64x128xf32>, vector<2x128xf32> -> vector<2x128xf32>
    %c0_119 = arith.constant 0 : index
    %c0_120 = arith.constant 0 : index
    %220 = vector.load %arg30[%c0_119, %c0_120] : memref<1x32xf32, #tpu.memory_space<vmem>>, vector<1x32xf32>
    %cst_121 = arith.constant dense<0.000000e+00> : vector<1x128xf32>
    %221 = tpu.matmul %220, %74, %cst_121 {dimension_numbers = #tpu.dot_dimension_numbers<[1], [0], [0], [1], [0, 0, 1, 1], [], []>} : vector<1x32xf32>, vector<32x128xf32>, vector<1x128xf32> -> vector<1x128xf32>
    %222 = vector.broadcast %221 : vector<1x128xf32> to vector<2x128xf32>
    %223 = arith.addf %219, %222 : vector<2x128xf32>
    %c0_122 = arith.constant 0 : index
    %c0_123 = arith.constant 0 : index
    %224 = vector.load %arg31[%c0_122, %c0_123] : memref<1x1xf32, #tpu.memory_space<vmem>>, vector<1x1xf32>
    %225 = vector.broadcast %224 : vector<1x1xf32> to vector<2x128xf32>
    %226 = arith.addf %223, %225 : vector<2x128xf32>
    %c0_124 = arith.constant 0 : index
    %c0_125 = arith.constant 0 : index
    %227 = vector.load %arg32[%c0_124, %c0_125] : memref<2x128xf32, #tpu.memory_space<vmem>>, vector<2x128xf32>
    tpu.vector_store %arg32[%c0_124, %c0_125], %226 {strides = array<i32>} : memref<2x128xf32, #tpu.memory_space<vmem>>, vector<2x128xf32>,
    %cst_126 = arith.constant 0.000000e+00 : f32
    %228 = vector.broadcast %cst_126 : f32 to vector<8x72xf32>
    %229 = tpu.concatenate %183, %184, %228 in 1 : vector<8x24xf32>, vector<8x32xf32>, vector<8x72xf32> -> vector<8x128xf32>
    %c0_127 = arith.constant 0 : index
    %c0_128 = arith.constant 0 : index
    %230 = vector.load %arg33[%c0_127, %c0_128] : memref<8x128xf32, #tpu.memory_space<vmem>>, vector<8x128xf32>
    tpu.vector_store %arg33[%c0_127, %c0_128], %229 {strides = array<i32>} : memref<8x128xf32, #tpu.memory_space<vmem>>, vector<8x128xf32>,
    return
  }
  func.func @transform_0(%arg0: i32) -> (i32, i32) {
    %c0_i32 = arith.constant 0 : i32
    %c0_i32_0 = arith.constant 0 : i32
    %c0_i32_1 = arith.constant 0 : i32
    return %c0_i32, %c0_i32_0 : i32, i32
  }
  func.func @transform_1(%arg0: i32) -> (i32, i32) {
    %c0_i32 = arith.constant 0 : i32
    %c0_i32_0 = arith.constant 0 : i32
    %c0_i32_1 = arith.constant 0 : i32
    return %c0_i32, %c0_i32_0 : i32, i32
  }
  func.func @transform_2(%arg0: i32) -> (i32, i32) {
    %c0_i32 = arith.constant 0 : i32
    %c0_i32_0 = arith.constant 0 : i32
    %c0_i32_1 = arith.constant 0 : i32
    return %c0_i32, %c0_i32_0 : i32, i32
  }
  func.func @transform_3(%arg0: i32) -> (i32, i32) {
    %c0_i32 = arith.constant 0 : i32
    %c0_i32_0 = arith.constant 0 : i32
    %c0_i32_1 = arith.constant 0 : i32
    return %c0_i32, %c0_i32_0 : i32, i32
  }
  func.func @transform_4(%arg0: i32) -> (i32, i32) {
    %c0_i32 = arith.constant 0 : i32
    %c0_i32_0 = arith.constant 0 : i32
    %c0_i32_1 = arith.constant 0 : i32
    return %c0_i32, %c0_i32_0 : i32, i32
  }
  func.func @transform_5(%arg0: i32) -> (i32, i32) {
    %c0_i32 = arith.constant 0 : i32
    %c0_i32_0 = arith.constant 0 : i32
    %c0_i32_1 = arith.constant 0 : i32
    return %c0_i32, %c0_i32_0 : i32, i32
  }
  func.func @transform_6(%arg0: i32) -> (i32, i32) {
    %c0_i32 = arith.constant 0 : i32
    %c0_i32_0 = arith.constant 0 : i32
    %c0_i32_1 = arith.constant 0 : i32
    return %c0_i32, %c0_i32_0 : i32, i32
  }
  func.func @transform_7(%arg0: i32) -> (i32, i32) {
    %c0_i32 = arith.constant 0 : i32
    %c0_i32_0 = arith.constant 0 : i32
    %c0_i32_1 = arith.constant 0 : i32
    return %c0_i32, %c0_i32_0 : i32, i32
  }
  func.func @transform_8(%arg0: i32) -> (i32, i32) {
    %c0_i32 = arith.constant 0 : i32
    %c0_i32_0 = arith.constant 0 : i32
    %c0_i32_1 = arith.constant 0 : i32
    return %c0_i32, %c0_i32_0 : i32, i32
  }
  func.func @transform_9(%arg0: i32) -> (i32, i32) {
    %c0_i32 = arith.constant 0 : i32
    %c0_i32_0 = arith.constant 0 : i32
    %c0_i32_1 = arith.constant 0 : i32
    return %c0_i32, %c0_i32_0 : i32, i32
  }
  func.func @transform_10(%arg0: i32) -> (i32, i32) {
    %c0_i32 = arith.constant 0 : i32
    %c0_i32_0 = arith.constant 0 : i32
    %c0_i32_1 = arith.constant 0 : i32
    return %c0_i32, %c0_i32_0 : i32, i32
  }
  func.func @transform_11(%arg0: i32) -> (i32, i32) {
    %c0_i32 = arith.constant 0 : i32
    %c0_i32_0 = arith.constant 0 : i32
    %c0_i32_1 = arith.constant 0 : i32
    return %c0_i32, %c0_i32_0 : i32, i32
  }
  func.func @transform_12(%arg0: i32) -> (i32, i32) {
    %c0_i32 = arith.constant 0 : i32
    %c0_i32_0 = arith.constant 0 : i32
    %c0_i32_1 = arith.constant 0 : i32
    return %c0_i32, %c0_i32_0 : i32, i32
  }
  func.func @transform_13(%arg0: i32) -> (i32, i32) {
    %c0_i32 = arith.constant 0 : i32
    %c0_i32_0 = arith.constant 0 : i32
    %c0_i32_1 = arith.constant 0 : i32
    return %c0_i32, %c0_i32_0 : i32, i32
  }
  func.func @transform_14(%arg0: i32) -> (i32, i32) {
    %c0_i32 = arith.constant 0 : i32
    %c0_i32_0 = arith.constant 0 : i32
    %c0_i32_1 = arith.constant 0 : i32
    return %c0_i32, %c0_i32_0 : i32, i32
  }
  func.func @transform_15(%arg0: i32) -> (i32, i32) {
    %c0_i32 = arith.constant 0 : i32
    %c0_i32_0 = arith.constant 0 : i32
    %c0_i32_1 = arith.constant 0 : i32
    return %c0_i32, %c0_i32_0 : i32, i32
  }
  func.func @transform_16(%arg0: i32) -> (i32, i32) {
    %c0_i32 = arith.constant 0 : i32
    %c0_i32_0 = arith.constant 0 : i32
    %c0_i32_1 = arith.constant 0 : i32
    return %c0_i32, %c0_i32_0 : i32, i32
  }
  func.func @transform_17(%arg0: i32) -> (i32, i32) {
    %c0_i32 = arith.constant 0 : i32
    %c0_i32_0 = arith.constant 0 : i32
    %c0_i32_1 = arith.constant 0 : i32
    return %c0_i32, %c0_i32_0 : i32, i32
  }
  func.func @transform_18(%arg0: i32) -> (i32, i32) {
    %c0_i32 = arith.constant 0 : i32
    %c0_i32_0 = arith.constant 0 : i32
    %c0_i32_1 = arith.constant 0 : i32
    return %c0_i32, %c0_i32_0 : i32, i32
  }
  func.func @transform_19(%arg0: i32) -> (i32, i32) {
    %c0_i32 = arith.constant 0 : i32
    %c0_i32_0 = arith.constant 0 : i32
    %c0_i32_1 = arith.constant 0 : i32
    return %c0_i32, %c0_i32_0 : i32, i32
  }
  func.func @transform_20(%arg0: i32) -> (i32, i32) {
    %c0_i32 = arith.constant 0 : i32
    %c0_i32_0 = arith.constant 0 : i32
    %c0_i32_1 = arith.constant 0 : i32
    return %c0_i32, %c0_i32_0 : i32, i32
  }
  func.func @transform_21(%arg0: i32) -> (i32, i32) {
    %c0_i32 = arith.constant 0 : i32
    %c0_i32_0 = arith.constant 0 : i32
    %c0_i32_1 = arith.constant 0 : i32
    return %c0_i32, %c0_i32_0 : i32, i32
  }
  func.func @transform_22(%arg0: i32) -> (i32, i32) {
    %c0_i32 = arith.constant 0 : i32
    %c0_i32_0 = arith.constant 0 : i32
    %c0_i32_1 = arith.constant 0 : i32
    return %c0_i32, %c0_i32_0 : i32, i32
  }
  func.func @transform_23(%arg0: i32) -> (i32, i32) {
    %c0_i32 = arith.constant 0 : i32
    %c0_i32_0 = arith.constant 0 : i32
    %c0_i32_1 = arith.constant 0 : i32
    return %c0_i32, %c0_i32_0 : i32, i32
  }
  func.func @transform_24(%arg0: i32) -> (i32, i32) {
    %c0_i32 = arith.constant 0 : i32
    %c0_i32_0 = arith.constant 0 : i32
    %c0_i32_1 = arith.constant 0 : i32
    return %c0_i32, %c0_i32_0 : i32, i32
  }
  func.func @transform_25(%arg0: i32) -> (i32, i32) {
    %c0_i32 = arith.constant 0 : i32
    %c0_i32_0 = arith.constant 0 : i32
    %c0_i32_1 = arith.constant 0 : i32
    return %c0_i32, %c0_i32_0 : i32, i32
  }
  func.func @transform_26(%arg0: i32) -> (i32, i32) {
    %c0_i32 = arith.constant 0 : i32
    %c0_i32_0 = arith.constant 0 : i32
    %c0_i32_1 = arith.constant 0 : i32
    return %c0_i32, %c0_i32_0 : i32, i32
  }
  func.func @transform_27(%arg0: i32) -> (i32, i32) {
    %c0_i32 = arith.constant 0 : i32
    %c0_i32_0 = arith.constant 0 : i32
    %c0_i32_1 = arith.constant 0 : i32
    return %c0_i32, %c0_i32_0 : i32, i32
  }
  func.func @transform_28(%arg0: i32) -> (i32, i32) {
    %c0_i32 = arith.constant 0 : i32
    %c0_i32_0 = arith.constant 0 : i32
    %c0_i32_1 = arith.constant 0 : i32
    return %c0_i32, %c0_i32_0 : i32, i32
  }
  func.func @transform_29(%arg0: i32) -> (i32, i32) {
    %c0_i32 = arith.constant 0 : i32
    %c0_i32_0 = arith.constant 0 : i32
    %c0_i32_1 = arith.constant 0 : i32
    return %c0_i32, %c0_i32_0 : i32, i32
  }
  func.func @transform_30(%arg0: i32) -> (i32, i32) {
    %c0_i32 = arith.constant 0 : i32
    %c0_i32_0 = arith.constant 0 : i32
    %c0_i32_1 = arith.constant 0 : i32
    return %c0_i32, %c0_i32_0 : i32, i32
  }
  func.func @transform_31(%arg0: i32) -> (i32, i32) {
    %c0_i32 = arith.constant 0 : i32
    %c0_i32_0 = arith.constant 0 : i32
    %c0_i32_1 = arith.constant 0 : i32
    return %c0_i32, %c0_i32_0 : i32, i32
  }
  func.func @transform_32(%arg0: i32) -> (i32, i32) {
    %c0_i32 = arith.constant 0 : i32
    %c0_i32_0 = arith.constant 0 : i32
    %c0_i32_1 = arith.constant 0 : i32
    return %c0_i32, %c0_i32_0 : i32, i32
  }
}

</mosaic_0001>

<llo_original>
// kernel: tile.6
$region0: #{tile.6}
  #allocation0 [shape = 's32[1]{0}', space=sflag, size = 0x4, scoped, tag = 'scoped memory for tile.6']
  %s0 = inlined_call_operand.vmem [shape: f32[32], index: 0, kind: input, shape index: {}]
  %s1 = inlined_call_operand.vmem [shape: f32[2,1,1,32], index: 1, kind: output, shape index: {}]
  // Predicated region
  $region2: #{tile.6} parent=0 // pred_check
    _
  $region3: #{tile.6} parent=0 // pred_check_branch
    %3 = sbr.rel (0) target = $region5
  $region4: #{tile.6} parent=0 // pred_region
    _
  $region5: #{tile.6} parent=0 // pred_fallthru
    _
  %v4 = vld [vmem:[%s0] ss:$0 sm:$0xff]
  %5 = vst [vmem:[%s1] sm:$0x3] %v4

// kernel: tile.0
$region0: #{tile.0}
  %s0 = inlined_call_operand.vmem [shape: f32[2,1,1,32], index: 0, kind: input, shape index: {}]
  %s1 = inlined_call_operand.vmem [shape: f32[64,1], index: 1, kind: output, shape index: {}]
  $region1: #{tile.0} parent=0
    #allocation0 [shape = 'u8[4096]{0}', space=vmem, size = 0x1000, scoped, tag = 'scoped mem for input reshape']
    %s3 = sshll.u32 1, 2
    %s4 = ssub.s32 %s3, 1
    %v5 = vld [vmem:[%s0] sm:%s4]
    %6 = vst [vmem:[#allocation0] sm:%s4] %v5
    %v7 = vld [vmem:[#allocation0] sm:$0x3]
    %vm8 = vcmask 7168
    %9 = vst.msk [vmem:[%s1] sm:$0x1] %vm8, %v7
    %s10 = scalar_lea.vmem %s1, 31
    %11 = vst.msk [vmem:[%s10] sm:$0x2] %vm8, %v7
    %v12 = vld [vmem:[#allocation0] sm:$0x3]
    %13 = vrot.lane.b32.xlu0 %v12, 127
    %v14 = vpop.permute.xlu0 %13
    %vm15 = vcmask 7168
    %s16 = scalar_lea.vmem %s1, 1
    %17 = vst.msk [vmem:[%s16] sm:$0x1] %vm15, %v14
    %s18 = scalar_lea.vmem %s1, 32
    %19 = vst.msk [vmem:[%s18] sm:$0x2] %vm15, %v14
    %v20 = vld [vmem:[#allocation0] sm:$0x3]
    %21 = vrot.lane.b32.xlu0 %v20, 126
    %v22 = vpop.permute.xlu0 %21
    %vm23 = vcmask 7168
    %s24 = scalar_lea.vmem %s1, 2
    %25 = vst.msk [vmem:[%s24] sm:$0x1] %vm23, %v22
    %s26 = scalar_lea.vmem %s1, 33
    %27 = vst.msk [vmem:[%s26] sm:$0x2] %vm23, %v22
    %v28 = vld [vmem:[#allocation0] sm:$0x3]
    %29 = vrot.lane.b32.xlu0 %v28, 125
    %v30 = vpop.permute.xlu0 %29
    %vm31 = vcmask 7168
    %s32 = scalar_lea.vmem %s1, 3
    %33 = vst.msk [vmem:[%s32] sm:$0x1] %vm31, %v30
    %s34 = scalar_lea.vmem %s1, 34
    %35 = vst.msk [vmem:[%s34] sm:$0x2] %vm31, %v30
    %v36 = vld [vmem:[#allocation0] sm:$0x3]
    %37 = vrot.lane.b32.xlu0 %v36, 124
    %v38 = vpop.permute.xlu0 %37
    %vm39 = vcmask 7168
    %s40 = scalar_lea.vmem %s1, 4
    %41 = vst.msk [vmem:[%s40] sm:$0x1] %vm39, %v38
    %s42 = scalar_lea.vmem %s1, 35
    %43 = vst.msk [vmem:[%s42] sm:$0x2] %vm39, %v38
    %v44 = vld [vmem:[#allocation0] sm:$0x3]
    %45 = vrot.lane.b32.xlu0 %v44, 123
    %v46 = vpop.permute.xlu0 %45
    %vm47 = vcmask 7168
    %s48 = scalar_lea.vmem %s1, 5
    %49 = vst.msk [vmem:[%s48] sm:$0x1] %vm47, %v46
    %s50 = scalar_lea.vmem %s1, 36
    %51 = vst.msk [vmem:[%s50] sm:$0x2] %vm47, %v46
    %v52 = vld [vmem:[#allocation0] sm:$0x3]
    %53 = vrot.lane.b32.xlu0 %v52, 122
    %v54 = vpop.permute.xlu0 %53
    %vm55 = vcmask 7168
    %s56 = scalar_lea.vmem %s1, 6
    %57 = vst.msk [vmem:[%s56] sm:$0x1] %vm55, %v54
    %s58 = scalar_lea.vmem %s1, 37
    %59 = vst.msk [vmem:[%s58] sm:$0x2] %vm55, %v54
    %v60 = vld [vmem:[#allocation0] sm:$0x3]
    %61 = vrot.lane.b32.xlu0 %v60, 121
    %v62 = vpop.permute.xlu0 %61
    %vm63 = vcmask 7168
    %s64 = scalar_lea.vmem %s1, 7
    %65 = vst.msk [vmem:[%s64] sm:$0x1] %vm63, %v62
    %s66 = scalar_lea.vmem %s1, 38
    %67 = vst.msk [vmem:[%s66] sm:$0x2] %vm63, %v62
    %v68 = vld [vmem:[#allocation0] sm:$0x3]
    %69 = vrot.lane.b32.xlu0 %v68, 120
    %v70 = vpop.permute.xlu0 %69
    %vm71 = vcmask 7168
    %s72 = scalar_lea.vmem %s1, 8
    %73 = vst.msk [vmem:[%s72] sm:$0x1] %vm71, %v70
    %s74 = scalar_lea.vmem %s1, 39
    %75 = vst.msk [vmem:[%s74] sm:$0x2] %vm71, %v70
    %v76 = vld [vmem:[#allocation0] sm:$0x3]
    %77 = vrot.lane.b32.xlu0 %v76, 119
    %v78 = vpop.permute.xlu0 %77
    %vm79 = vcmask 7168
    %s80 = scalar_lea.vmem %s1, 9
    %81 = vst.msk [vmem:[%s80] sm:$0x1] %vm79, %v78
    %s82 = scalar_lea.vmem %s1, 40
    %83 = vst.msk [vmem:[%s82] sm:$0x2] %vm79, %v78
    %v84 = vld [vmem:[#allocation0] sm:$0x3]
    %85 = vrot.lane.b32.xlu0 %v84, 118
    %v86 = vpop.permute.xlu0 %85
    %vm87 = vcmask 7168
    %s88 = scalar_lea.vmem %s1, 10
    %89 = vst.msk [vmem:[%s88] sm:$0x1] %vm87, %v86
    %s90 = scalar_lea.vmem %s1, 41
    %91 = vst.msk [vmem:[%s90] sm:$0x2] %vm87, %v86
    %v92 = vld [vmem:[#allocation0] sm:$0x3]
    %93 = vrot.lane.b32.xlu0 %v92, 117
    %v94 = vpop.permute.xlu0 %93
    %vm95 = vcmask 7168
    %s96 = scalar_lea.vmem %s1, 11
    %97 = vst.msk [vmem:[%s96] sm:$0x1] %vm95, %v94
    %s98 = scalar_lea.vmem %s1, 42
    %99 = vst.msk [vmem:[%s98] sm:$0x2] %vm95, %v94
    %v100 = vld [vmem:[#allocation0] sm:$0x3]
    %101 = vrot.lane.b32.xlu0 %v100, 116
    %v102 = vpop.permute.xlu0 %101
    %vm103 = vcmask 7168
    %s104 = scalar_lea.vmem %s1, 12
    %105 = vst.msk [vmem:[%s104] sm:$0x1] %vm103, %v102
    %s106 = scalar_lea.vmem %s1, 43
    %107 = vst.msk [vmem:[%s106] sm:$0x2] %vm103, %v102
    %v108 = vld [vmem:[#allocation0] sm:$0x3]
    %109 = vrot.lane.b32.xlu0 %v108, 115
    %v110 = vpop.permute.xlu0 %109
    %vm111 = vcmask 7168
    %s112 = scalar_lea.vmem %s1, 13
    %113 = vst.msk [vmem:[%s112] sm:$0x1] %vm111, %v110
    %s114 = scalar_lea.vmem %s1, 44
    %115 = vst.msk [vmem:[%s114] sm:$0x2] %vm111, %v110
    %v116 = vld [vmem:[#allocation0] sm:$0x3]
    %117 = vrot.lane.b32.xlu0 %v116, 114
    %v118 = vpop.permute.xlu0 %117
    %vm119 = vcmask 7168
    %s120 = scalar_lea.vmem %s1, 14
    %121 = vst.msk [vmem:[%s120] sm:$0x1] %vm119, %v118
    %s122 = scalar_lea.vmem %s1, 45
    %123 = vst.msk [vmem:[%s122] sm:$0x2] %vm119, %v118
    %v124 = vld [vmem:[#allocation0] sm:$0x3]
    %125 = vrot.lane.b32.xlu0 %v124, 113
    %v126 = vpop.permute.xlu0 %125
    %vm127 = vcmask 7168
    %s128 = scalar_lea.vmem %s1, 15
    %129 = vst.msk [vmem:[%s128] sm:$0x1] %vm127, %v126
    %s130 = scalar_lea.vmem %s1, 46
    %131 = vst.msk [vmem:[%s130] sm:$0x2] %vm127, %v126
    %v132 = vld [vmem:[#allocation0] sm:$0x3]
    %133 = vrot.lane.b32.xlu0 %v132, 112
    %v134 = vpop.permute.xlu0 %133
    %vm135 = vcmask 7168
    %s136 = scalar_lea.vmem %s1, 16
    %137 = vst.msk [vmem:[%s136] sm:$0x1] %vm135, %v134
    %s138 = scalar_lea.vmem %s1, 47
    %139 = vst.msk [vmem:[%s138] sm:$0x2] %vm135, %v134
    %v140 = vld [vmem:[#allocation0] sm:$0x3]
    %141 = vrot.lane.b32.xlu0 %v140, 111
    %v142 = vpop.permute.xlu0 %141
    %vm143 = vcmask 7168
    %s144 = scalar_lea.vmem %s1, 17
    %145 = vst.msk [vmem:[%s144] sm:$0x1] %vm143, %v142
    %s146 = scalar_lea.vmem %s1, 48
    %147 = vst.msk [vmem:[%s146] sm:$0x2] %vm143, %v142
    %v148 = vld [vmem:[#allocation0] sm:$0x3]
    %149 = vrot.lane.b32.xlu0 %v148, 110
    %v150 = vpop.permute.xlu0 %149
    %vm151 = vcmask 7168
    %s152 = scalar_lea.vmem %s1, 18
    %153 = vst.msk [vmem:[%s152] sm:$0x1] %vm151, %v150
    %s154 = scalar_lea.vmem %s1, 49
    %155 = vst.msk [vmem:[%s154] sm:$0x2] %vm151, %v150
    %v156 = vld [vmem:[#allocation0] sm:$0x3]
    %157 = vrot.lane.b32.xlu0 %v156, 109
    %v158 = vpop.permute.xlu0 %157
    %vm159 = vcmask 7168
    %s160 = scalar_lea.vmem %s1, 19
    %161 = vst.msk [vmem:[%s160] sm:$0x1] %vm159, %v158
    %s162 = scalar_lea.vmem %s1, 50
    %163 = vst.msk [vmem:[%s162] sm:$0x2] %vm159, %v158
    %v164 = vld [vmem:[#allocation0] sm:$0x3]
    %165 = vrot.lane.b32.xlu0 %v164, 108
    %v166 = vpop.permute.xlu0 %165
    %vm167 = vcmask 7168
    %s168 = scalar_lea.vmem %s1, 20
    %169 = vst.msk [vmem:[%s168] sm:$0x1] %vm167, %v166
    %s170 = scalar_lea.vmem %s1, 51
    %171 = vst.msk [vmem:[%s170] sm:$0x2] %vm167, %v166
    %v172 = vld [vmem:[#allocation0] sm:$0x3]
    %173 = vrot.lane.b32.xlu0 %v172, 107
    %v174 = vpop.permute.xlu0 %173
    %vm175 = vcmask 7168
    %s176 = scalar_lea.vmem %s1, 21
    %177 = vst.msk [vmem:[%s176] sm:$0x1] %vm175, %v174
    %s178 = scalar_lea.vmem %s1, 52
    %179 = vst.msk [vmem:[%s178] sm:$0x2] %vm175, %v174
    %v180 = vld [vmem:[#allocation0] sm:$0x3]
    %181 = vrot.lane.b32.xlu0 %v180, 106
    %v182 = vpop.permute.xlu0 %181
    %vm183 = vcmask 7168
    %s184 = scalar_lea.vmem %s1, 22
    %185 = vst.msk [vmem:[%s184] sm:$0x1] %vm183, %v182
    %s186 = scalar_lea.vmem %s1, 53
    %187 = vst.msk [vmem:[%s186] sm:$0x2] %vm183, %v182
    %v188 = vld [vmem:[#allocation0] sm:$0x3]
    %189 = vrot.lane.b32.xlu0 %v188, 105
    %v190 = vpop.permute.xlu0 %189
    %vm191 = vcmask 7168
    %s192 = scalar_lea.vmem %s1, 23
    %193 = vst.msk [vmem:[%s192] sm:$0x1] %vm191, %v190
    %s194 = scalar_lea.vmem %s1, 54
    %195 = vst.msk [vmem:[%s194] sm:$0x2] %vm191, %v190
    %v196 = vld [vmem:[#allocation0] sm:$0x3]
    %197 = vrot.lane.b32.xlu0 %v196, 104
    %v198 = vpop.permute.xlu0 %197
    %vm199 = vcmask 7168
    %s200 = scalar_lea.vmem %s1, 24
    %201 = vst.msk [vmem:[%s200] sm:$0x1] %vm199, %v198
    %s202 = scalar_lea.vmem %s1, 55
    %203 = vst.msk [vmem:[%s202] sm:$0x2] %vm199, %v198
    %v204 = vld [vmem:[#allocation0] sm:$0x3]
    %205 = vrot.lane.b32.xlu0 %v204, 103
    %v206 = vpop.permute.xlu0 %205
    %vm207 = vcmask 7168
    %s208 = scalar_lea.vmem %s1, 25
    %209 = vst.msk [vmem:[%s208] sm:$0x1] %vm207, %v206
    %s210 = scalar_lea.vmem %s1, 56
    %211 = vst.msk [vmem:[%s210] sm:$0x2] %vm207, %v206
    %v212 = vld [vmem:[#allocation0] sm:$0x3]
    %213 = vrot.lane.b32.xlu0 %v212, 102
    %v214 = vpop.permute.xlu0 %213
    %vm215 = vcmask 7168
    %s216 = scalar_lea.vmem %s1, 26
    %217 = vst.msk [vmem:[%s216] sm:$0x1] %vm215, %v214
    %s218 = scalar_lea.vmem %s1, 57
    %219 = vst.msk [vmem:[%s218] sm:$0x2] %vm215, %v214
    %v220 = vld [vmem:[#allocation0] sm:$0x3]
    %221 = vrot.lane.b32.xlu0 %v220, 101
    %v222 = vpop.permute.xlu0 %221
    %vm223 = vcmask 7168
    %s224 = scalar_lea.vmem %s1, 27
    %225 = vst.msk [vmem:[%s224] sm:$0x1] %vm223, %v222
    %s226 = scalar_lea.vmem %s1, 58
    %227 = vst.msk [vmem:[%s226] sm:$0x2] %vm223, %v222
    %v228 = vld [vmem:[#allocation0] sm:$0x3]
    %229 = vrot.lane.b32.xlu0 %v228, 100
    %v230 = vpop.permute.xlu0 %229
    %vm231 = vcmask 7168
    %s232 = scalar_lea.vmem %s1, 28
    %233 = vst.msk [vmem:[%s232] sm:$0x1] %vm231, %v230
    %s234 = scalar_lea.vmem %s1, 59
    %235 = vst.msk [vmem:[%s234] sm:$0x2] %vm231, %v230
    %v236 = vld [vmem:[#allocation0] sm:$0x3]
    %237 = vrot.lane.b32.xlu0 %v236, 99
    %v238 = vpop.permute.xlu0 %237
    %vm239 = vcmask 7168
    %s240 = scalar_lea.vmem %s1, 29
    %241 = vst.msk [vmem:[%s240] sm:$0x1] %vm239, %v238
    %s242 = scalar_lea.vmem %s1, 60
    %243 = vst.msk [vmem:[%s242] sm:$0x2] %vm239, %v238
    %v244 = vld [vmem:[#allocation0] sm:$0x3]
    %245 = vrot.lane.b32.xlu0 %v244, 98
    %v246 = vpop.permute.xlu0 %245
    %vm247 = vcmask 7168
    %s248 = scalar_lea.vmem %s1, 30
    %249 = vst.msk [vmem:[%s248] sm:$0x1] %vm247, %v246
    %s250 = scalar_lea.vmem %s1, 61
    %251 = vst.msk [vmem:[%s250] sm:$0x2] %vm247, %v246
    %v252 = vld [vmem:[#allocation0] sm:$0x3]
    %253 = vrot.lane.b32.xlu0 %v252, 97
    %v254 = vpop.permute.xlu0 %253
    %vm255 = vcmask 7168
    %s256 = scalar_lea.vmem %s1, 31
    %257 = vst.msk [vmem:[%s256] sm:$0x1] %vm255, %v254
    %s258 = scalar_lea.vmem %s1, 62
    %259 = vst.msk [vmem:[%s258] sm:$0x2] %vm255, %v254

// kernel: pasgen_forward.1
$region0: #{pasgen_forward.1}
  #allocation0 [shape = 'u32[]', space=smem, size = 0x4, offset = 0x4, fixed_abs, tag = 'smem constant byte address 0x4 - core index']
  #allocation1 [shape = 'u32[144,128]{1,0:T(1,128)}', space=vmem, size = 0x12000, scoped, tag = 'internal scratch']
  #allocation2 [shape = 'f32[1,1]{1,0:T(1,128)S(1)}', space=vmem, size = 0x200, scoped, tag = 'scoped memory for pasgen_forward.1']
  #allocation3 [shape = 'f32[1,1]{1,0:T(1,128)S(1)}', space=vmem, size = 0x200, scoped, tag = 'scoped memory for pasgen_forward.1']
  %s0 = inlined_call_operand.smem [shape: u32[33], index: -1, kind: input, shape index: {}]
  %s1 = sld [smem:[%s0]]
  %s2 = scalar_lea.smem %s0, 1
  %s3 = sld [smem:[%s2]]
  %s4 = scalar_lea.smem %s0, 2
  %s5 = sld [smem:[%s4]]
  %s6 = scalar_lea.smem %s0, 3
  %s7 = sld [smem:[%s6]]
  %s8 = scalar_lea.smem %s0, 4
  %s9 = sld [smem:[%s8]]
  %s10 = scalar_lea.smem %s0, 5
  %s11 = sld [smem:[%s10]]
  %s12 = scalar_lea.smem %s0, 6
  %s13 = sld [smem:[%s12]]
  %s14 = scalar_lea.smem %s0, 7
  %s15 = sld [smem:[%s14]]
  %s16 = scalar_lea.smem %s0, 8
  %s17 = sld [smem:[%s16]]
  %s18 = scalar_lea.smem %s0, 9
  %s19 = sld [smem:[%s18]]
  %s20 = scalar_lea.smem %s0, 10
  %s21 = sld [smem:[%s20]]
  %s22 = scalar_lea.smem %s0, 11
  %s23 = sld [smem:[%s22]]
  %s24 = scalar_lea.smem %s0, 12
  %s25 = sld [smem:[%s24]]
  %s26 = scalar_lea.smem %s0, 13
  %s27 = sld [smem:[%s26]]
  %s28 = scalar_lea.smem %s0, 14
  %s29 = sld [smem:[%s28]]
  %s30 = scalar_lea.smem %s0, 15
  %s31 = sld [smem:[%s30]]
  %s32 = scalar_lea.smem %s0, 16
  %s33 = sld [smem:[%s32]]
  %s34 = scalar_lea.smem %s0, 17
  %s35 = sld [smem:[%s34]]
  %s36 = scalar_lea.smem %s0, 18
  %s37 = sld [smem:[%s36]]
  %s38 = scalar_lea.smem %s0, 19
  %s39 = sld [smem:[%s38]]
  %s40 = scalar_lea.smem %s0, 20
  %s41 = sld [smem:[%s40]]
  %s42 = scalar_lea.smem %s0, 21
  %s43 = sld [smem:[%s42]]
  %s44 = scalar_lea.smem %s0, 22
  %s45 = sld [smem:[%s44]]
  %s46 = scalar_lea.smem %s0, 23
  %s47 = sld [smem:[%s46]]
  %s48 = scalar_lea.smem %s0, 24
  %s49 = sld [smem:[%s48]]
  %s50 = scalar_lea.smem %s0, 25
  %s51 = sld [smem:[%s50]]
  %s52 = scalar_lea.smem %s0, 26
  %s53 = sld [smem:[%s52]]
  %s54 = scalar_lea.smem %s0, 27
  %s55 = sld [smem:[%s54]]
  %s56 = scalar_lea.smem %s0, 28
  %s57 = sld [smem:[%s56]]
  %s58 = scalar_lea.smem %s0, 29
  %s59 = sld [smem:[%s58]]
  %s60 = scalar_lea.smem %s0, 30
  %s61 = sld [smem:[%s60]]
  %s62 = scalar_lea.smem %s0, 31
  %s63 = sld [smem:[%s62]]
  %s64 = scalar_lea.smem %s0, 32
  %s65 = sld [smem:[%s64]]
  %66 = xla_tuple %s63, %s65
  %s67 = sld [smem:[#allocation0]]
  $region142: #{pasgen_forward.1} parent=0
    _
  %s69 = ssub.s32 1, %s67
  %s70 = scalar_select 0, %s69, %s67
  %v71 = vstv %s29
  %72 = vst [vmem:[#allocation2] sm:$0x1] %v71
  %v73 = vstv %s61
  %74 = vst [vmem:[#allocation3] sm:$0x1] %v73
  $region1: #{pasgen_forward.1} parent=0
    #allocation4 [shape = 'u8[1024]{0}', space=vmem, size = 0x400, scoped, tag = 'output window, operand 0, single buffered']
    #allocation5 [shape = 's32[1]{0}', space=sflag, size = 0x4, scoped, tag = 'scoped memory for pasgen_forward.1']
    %75 = vsyncpa [#allocation5], 0
    // Predicated region
    $region2: #{pasgen_forward.1} parent=1 // pred_check
      _
    $region3: #{pasgen_forward.1} parent=1 // pred_check_branch
      %77 = sbr.rel (0) target = $region5
    $region4: #{pasgen_forward.1} parent=1 // pred_region
      _
    $region5: #{pasgen_forward.1} parent=1 // pred_fallthru
      _
    // Predicated region
    $region6: #{pasgen_forward.1} parent=1 // pred_check
      _
    $region7: #{pasgen_forward.1} parent=1 // pred_check_branch
      %79 = sbr.rel (0) target = $region9
    $region8: #{pasgen_forward.1} parent=1 // pred_region
      _
    $region9: #{pasgen_forward.1} parent=1 // pred_fallthru
      _
    // Predicated region
    $region10: #{pasgen_forward.1} parent=1 // pred_check
      _
    $region11: #{pasgen_forward.1} parent=1 // pred_check_branch
      %81 = sbr.rel (0) target = $region13
    $region12: #{pasgen_forward.1} parent=1 // pred_region
      _
    $region13: #{pasgen_forward.1} parent=1 // pred_fallthru
      _
    // Predicated region
    $region14: #{pasgen_forward.1} parent=1 // pred_check
      _
    $region15: #{pasgen_forward.1} parent=1 // pred_check_branch
      %83 = sbr.rel (0) target = $region17
    $region16: #{pasgen_forward.1} parent=1 // pred_region
      _
    $region17: #{pasgen_forward.1} parent=1 // pred_fallthru
      _
    // Predicated region
    $region18: #{pasgen_forward.1} parent=1 // pred_check
      _
    $region19: #{pasgen_forward.1} parent=1 // pred_check_branch
      %85 = sbr.rel (0) target = $region21
    $region20: #{pasgen_forward.1} parent=1 // pred_region
      _
    $region21: #{pasgen_forward.1} parent=1 // pred_fallthru
      _
    // Predicated region
    $region22: #{pasgen_forward.1} parent=1 // pred_check
      _
    $region23: #{pasgen_forward.1} parent=1 // pred_check_branch
      %87 = sbr.rel (0) target = $region25
    $region24: #{pasgen_forward.1} parent=1 // pred_region
      _
    $region25: #{pasgen_forward.1} parent=1 // pred_fallthru
      _
    // Predicated region
    $region26: #{pasgen_forward.1} parent=1 // pred_check
      _
    $region27: #{pasgen_forward.1} parent=1 // pred_check_branch
      %89 = sbr.rel (0) target = $region29
    $region28: #{pasgen_forward.1} parent=1 // pred_region
      _
    $region29: #{pasgen_forward.1} parent=1 // pred_fallthru
      _
    // Predicated region
    $region30: #{pasgen_forward.1} parent=1 // pred_check
      _
    $region31: #{pasgen_forward.1} parent=1 // pred_check_branch
      %91 = sbr.rel (0) target = $region33
    $region32: #{pasgen_forward.1} parent=1 // pred_region
      _
    $region33: #{pasgen_forward.1} parent=1 // pred_fallthru
      _
    // Predicated region
    $region34: #{pasgen_forward.1} parent=1 // pred_check
      _
    $region35: #{pasgen_forward.1} parent=1 // pred_check_branch
      %93 = sbr.rel (0) target = $region37
    $region36: #{pasgen_forward.1} parent=1 // pred_region
      _
    $region37: #{pasgen_forward.1} parent=1 // pred_fallthru
      _
    // Predicated region
    $region38: #{pasgen_forward.1} parent=1 // pred_check
      _
    $region39: #{pasgen_forward.1} parent=1 // pred_check_branch
      %95 = sbr.rel (0) target = $region41
    $region40: #{pasgen_forward.1} parent=1 // pred_region
      _
    $region41: #{pasgen_forward.1} parent=1 // pred_fallthru
      _
    // Predicated region
    $region42: #{pasgen_forward.1} parent=1 // pred_check
      _
    $region43: #{pasgen_forward.1} parent=1 // pred_check_branch
      %97 = sbr.rel (0) target = $region45
    $region44: #{pasgen_forward.1} parent=1 // pred_region
      _
    $region45: #{pasgen_forward.1} parent=1 // pred_fallthru
      _
    // Predicated region
    $region46: #{pasgen_forward.1} parent=1 // pred_check
      _
    $region47: #{pasgen_forward.1} parent=1 // pred_check_branch
      %99 = sbr.rel (0) target = $region49
    $region48: #{pasgen_forward.1} parent=1 // pred_region
      _
    $region49: #{pasgen_forward.1} parent=1 // pred_fallthru
      _
    // Predicated region
    $region50: #{pasgen_forward.1} parent=1 // pred_check
      _
    $region51: #{pasgen_forward.1} parent=1 // pred_check_branch
      %101 = sbr.rel (0) target = $region53
    $region52: #{pasgen_forward.1} parent=1 // pred_region
      _
    $region53: #{pasgen_forward.1} parent=1 // pred_fallthru
      _
    // Predicated region
    $region54: #{pasgen_forward.1} parent=1 // pred_check
      _
    $region55: #{pasgen_forward.1} parent=1 // pred_check_branch
      %103 = sbr.rel (0) target = $region57
    $region56: #{pasgen_forward.1} parent=1 // pred_region
      _
    $region57: #{pasgen_forward.1} parent=1 // pred_fallthru
      _
    // Predicated region
    $region58: #{pasgen_forward.1} parent=1 // pred_check
      _
    $region59: #{pasgen_forward.1} parent=1 // pred_check_branch
      %105 = sbr.rel (0) target = $region61
    $region60: #{pasgen_forward.1} parent=1 // pred_region
      _
    $region61: #{pasgen_forward.1} parent=1 // pred_fallthru
      _
    // Predicated region
    $region62: #{pasgen_forward.1} parent=1 // pred_check
      _
    $region63: #{pasgen_forward.1} parent=1 // pred_check_branch
      %107 = sbr.rel (0) target = $region65
    $region64: #{pasgen_forward.1} parent=1 // pred_region
      _
    $region65: #{pasgen_forward.1} parent=1 // pred_fallthru
      _
    // Predicated region
    $region66: #{pasgen_forward.1} parent=1 // pred_check
      _
    $region67: #{pasgen_forward.1} parent=1 // pred_check_branch
      %109 = sbr.rel (0) target = $region69
    $region68: #{pasgen_forward.1} parent=1 // pred_region
      _
    $region69: #{pasgen_forward.1} parent=1 // pred_fallthru
      _
    // Predicated region
    $region70: #{pasgen_forward.1} parent=1 // pred_check
      _
    $region71: #{pasgen_forward.1} parent=1 // pred_check_branch
      %111 = sbr.rel (0) target = $region73
    $region72: #{pasgen_forward.1} parent=1 // pred_region
      _
    $region73: #{pasgen_forward.1} parent=1 // pred_fallthru
      _
    // Predicated region
    $region74: #{pasgen_forward.1} parent=1 // pred_check
      _
    $region75: #{pasgen_forward.1} parent=1 // pred_check_branch
      %113 = sbr.rel (0) target = $region77
    $region76: #{pasgen_forward.1} parent=1 // pred_region
      _
    $region77: #{pasgen_forward.1} parent=1 // pred_fallthru
      _
    // Predicated region
    $region78: #{pasgen_forward.1} parent=1 // pred_check
      _
    $region79: #{pasgen_forward.1} parent=1 // pred_check_branch
      %115 = sbr.rel (0) target = $region81
    $region80: #{pasgen_forward.1} parent=1 // pred_region
      _
    $region81: #{pasgen_forward.1} parent=1 // pred_fallthru
      _
    // Predicated region
    $region82: #{pasgen_forward.1} parent=1 // pred_check
      _
    $region83: #{pasgen_forward.1} parent=1 // pred_check_branch
      %117 = sbr.rel (0) target = $region85
    $region84: #{pasgen_forward.1} parent=1 // pred_region
      _
    $region85: #{pasgen_forward.1} parent=1 // pred_fallthru
      _
    // Predicated region
    $region86: #{pasgen_forward.1} parent=1 // pred_check
      _
    $region87: #{pasgen_forward.1} parent=1 // pred_check_branch
      %119 = sbr.rel (0) target = $region89
    $region88: #{pasgen_forward.1} parent=1 // pred_region
      _
    $region89: #{pasgen_forward.1} parent=1 // pred_fallthru
      _
    // Predicated region
    $region90: #{pasgen_forward.1} parent=1 // pred_check
      _
    $region91: #{pasgen_forward.1} parent=1 // pred_check_branch
      %121 = sbr.rel (0) target = $region93
    $region92: #{pasgen_forward.1} parent=1 // pred_region
      _
    $region93: #{pasgen_forward.1} parent=1 // pred_fallthru
      _
    // Predicated region
    $region94: #{pasgen_forward.1} parent=1 // pred_check
      _
    $region95: #{pasgen_forward.1} parent=1 // pred_check_branch
      %123 = sbr.rel (0) target = $region97
    $region96: #{pasgen_forward.1} parent=1 // pred_region
      _
    $region97: #{pasgen_forward.1} parent=1 // pred_fallthru
      _
    // Predicated region
    $region98: #{pasgen_forward.1} parent=1 // pred_check
      _
    $region99: #{pasgen_forward.1} parent=1 // pred_check_branch
      %125 = sbr.rel (0) target = $region101
    $region100: #{pasgen_forward.1} parent=1 // pred_region
      _
    $region101: #{pasgen_forward.1} parent=1 // pred_fallthru
      _
    // Predicated region
    $region102: #{pasgen_forward.1} parent=1 // pred_check
      _
    $region103: #{pasgen_forward.1} parent=1 // pred_check_branch
      %127 = sbr.rel (0) target = $region105
    $region104: #{pasgen_forward.1} parent=1 // pred_region
      _
    $region105: #{pasgen_forward.1} parent=1 // pred_fallthru
      _
    // Predicated region
    $region106: #{pasgen_forward.1} parent=1 // pred_check
      _
    $region107: #{pasgen_forward.1} parent=1 // pred_check_branch
      %129 = sbr.rel (0) target = $region109
    $region108: #{pasgen_forward.1} parent=1 // pred_region
      _
    $region109: #{pasgen_forward.1} parent=1 // pred_fallthru
      _
    // Predicated region
    $region110: #{pasgen_forward.1} parent=1 // pred_check
      _
    $region111: #{pasgen_forward.1} parent=1 // pred_check_branch
      %131 = sbr.rel (0) target = $region113
    $region112: #{pasgen_forward.1} parent=1 // pred_region
      _
    $region113: #{pasgen_forward.1} parent=1 // pred_fallthru
      _
    // Predicated region
    $region114: #{pasgen_forward.1} parent=1 // pred_check
      _
    $region115: #{pasgen_forward.1} parent=1 // pred_check_branch
      %133 = sbr.rel (0) target = $region117
    $region116: #{pasgen_forward.1} parent=1 // pred_region
      _
    $region117: #{pasgen_forward.1} parent=1 // pred_fallthru
      _
    // Predicated region
    $region118: #{pasgen_forward.1} parent=1 // pred_check
      _
    $region119: #{pasgen_forward.1} parent=1 // pred_check_branch
      %135 = sbr.rel (0) target = $region121
    $region120: #{pasgen_forward.1} parent=1 // pred_region
      _
    $region121: #{pasgen_forward.1} parent=1 // pred_fallthru
      _
    // Predicated region
    $region122: #{pasgen_forward.1} parent=1 // pred_check
      _
    $region123: #{pasgen_forward.1} parent=1 // pred_check_branch
      %137 = sbr.rel (0) target = $region125
    $region124: #{pasgen_forward.1} parent=1 // pred_region
      _
    $region125: #{pasgen_forward.1} parent=1 // pred_fallthru
      _
    %v138 = vld [vmem:[%s1] sm:$0xff]
    %v139 = vld [vmem:[%s1 + $0x8] sm:$0x3]
    %v140 = vld [vmem:[%s13] sm:$0xff]
    %v141 = vld [vmem:[%s13 + $0x8] sm:$0x1]
    %v142 = vld [vmem:[%s15] sm:$0x1]
    %v144 = vlaneseq
    %v145 = vshrl.u32 %v144, 7
    %v146 = vsub.s32 0, %v145
    %v147 = vrot.slane %v142, %v146
    %vm149 = vcmask 72704
    %v151 = vsel %vm149, %v138, 0
    %v154 = vsel %vm149, %v139, 0
    %vm156 = vcmask 1040384
    %v158 = vsel %vm156, %v141, 0
    %160 = vmatprep.subr.mxu0 0.0
    %161 = vmatpush1.msra.mxu0 0.0
    %162 = vmatprep.subr.mxu0 0.0
    %163 = vmatpush1.msra.mxu0 0.0
    %164 = vmatprep.subr.mxu0 0.0
    %165 = vmatpush1.msra.mxu0 0.0
    %166 = vmatprep.subr.mxu0 0.0
    %167 = vmatpush1.msra.mxu0 0.0
    %168 = vmatprep.subr.mxu0 0.0
    %169 = vmatpush1.msra.mxu0 0.0
    %170 = vmatprep.subr.mxu0 0.0
    %171 = vmatpush1.msra.mxu0 0.0
    %172 = vmatprep.subr.mxu0 0.0
    %173 = vmatpush1.msra.mxu0 0.0
    %174 = vmatprep.subr.mxu0 0.0
    %175 = vmatpush1.msra.mxu0 0.0
    %176 = vmatprep.subr.mxu0 0.0
    %177 = vmatpush1.msra.mxu0 0.0
    %178 = vmatprep.subr.mxu0 0.0
    %179 = vmatpush1.msra.mxu0 0.0
    %180 = vmatprep.subr.mxu0 0.0
    %181 = vmatpush1.msra.mxu0 0.0
    %182 = vmatprep.subr.mxu0 0.0
    %183 = vmatpush1.msra.mxu0 0.0
    %184 = vmatprep.subr.mxu0 0.0
    %185 = vmatpush1.msra.mxu0 0.0
    %186 = vmatprep.subr.mxu0 0.0
    %187 = vmatpush1.msra.mxu0 0.0
    %188 = vmatprep.subr.mxu0 0.0
    %189 = vmatpush1.msra.mxu0 %v158
    %190 = vmatprep.subr.mxu0 0.0
    %191 = vmatpush1.msra.mxu0 %v140
    %192 = vmatprep.subr.mxu0 0.0
    %193 = vmatpush2.msra.mxu0 0.0
    %194 = vmatprep.subr.mxu0 0.0
    %195 = vmatpush2.msra.mxu0 0.0
    %196 = vmatprep.subr.mxu0 0.0
    %197 = vmatpush2.msra.mxu0 0.0
    %198 = vmatprep.subr.mxu0 0.0
    %199 = vmatpush2.msra.mxu0 0.0
    %200 = vmatprep.subr.mxu0 0.0
    %201 = vmatpush2.msra.mxu0 0.0
    %202 = vmatprep.subr.mxu0 0.0
    %203 = vmatpush2.msra.mxu0 0.0
    %204 = vmatprep.subr.mxu0 0.0
    %205 = vmatpush2.msra.mxu0 0.0
    %206 = vmatprep.subr.mxu0 0.0
    %207 = vmatpush2.msra.mxu0 0.0
    %208 = vmatprep.subr.mxu0 0.0
    %209 = vmatpush2.msra.mxu0 0.0
    %210 = vmatprep.subr.mxu0 0.0
    %211 = vmatpush2.msra.mxu0 0.0
    %212 = vmatprep.subr.mxu0 0.0
    %213 = vmatpush2.msra.mxu0 0.0
    %214 = vmatprep.subr.mxu0 0.0
    %215 = vmatpush2.msra.mxu0 0.0
    %216 = vmatprep.subr.mxu0 0.0
    %217 = vmatpush2.msra.mxu0 0.0
    %218 = vmatprep.subr.mxu0 0.0
    %219 = vmatpush2.msra.mxu0 0.0
    %220 = vmatprep.subr.mxu0 0.0
    %221 = vmatpush2.msra.mxu0 0.0
    %222 = vmatprep.subr.mxu0 0.0
    %223 = vmatpush2.msra.mxu0 0.0
    %224 = vmatprep.mubr.f32.mxu0 0.0
    %225 = vmatmul.mubr.f32.gmra.mxu0 %v151
    %v226 = vpop.f32.mrf.mxu0
    %v227 = vadd.f32 %v147, %v226
    %v228 = vpop.f32.mrf.mxu0
    %229 = vmatprep.mubr.f32.mxu0 0.0
    %230 = vmatmul.mubr.f32.gmra.mxu0 %v154
    %v231 = vpop.f32.mrf.mxu0
    %v232 = vadd.f32 %v147, %v231
    %v233 = vpop.f32.mrf.mxu0
    %234 = vdwg.mxu0
    %vm235 = vcmp.ge.f32.partialorder %v227, 0.0
    %vm236 = vcmp.ge.f32.partialorder %v232, 0.0
    %v237 = vmul.f32 %v227, 0.01
    %v238 = vmul.f32 %v232, 0.01
    %v239 = vsel %vm235, %v227, %v237
    %v240 = vsel %vm236, %v232, %v238
    %v241 = vld [vmem:[%s3] sm:$0xff]
    %v242 = vld [vmem:[%s3 + $0x8] sm:$0x3]
    %v243 = vld [vmem:[%s17] sm:$0xff]
    %v244 = vld [vmem:[%s17 + $0x8] sm:$0xf]
    %v245 = vld [vmem:[%s19] sm:$0x1]
    %v247 = vlaneseq
    %v248 = vshrl.u32 %v247, 7
    %v249 = vsub.s32 0, %v248
    %v250 = vrot.slane %v245, %v249
    %vm252 = vcmask 97280
    %v254 = vsel %vm252, %v241, 0
    %v257 = vsel %vm252, %v242, 0
    %vm259 = vcmask 1043456
    %v261 = vsel %vm259, %v244, 0
    %263 = vmatprep.subr.mxu0 0.0
    %264 = vmatpush1.msra.mxu0 0.0
    %265 = vmatprep.subr.mxu0 0.0
    %266 = vmatpush1.msra.mxu0 0.0
    %267 = vmatprep.subr.mxu0 0.0
    %268 = vmatpush1.msra.mxu0 0.0
    %269 = vmatprep.subr.mxu0 0.0
    %270 = vmatpush1.msra.mxu0 0.0
    %271 = vmatprep.subr.mxu0 0.0
    %272 = vmatpush1.msra.mxu0 0.0
    %273 = vmatprep.subr.mxu0 0.0
    %274 = vmatpush1.msra.mxu0 0.0
    %275 = vmatprep.subr.mxu0 0.0
    %276 = vmatpush1.msra.mxu0 0.0
    %277 = vmatprep.subr.mxu0 0.0
    %278 = vmatpush1.msra.mxu0 0.0
    %279 = vmatprep.subr.mxu0 0.0
    %280 = vmatpush1.msra.mxu0 0.0
    %281 = vmatprep.subr.mxu0 0.0
    %282 = vmatpush1.msra.mxu0 0.0
    %283 = vmatprep.subr.mxu0 0.0
    %284 = vmatpush1.msra.mxu0 0.0
    %285 = vmatprep.subr.mxu0 0.0
    %286 = vmatpush1.msra.mxu0 0.0
    %287 = vmatprep.subr.mxu0 0.0
    %288 = vmatpush1.msra.mxu0 0.0
    %289 = vmatprep.subr.mxu0 0.0
    %290 = vmatpush1.msra.mxu0 0.0
    %291 = vmatprep.subr.mxu0 0.0
    %292 = vmatpush1.msra.mxu0 %v261
    %293 = vmatprep.subr.mxu0 0.0
    %294 = vmatpush1.msra.mxu0 %v243
    %295 = vmatprep.subr.mxu0 0.0
    %296 = vmatpush2.msra.mxu0 0.0
    %297 = vmatprep.subr.mxu0 0.0
    %298 = vmatpush2.msra.mxu0 0.0
    %299 = vmatprep.subr.mxu0 0.0
    %300 = vmatpush2.msra.mxu0 0.0
    %301 = vmatprep.subr.mxu0 0.0
    %302 = vmatpush2.msra.mxu0 0.0
    %303 = vmatprep.subr.mxu0 0.0
    %304 = vmatpush2.msra.mxu0 0.0
    %305 = vmatprep.subr.mxu0 0.0
    %306 = vmatpush2.msra.mxu0 0.0
    %307 = vmatprep.subr.mxu0 0.0
    %308 = vmatpush2.msra.mxu0 0.0
    %309 = vmatprep.subr.mxu0 0.0
    %310 = vmatpush2.msra.mxu0 0.0
    %311 = vmatprep.subr.mxu0 0.0
    %312 = vmatpush2.msra.mxu0 0.0
    %313 = vmatprep.subr.mxu0 0.0
    %314 = vmatpush2.msra.mxu0 0.0
    %315 = vmatprep.subr.mxu0 0.0
    %316 = vmatpush2.msra.mxu0 0.0
    %317 = vmatprep.subr.mxu0 0.0
    %318 = vmatpush2.msra.mxu0 0.0
    %319 = vmatprep.subr.mxu0 0.0
    %320 = vmatpush2.msra.mxu0 0.0
    %321 = vmatprep.subr.mxu0 0.0
    %322 = vmatpush2.msra.mxu0 0.0
    %323 = vmatprep.subr.mxu0 0.0
    %324 = vmatpush2.msra.mxu0 0.0
    %325 = vmatprep.subr.mxu0 0.0
    %326 = vmatpush2.msra.mxu0 0.0
    %327 = vmatprep.mubr.f32.mxu0 0.0
    %328 = vmatmul.mubr.f32.gmra.mxu0 %v254
    %v329 = vpop.f32.mrf.mxu0
    %v330 = vadd.f32 %v250, %v329
    %v331 = vpop.f32.mrf.mxu0
    %332 = vmatprep.mubr.f32.mxu0 0.0
    %333 = vmatmul.mubr.f32.gmra.mxu0 %v257
    %v334 = vpop.f32.mrf.mxu0
    %v335 = vadd.f32 %v250, %v334
    %v336 = vpop.f32.mrf.mxu0
    %337 = vdwg.mxu0
    %vm338 = vcmp.ge.f32.partialorder %v330, 0.0
    %vm339 = vcmp.ge.f32.partialorder %v335, 0.0
    %v340 = vmul.f32 %v330, 0.01
    %v341 = vmul.f32 %v335, 0.01
    %v342 = vsel %vm338, %v330, %v340
    %v343 = vsel %vm339, %v335, %v341
    %v344 = vld [vmem:[%s7] sm:$0xff]
    %v345 = vld [vmem:[%s7 + $0x8] sm:$0x3]
    %vm346 = vcmask 80896
    %v348 = vsel %vm346, %v344, 0
    %v351 = vsel %vm346, %v345, 0
    %vm353 = vcmask 1041408
    %v355 = vsel %vm353, %v343, 0
    %357 = vmatprep.subr.mxu0 0.0
    %358 = vmatpush1.msra.mxu0 0.0
    %359 = vmatprep.subr.mxu0 0.0
    %360 = vmatpush1.msra.mxu0 0.0
    %361 = vmatprep.subr.mxu0 0.0
    %362 = vmatpush1.msra.mxu0 0.0
    %363 = vmatprep.subr.mxu0 0.0
    %364 = vmatpush1.msra.mxu0 0.0
    %365 = vmatprep.subr.mxu0 0.0
    %366 = vmatpush1.msra.mxu0 0.0
    %367 = vmatprep.subr.mxu0 0.0
    %368 = vmatpush1.msra.mxu0 0.0
    %369 = vmatprep.subr.mxu0 0.0
    %370 = vmatpush1.msra.mxu0 0.0
    %371 = vmatprep.subr.mxu0 0.0
    %372 = vmatpush1.msra.mxu0 0.0
    %373 = vmatprep.subr.mxu0 0.0
    %374 = vmatpush1.msra.mxu0 0.0
    %375 = vmatprep.subr.mxu0 0.0
    %376 = vmatpush1.msra.mxu0 0.0
    %377 = vmatprep.subr.mxu0 0.0
    %378 = vmatpush1.msra.mxu0 0.0
    %379 = vmatprep.subr.mxu0 0.0
    %380 = vmatpush1.msra.mxu0 0.0
    %381 = vmatprep.subr.mxu0 0.0
    %382 = vmatpush1.msra.mxu0 0.0
    %383 = vmatprep.subr.mxu0 0.0
    %384 = vmatpush1.msra.mxu0 0.0
    %385 = vmatprep.subr.mxu0 0.0
    %386 = vmatpush1.msra.mxu0 %v355
    %387 = vmatprep.subr.mxu0 0.0
    %388 = vmatpush1.msra.mxu0 %v342
    %389 = vmatprep.subr.mxu0 0.0
    %390 = vmatpush2.msra.mxu0 0.0
    %391 = vmatprep.subr.mxu0 0.0
    %392 = vmatpush2.msra.mxu0 0.0
    %393 = vmatprep.subr.mxu0 0.0
    %394 = vmatpush2.msra.mxu0 0.0
    %395 = vmatprep.subr.mxu0 0.0
    %396 = vmatpush2.msra.mxu0 0.0
    %397 = vmatprep.subr.mxu0 0.0
    %398 = vmatpush2.msra.mxu0 0.0
    %399 = vmatprep.subr.mxu0 0.0
    %400 = vmatpush2.msra.mxu0 0.0
    %401 = vmatprep.subr.mxu0 0.0
    %402 = vmatpush2.msra.mxu0 0.0
    %403 = vmatprep.subr.mxu0 0.0
    %404 = vmatpush2.msra.mxu0 0.0
    %405 = vmatprep.subr.mxu0 0.0
    %406 = vmatpush2.msra.mxu0 0.0
    %407 = vmatprep.subr.mxu0 0.0
    %408 = vmatpush2.msra.mxu0 0.0
    %409 = vmatprep.subr.mxu0 0.0
    %410 = vmatpush2.msra.mxu0 0.0
    %411 = vmatprep.subr.mxu0 0.0
    %412 = vmatpush2.msra.mxu0 0.0
    %413 = vmatprep.subr.mxu0 0.0
    %414 = vmatpush2.msra.mxu0 0.0
    %415 = vmatprep.subr.mxu0 0.0
    %416 = vmatpush2.msra.mxu0 0.0
    %417 = vmatprep.subr.mxu0 0.0
    %418 = vmatpush2.msra.mxu0 0.0
    %419 = vmatprep.subr.mxu0 0.0
    %420 = vmatpush2.msra.mxu0 0.0
    %421 = vmatprep.mubr.f32.mxu0 0.0
    %422 = vmatmul.mubr.f32.gmra.mxu0 %v348
    %v423 = vpop.f32.mrf.mxu0
    %v424 = vadd.f32 0.0, %v423
    %v425 = vpop.f32.mrf.mxu0
    %426 = vmatprep.mubr.f32.mxu0 0.0
    %427 = vmatmul.mubr.f32.gmra.mxu0 %v351
    %v428 = vpop.f32.mrf.mxu0
    %v429 = vadd.f32 0.0, %v428
    %v430 = vpop.f32.mrf.mxu0
    %431 = vdwg.mxu0
    %v432 = vadd.f32 %v239, %v424
    %v433 = vadd.f32 %v240, %v429
    %vm434 = vcmp.ge.f32.partialorder %v432, 0.0
    %vm435 = vcmp.ge.f32.partialorder %v433, 0.0
    %v436 = vmul.f32 %v432, 0.01
    %v437 = vmul.f32 %v433, 0.01
    %v438 = vsel %vm434, %v432, %v436
    %v439 = vsel %vm435, %v433, %v437
    %v440 = vld [vmem:[%s9] sm:$0x3]
    %v442 = vsel %vm346, %v440, 0
    %v445 = vsel %vm353, %v439, 0
    %447 = vmatprep.subr.mxu0 0.0
    %448 = vmatpush1.msra.mxu0 0.0
    %449 = vmatprep.subr.mxu0 0.0
    %450 = vmatpush1.msra.mxu0 0.0
    %451 = vmatprep.subr.mxu0 0.0
    %452 = vmatpush1.msra.mxu0 0.0
    %453 = vmatprep.subr.mxu0 0.0
    %454 = vmatpush1.msra.mxu0 0.0
    %455 = vmatprep.subr.mxu0 0.0
    %456 = vmatpush1.msra.mxu0 0.0
    %457 = vmatprep.subr.mxu0 0.0
    %458 = vmatpush1.msra.mxu0 0.0
    %459 = vmatprep.subr.mxu0 0.0
    %460 = vmatpush1.msra.mxu0 0.0
    %461 = vmatprep.subr.mxu0 0.0
    %462 = vmatpush1.msra.mxu0 0.0
    %463 = vmatprep.subr.mxu0 0.0
    %464 = vmatpush1.msra.mxu0 0.0
    %465 = vmatprep.subr.mxu0 0.0
    %466 = vmatpush1.msra.mxu0 0.0
    %467 = vmatprep.subr.mxu0 0.0
    %468 = vmatpush1.msra.mxu0 0.0
    %469 = vmatprep.subr.mxu0 0.0
    %470 = vmatpush1.msra.mxu0 0.0
    %471 = vmatprep.subr.mxu0 0.0
    %472 = vmatpush1.msra.mxu0 0.0
    %473 = vmatprep.subr.mxu0 0.0
    %474 = vmatpush1.msra.mxu0 0.0
    %475 = vmatprep.subr.mxu0 0.0
    %476 = vmatpush1.msra.mxu0 %v445
    %477 = vmatprep.subr.mxu0 0.0
    %478 = vmatpush1.msra.mxu0 %v438
    %479 = vmatprep.subr.mxu0 0.0
    %480 = vmatpush2.msra.mxu0 0.0
    %481 = vmatprep.subr.mxu0 0.0
    %482 = vmatpush2.msra.mxu0 0.0
    %483 = vmatprep.subr.mxu0 0.0
    %484 = vmatpush2.msra.mxu0 0.0
    %485 = vmatprep.subr.mxu0 0.0
    %486 = vmatpush2.msra.mxu0 0.0
    %487 = vmatprep.subr.mxu0 0.0
    %488 = vmatpush2.msra.mxu0 0.0
    %489 = vmatprep.subr.mxu0 0.0
    %490 = vmatpush2.msra.mxu0 0.0
    %491 = vmatprep.subr.mxu0 0.0
    %492 = vmatpush2.msra.mxu0 0.0
    %493 = vmatprep.subr.mxu0 0.0
    %494 = vmatpush2.msra.mxu0 0.0
    %495 = vmatprep.subr.mxu0 0.0
    %496 = vmatpush2.msra.mxu0 0.0
    %497 = vmatprep.subr.mxu0 0.0
    %498 = vmatpush2.msra.mxu0 0.0
    %499 = vmatprep.subr.mxu0 0.0
    %500 = vmatpush2.msra.mxu0 0.0
    %501 = vmatprep.subr.mxu0 0.0
    %502 = vmatpush2.msra.mxu0 0.0
    %503 = vmatprep.subr.mxu0 0.0
    %504 = vmatpush2.msra.mxu0 0.0
    %505 = vmatprep.subr.mxu0 0.0
    %506 = vmatpush2.msra.mxu0 0.0
    %507 = vmatprep.subr.mxu0 0.0
    %508 = vmatpush2.msra.mxu0 0.0
    %509 = vmatprep.subr.mxu0 0.0
    %510 = vmatpush2.msra.mxu0 0.0
    %511 = vmatprep.mubr.f32.mxu0 0.0
    %512 = vmatmul.mubr.f32.gmra.mxu0 %v442
    %v513 = vpop.f32.mrf.mxu0
    %v514 = vadd.f32 0.0, %v513
    %v515 = vpop.f32.mrf.mxu0
    %516 = vdwg.mxu0
    %v517 = vld [vmem:[%s21] sm:$0xff]
    %v518 = vld [vmem:[%s21 + $0x8] sm:$0xff]
    %v519 = vld [vmem:[%s5] sm:$0xff]
    %v520 = vld [vmem:[%s5 + $0x8] sm:$0x3]
    %v521 = vld [vmem:[%s23] sm:$0xff]
    %vm522 = vcmask 64512
    %v524 = vsel %vm522, %v519, 0
    %v527 = vsel %vm522, %v520, 0
    %529 = vmatprep.subr.mxu0 0.0
    %530 = vmatpush1.msra.mxu0 0.0
    %531 = vmatprep.subr.mxu0 0.0
    %532 = vmatpush1.msra.mxu0 0.0
    %533 = vmatprep.subr.mxu0 0.0
    %534 = vmatpush1.msra.mxu0 0.0
    %535 = vmatprep.subr.mxu0 0.0
    %536 = vmatpush1.msra.mxu0 0.0
    %537 = vmatprep.subr.mxu0 0.0
    %538 = vmatpush1.msra.mxu0 0.0
    %539 = vmatprep.subr.mxu0 0.0
    %540 = vmatpush1.msra.mxu0 0.0
    %541 = vmatprep.subr.mxu0 0.0
    %542 = vmatpush1.msra.mxu0 0.0
    %543 = vmatprep.subr.mxu0 0.0
    %544 = vmatpush1.msra.mxu0 0.0
    %545 = vmatprep.subr.mxu0 0.0
    %546 = vmatpush1.msra.mxu0 0.0
    %547 = vmatprep.subr.mxu0 0.0
    %548 = vmatpush1.msra.mxu0 0.0
    %549 = vmatprep.subr.mxu0 0.0
    %550 = vmatpush1.msra.mxu0 0.0
    %551 = vmatprep.subr.mxu0 0.0
    %552 = vmatpush1.msra.mxu0 0.0
    %553 = vmatprep.subr.mxu0 0.0
    %554 = vmatpush1.msra.mxu0 0.0
    %555 = vmatprep.subr.mxu0 0.0
    %556 = vmatpush1.msra.mxu0 0.0
    %557 = vmatprep.subr.mxu0 0.0
    %558 = vmatpush1.msra.mxu0 0.0
    %559 = vmatprep.subr.mxu0 0.0
    %560 = vmatpush1.msra.mxu0 %v521
    %561 = vmatprep.subr.mxu0 0.0
    %562 = vmatpush2.msra.mxu0 0.0
    %563 = vmatprep.subr.mxu0 0.0
    %564 = vmatpush2.msra.mxu0 0.0
    %565 = vmatprep.subr.mxu0 0.0
    %566 = vmatpush2.msra.mxu0 0.0
    %567 = vmatprep.subr.mxu0 0.0
    %568 = vmatpush2.msra.mxu0 0.0
    %569 = vmatprep.subr.mxu0 0.0
    %570 = vmatpush2.msra.mxu0 0.0
    %571 = vmatprep.subr.mxu0 0.0
    %572 = vmatpush2.msra.mxu0 0.0
    %573 = vmatprep.subr.mxu0 0.0
    %574 = vmatpush2.msra.mxu0 0.0
    %575 = vmatprep.subr.mxu0 0.0
    %576 = vmatpush2.msra.mxu0 0.0
    %577 = vmatprep.subr.mxu0 0.0
    %578 = vmatpush2.msra.mxu0 0.0
    %579 = vmatprep.subr.mxu0 0.0
    %580 = vmatpush2.msra.mxu0 0.0
    %581 = vmatprep.subr.mxu0 0.0
    %582 = vmatpush2.msra.mxu0 0.0
    %583 = vmatprep.subr.mxu0 0.0
    %584 = vmatpush2.msra.mxu0 0.0
    %585 = vmatprep.subr.mxu0 0.0
    %586 = vmatpush2.msra.mxu0 0.0
    %587 = vmatprep.subr.mxu0 0.0
    %588 = vmatpush2.msra.mxu0 0.0
    %589 = vmatprep.subr.mxu0 0.0
    %590 = vmatpush2.msra.mxu0 0.0
    %591 = vmatprep.subr.mxu0 0.0
    %592 = vmatpush2.msra.mxu0 0.0
    %593 = vmatprep.mubr.f32.mxu0 0.0
    %594 = vmatmul.mubr.f32.gmra.mxu0 %v524
    %v595 = vpop.f32.mrf.mxu0
    %v596 = vadd.f32 0.0, %v595
    %v597 = vpop.f32.mrf.mxu0
    %598 = vmatprep.mubr.f32.mxu0 0.0
    %599 = vmatmul.mubr.f32.gmra.mxu0 %v527
    %v600 = vpop.f32.mrf.mxu0
    %v601 = vadd.f32 0.0, %v600
    %v602 = vpop.f32.mrf.mxu0
    %603 = vdwg.mxu0
    %vm604 = vcmask 130048
    %v606 = vsel %vm604, %v438, 0
    %v608 = vsel %vm604, %v439, 0
    %610 = vmatprep.subr.mxu0 0.0
    %611 = vmatpush1.msra.mxu0 0.0
    %612 = vmatprep.subr.mxu0 0.0
    %613 = vmatpush1.msra.mxu0 0.0
    %614 = vmatprep.subr.mxu0 0.0
    %615 = vmatpush1.msra.mxu0 0.0
    %616 = vmatprep.subr.mxu0 0.0
    %617 = vmatpush1.msra.mxu0 0.0
    %618 = vmatprep.subr.mxu0 0.0
    %619 = vmatpush1.msra.mxu0 0.0
    %620 = vmatprep.subr.mxu0 0.0
    %621 = vmatpush1.msra.mxu0 0.0
    %622 = vmatprep.subr.mxu0 0.0
    %623 = vmatpush1.msra.mxu0 0.0
    %624 = vmatprep.subr.mxu0 0.0
    %625 = vmatpush1.msra.mxu0 0.0
    %626 = vmatprep.subr.mxu0 0.0
    %627 = vmatpush1.msra.mxu0 0.0
    %628 = vmatprep.subr.mxu0 0.0
    %629 = vmatpush1.msra.mxu0 0.0
    %630 = vmatprep.subr.mxu0 0.0
    %631 = vmatpush1.msra.mxu0 0.0
    %632 = vmatprep.subr.mxu0 0.0
    %633 = vmatpush1.msra.mxu0 0.0
    %634 = vmatprep.subr.mxu0 0.0
    %635 = vmatpush1.msra.mxu0 0.0
    %636 = vmatprep.subr.mxu0 0.0
    %637 = vmatpush1.msra.mxu0 0.0
    %638 = vmatprep.subr.mxu0 0.0
    %639 = vmatpush1.msra.mxu0 %v518
    %640 = vmatprep.subr.mxu0 0.0
    %641 = vmatpush1.msra.mxu0 %v517
    %642 = vmatprep.subr.mxu0 0.0
    %643 = vmatpush2.msra.mxu0 0.0
    %644 = vmatprep.subr.mxu0 0.0
    %645 = vmatpush2.msra.mxu0 0.0
    %646 = vmatprep.subr.mxu0 0.0
    %647 = vmatpush2.msra.mxu0 0.0
    %648 = vmatprep.subr.mxu0 0.0
    %649 = vmatpush2.msra.mxu0 0.0
    %650 = vmatprep.subr.mxu0 0.0
    %651 = vmatpush2.msra.mxu0 0.0
    %652 = vmatprep.subr.mxu0 0.0
    %653 = vmatpush2.msra.mxu0 0.0
    %654 = vmatprep.subr.mxu0 0.0
    %655 = vmatpush2.msra.mxu0 0.0
    %656 = vmatprep.subr.mxu0 0.0
    %657 = vmatpush2.msra.mxu0 0.0
    %658 = vmatprep.subr.mxu0 0.0
    %659 = vmatpush2.msra.mxu0 0.0
    %660 = vmatprep.subr.mxu0 0.0
    %661 = vmatpush2.msra.mxu0 0.0
    %662 = vmatprep.subr.mxu0 0.0
    %663 = vmatpush2.msra.mxu0 0.0
    %664 = vmatprep.subr.mxu0 0.0
    %665 = vmatpush2.msra.mxu0 0.0
    %666 = vmatprep.subr.mxu0 0.0
    %667 = vmatpush2.msra.mxu0 0.0
    %668 = vmatprep.subr.mxu0 0.0
    %669 = vmatpush2.msra.mxu0 0.0
    %670 = vmatprep.subr.mxu0 0.0
    %671 = vmatpush2.msra.mxu0 0.0
    %672 = vmatprep.subr.mxu0 0.0
    %673 = vmatpush2.msra.mxu0 0.0
    %674 = vmatprep.mubr.f32.mxu0 0.0
    %675 = vmatmul.mubr.f32.gmra.mxu0 %v606
    %v676 = vpop.f32.mrf.mxu0
    %v677 = vadd.f32 %v596, %v676
    %v678 = vpop.f32.mrf.mxu0
    %679 = vmatprep.mubr.f32.mxu0 0.0
    %680 = vmatmul.mubr.f32.gmra.mxu0 %v608
    %v681 = vpop.f32.mrf.mxu0
    %v682 = vadd.f32 %v601, %v681
    %v683 = vpop.f32.mrf.mxu0
    %684 = vdwg.mxu0
    %v685 = vld [vmem:[%s25] sm:$0x1]
    %v687 = vlaneseq
    %v688 = vshrl.u32 %v687, 7
    %v689 = vsub.s32 0, %v688
    %v690 = vrot.slane %v685, %v689
    %v692 = vadd.f32 %v677, %v690
    %v693 = vadd.f32 %v682, %v690
    %vm694 = vcmp.ge.f32.partialorder %v692, 0.0
    %vm695 = vcmp.ge.f32.partialorder %v693, 0.0
    %v696 = vmul.f32 %v692, 0.01
    %v697 = vmul.f32 %v693, 0.01
    %v698 = vsel %vm694, %v692, %v696
    %v699 = vsel %vm695, %v693, %v697
    %v700 = vld [vmem:[%s27] sm:$0x1]
    %v701 = vld [vmem:[#allocation2] sm:$0x1]
    %703 = vset.pattern.permute.xlu0 0
    %704 = vperm.xlu0 %703, %v701
    %v705 = vpop.permute.xlu0 %704
    %v707 = vlaneseq
    %v708 = vshrl.u32 %v707, 7
    %v709 = vsub.s32 0, %v708
    %v710 = vrot.slane %v705, %v709
    %vm711 = vcmask 261120
    %v713 = vsel %vm711, %v700, 0
    %v716 = vsel %vm711, %v698, 0
    %v719 = vsel %vm711, %v699, 0
    %721 = vmatprep.subr.mxu0 0.0
    %722 = vmatpush1.xpose.msra.mxu0 0.0
    %723 = vmatprep.subr.mxu0 0.0
    %724 = vmatpush1.xpose.msra.mxu0 0.0
    %725 = vmatprep.subr.mxu0 0.0
    %726 = vmatpush1.xpose.msra.mxu0 0.0
    %727 = vmatprep.subr.mxu0 0.0
    %728 = vmatpush1.xpose.msra.mxu0 0.0
    %729 = vmatprep.subr.mxu0 0.0
    %730 = vmatpush1.xpose.msra.mxu0 0.0
    %731 = vmatprep.subr.mxu0 0.0
    %732 = vmatpush1.xpose.msra.mxu0 0.0
    %733 = vmatprep.subr.mxu0 0.0
    %734 = vmatpush1.xpose.msra.mxu0 0.0
    %735 = vmatprep.subr.mxu0 0.0
    %736 = vmatpush1.xpose.msra.mxu0 0.0
    %737 = vmatprep.subr.mxu0 0.0
    %738 = vmatpush1.xpose.msra.mxu0 0.0
    %739 = vmatprep.subr.mxu0 0.0
    %740 = vmatpush1.xpose.msra.mxu0 0.0
    %741 = vmatprep.subr.mxu0 0.0
    %742 = vmatpush1.xpose.msra.mxu0 0.0
    %743 = vmatprep.subr.mxu0 0.0
    %744 = vmatpush1.xpose.msra.mxu0 0.0
    %745 = vmatprep.subr.mxu0 0.0
    %746 = vmatpush1.xpose.msra.mxu0 0.0
    %747 = vmatprep.subr.mxu0 0.0
    %748 = vmatpush1.xpose.msra.mxu0 0.0
    %749 = vmatprep.subr.mxu0 0.0
    %750 = vmatpush1.xpose.msra.mxu0 %v719
    %751 = vmatprep.subr.mxu0 0.0
    %752 = vmatpush1.xpose.msra.mxu0 %v716
    %753 = vmatprep.subr.mxu0 0.0
    %754 = vmatpush2.xpose.msra.mxu0 0.0
    %755 = vmatprep.subr.mxu0 0.0
    %756 = vmatpush2.xpose.msra.mxu0 0.0
    %757 = vmatprep.subr.mxu0 0.0
    %758 = vmatpush2.xpose.msra.mxu0 0.0
    %759 = vmatprep.subr.mxu0 0.0
    %760 = vmatpush2.xpose.msra.mxu0 0.0
    %761 = vmatprep.subr.mxu0 0.0
    %762 = vmatpush2.xpose.msra.mxu0 0.0
    %763 = vmatprep.subr.mxu0 0.0
    %764 = vmatpush2.xpose.msra.mxu0 0.0
    %765 = vmatprep.subr.mxu0 0.0
    %766 = vmatpush2.xpose.msra.mxu0 0.0
    %767 = vmatprep.subr.mxu0 0.0
    %768 = vmatpush2.xpose.msra.mxu0 0.0
    %769 = vmatprep.subr.mxu0 0.0
    %770 = vmatpush2.xpose.msra.mxu0 0.0
    %771 = vmatprep.subr.mxu0 0.0
    %772 = vmatpush2.xpose.msra.mxu0 0.0
    %773 = vmatprep.subr.mxu0 0.0
    %774 = vmatpush2.xpose.msra.mxu0 0.0
    %775 = vmatprep.subr.mxu0 0.0
    %776 = vmatpush2.xpose.msra.mxu0 0.0
    %777 = vmatprep.subr.mxu0 0.0
    %778 = vmatpush2.xpose.msra.mxu0 0.0
    %779 = vmatprep.subr.mxu0 0.0
    %780 = vmatpush2.xpose.msra.mxu0 0.0
    %781 = vmatprep.subr.mxu0 0.0
    %782 = vmatpush2.xpose.msra.mxu0 0.0
    %783 = vmatprep.subr.mxu0 0.0
    %784 = vmatpush2.xpose.msra.mxu0 0.0
    %785 = vmatprep.mubr.f32.mxu0 0.0
    %786 = vmatmul.mubr.f32.gmra.mxu0 %v713
    %v787 = vpop.f32.mrf.mxu0
    %v788 = vadd.f32 %v710, %v787
    %v789 = vpop.f32.mrf.mxu0
    %790 = vdwg.mxu0
    %v791 = vld [vmem:[%s11] sm:$0x3]
    %vm792 = vcmp.gt.f32.partialorder %v791, 0.0
    %v793 = vlaneseq
    %v794 = vshrl.u32 %v793, 7
    %v795 = vsub.s32 0, %v794
    %v796 = vrot.slane %v788, %v795
    %v797 = vsel %vm792, %v796, -1e+30
    %vm798 = vcmask 74752
    %v799 = vsel %vm798, %v797, -inf
    %800 = vmax.xlane.f32.xlu0 %v799
    %v801 = vpop.xlane.xlu0 %800
    %v802 = vsub.f32 %v797, %v801
    %v803 = vmul.f32 %v802, 1.442695
    %v804 = vpow.pop %v803
    %v805 = vsel %vm792, %v804, 0.0
    %v806 = vsel %vm798, %v805, 0.0
    %807 = vadd.xlane.f32.xlu0 %v806
    %v808 = vpop.xlane.xlu0 %807
    %v809 = vadd.f32 %v808, 1e-16
    %v810 = vrcp.pop %v809
    %v811 = vmul.f32 %v805, %v810
    %v813 = vsel %vm346, %v811, 0
    %815 = vmatprep.subr.mxu0 0.0
    %816 = vmatpush1.msra.mxu0 0.0
    %817 = vmatprep.subr.mxu0 0.0
    %818 = vmatpush1.msra.mxu0 0.0
    %819 = vmatprep.subr.mxu0 0.0
    %820 = vmatpush1.msra.mxu0 0.0
    %821 = vmatprep.subr.mxu0 0.0
    %822 = vmatpush1.msra.mxu0 0.0
    %823 = vmatprep.subr.mxu0 0.0
    %824 = vmatpush1.msra.mxu0 0.0
    %825 = vmatprep.subr.mxu0 0.0
    %826 = vmatpush1.msra.mxu0 0.0
    %827 = vmatprep.subr.mxu0 0.0
    %828 = vmatpush1.msra.mxu0 0.0
    %829 = vmatprep.subr.mxu0 0.0
    %830 = vmatpush1.msra.mxu0 0.0
    %831 = vmatprep.subr.mxu0 0.0
    %832 = vmatpush1.msra.mxu0 0.0
    %833 = vmatprep.subr.mxu0 0.0
    %834 = vmatpush1.msra.mxu0 0.0
    %835 = vmatprep.subr.mxu0 0.0
    %836 = vmatpush1.msra.mxu0 0.0
    %837 = vmatprep.subr.mxu0 0.0
    %838 = vmatpush1.msra.mxu0 0.0
    %839 = vmatprep.subr.mxu0 0.0
    %840 = vmatpush1.msra.mxu0 0.0
    %841 = vmatprep.subr.mxu0 0.0
    %842 = vmatpush1.msra.mxu0 0.0
    %843 = vmatprep.subr.mxu0 0.0
    %844 = vmatpush1.msra.mxu0 %v445
    %845 = vmatprep.subr.mxu0 0.0
    %846 = vmatpush1.msra.mxu0 %v438
    %847 = vmatprep.subr.mxu0 0.0
    %848 = vmatpush2.msra.mxu0 0.0
    %849 = vmatprep.subr.mxu0 0.0
    %850 = vmatpush2.msra.mxu0 0.0
    %851 = vmatprep.subr.mxu0 0.0
    %852 = vmatpush2.msra.mxu0 0.0
    %853 = vmatprep.subr.mxu0 0.0
    %854 = vmatpush2.msra.mxu0 0.0
    %855 = vmatprep.subr.mxu0 0.0
    %856 = vmatpush2.msra.mxu0 0.0
    %857 = vmatprep.subr.mxu0 0.0
    %858 = vmatpush2.msra.mxu0 0.0
    %859 = vmatprep.subr.mxu0 0.0
    %860 = vmatpush2.msra.mxu0 0.0
    %861 = vmatprep.subr.mxu0 0.0
    %862 = vmatpush2.msra.mxu0 0.0
    %863 = vmatprep.subr.mxu0 0.0
    %864 = vmatpush2.msra.mxu0 0.0
    %865 = vmatprep.subr.mxu0 0.0
    %866 = vmatpush2.msra.mxu0 0.0
    %867 = vmatprep.subr.mxu0 0.0
    %868 = vmatpush2.msra.mxu0 0.0
    %869 = vmatprep.subr.mxu0 0.0
    %870 = vmatpush2.msra.mxu0 0.0
    %871 = vmatprep.subr.mxu0 0.0
    %872 = vmatpush2.msra.mxu0 0.0
    %873 = vmatprep.subr.mxu0 0.0
    %874 = vmatpush2.msra.mxu0 0.0
    %875 = vmatprep.subr.mxu0 0.0
    %876 = vmatpush2.msra.mxu0 0.0
    %877 = vmatprep.subr.mxu0 0.0
    %878 = vmatpush2.msra.mxu0 0.0
    %879 = vmatprep.mubr.f32.mxu0 0.0
    %880 = vmatmul.mubr.f32.gmra.mxu0 %v813
    %v881 = vpop.f32.mrf.mxu0
    %v882 = vadd.f32 0.0, %v881
    %v883 = vpop.f32.mrf.mxu0
    %884 = vdwg.mxu0
    %886 = vrot.lane.b32.xlu0 %v882, 16
    %v887 = vpop.permute.xlu0 %886
    %v889 = vsel %vm604, %v514, %v887
    %v890 = vld [vmem:[%s31] sm:$0xff]
    %v891 = vld [vmem:[%s31 + $0x8] sm:$0xff]
    %v892 = vld [vmem:[%s31 + $0x10] sm:$0xff]
    %v893 = vld [vmem:[%s31 + $0x18] sm:$0xff]
    %v895 = vsel %vm711, %v889, 0
    %897 = vmatprep.subr.mxu0 0.0
    %898 = vmatpush1.msra.mxu0 0.0
    %899 = vmatprep.subr.mxu0 0.0
    %900 = vmatpush1.msra.mxu0 0.0
    %901 = vmatprep.subr.mxu0 0.0
    %902 = vmatpush1.msra.mxu0 0.0
    %903 = vmatprep.subr.mxu0 0.0
    %904 = vmatpush1.msra.mxu0 0.0
    %905 = vmatprep.subr.mxu0 0.0
    %906 = vmatpush1.msra.mxu0 0.0
    %907 = vmatprep.subr.mxu0 0.0
    %908 = vmatpush1.msra.mxu0 0.0
    %909 = vmatprep.subr.mxu0 0.0
    %910 = vmatpush1.msra.mxu0 0.0
    %911 = vmatprep.subr.mxu0 0.0
    %912 = vmatpush1.msra.mxu0 0.0
    %913 = vmatprep.subr.mxu0 0.0
    %914 = vmatpush1.msra.mxu0 0.0
    %915 = vmatprep.subr.mxu0 0.0
    %916 = vmatpush1.msra.mxu0 0.0
    %917 = vmatprep.subr.mxu0 0.0
    %918 = vmatpush1.msra.mxu0 0.0
    %919 = vmatprep.subr.mxu0 0.0
    %920 = vmatpush1.msra.mxu0 0.0
    %921 = vmatprep.subr.mxu0 0.0
    %922 = vmatpush1.msra.mxu0 %v893
    %923 = vmatprep.subr.mxu0 0.0
    %924 = vmatpush1.msra.mxu0 %v892
    %925 = vmatprep.subr.mxu0 0.0
    %926 = vmatpush1.msra.mxu0 %v891
    %927 = vmatprep.subr.mxu0 0.0
    %928 = vmatpush1.msra.mxu0 %v890
    %929 = vmatprep.subr.mxu0 0.0
    %930 = vmatpush2.msra.mxu0 0.0
    %931 = vmatprep.subr.mxu0 0.0
    %932 = vmatpush2.msra.mxu0 0.0
    %933 = vmatprep.subr.mxu0 0.0
    %934 = vmatpush2.msra.mxu0 0.0
    %935 = vmatprep.subr.mxu0 0.0
    %936 = vmatpush2.msra.mxu0 0.0
    %937 = vmatprep.subr.mxu0 0.0
    %938 = vmatpush2.msra.mxu0 0.0
    %939 = vmatprep.subr.mxu0 0.0
    %940 = vmatpush2.msra.mxu0 0.0
    %941 = vmatprep.subr.mxu0 0.0
    %942 = vmatpush2.msra.mxu0 0.0
    %943 = vmatprep.subr.mxu0 0.0
    %944 = vmatpush2.msra.mxu0 0.0
    %945 = vmatprep.subr.mxu0 0.0
    %946 = vmatpush2.msra.mxu0 0.0
    %947 = vmatprep.subr.mxu0 0.0
    %948 = vmatpush2.msra.mxu0 0.0
    %949 = vmatprep.subr.mxu0 0.0
    %950 = vmatpush2.msra.mxu0 0.0
    %951 = vmatprep.subr.mxu0 0.0
    %952 = vmatpush2.msra.mxu0 0.0
    %953 = vmatprep.subr.mxu0 0.0
    %954 = vmatpush2.msra.mxu0 0.0
    %955 = vmatprep.subr.mxu0 0.0
    %956 = vmatpush2.msra.mxu0 0.0
    %957 = vmatprep.subr.mxu0 0.0
    %958 = vmatpush2.msra.mxu0 0.0
    %959 = vmatprep.subr.mxu0 0.0
    %960 = vmatpush2.msra.mxu0 0.0
    %961 = vmatprep.mubr.f32.mxu0 0.0
    %962 = vmatmul.mubr.f32.gmra.mxu0 %v895
    %v963 = vpop.f32.mrf.mxu0
    %v964 = vadd.f32 0.0, %v963
    %v965 = vpop.f32.mrf.mxu0
    %966 = vdwg.mxu0
    %vm967 = vcmp.ge.f32.partialorder %v964, 0.0
    %v968 = vmul.f32 %v964, 0.01
    %v969 = vsel %vm967, %v964, %v968
    %971 = vrot.lane.b32.xlu0 %v969, 6
    %v972 = vpop.permute.xlu0 %971
    %vm974 = vcmask 48128
    %v975 = vsel %vm974, 0.0, %v972
    %v976 = vrot.slane %v969, 6
    %977 = vrot.lane.b32.xlu0 %v976, 110
    %v978 = vpop.permute.xlu0 %977
    %v980 = vrot.slane %v969, 4
    %981 = vrot.lane.b32.xlu0 %v980, 86
    %v982 = vpop.permute.xlu0 %981
    %v984 = vrot.slane %v969, 2
    %985 = vrot.lane.b32.xlu0 %v984, 62
    %v986 = vpop.permute.xlu0 %985
    %v988 = vsel %vm353, %v975, %v978
    %v989 = vsel %vm259, %v988, %v982
    %vm990 = vcmask 1045504
    %v991 = vsel %vm990, %v989, %v986
    %v992 = vld [vmem:[%s33] sm:$0xff]
    %v993 = vld [vmem:[%s33 + $0x8] sm:$0xff]
    %v994 = vld [vmem:[%s33 + $0x10] sm:$0xff]
    %v995 = vld [vmem:[%s33 + $0x18] sm:$0xff]
    %v996 = vld [vmem:[%s33 + $0x20] sm:$0xff]
    %v997 = vld [vmem:[%s33 + $0x28] sm:$0xff]
    %v998 = vld [vmem:[%s33 + $0x30] sm:$0xff]
    %v999 = vld [vmem:[%s33 + $0x38] sm:$0xff]
    %v1000 = vld [vmem:[%s33 + $0x40] sm:$0xff]
    %v1001 = vld [vmem:[%s35] sm:$0x7]
    %v1003 = vlaneseq
    %v1004 = vshrl.u32 %v1003, 7
    %v1005 = vsub.s32 0, %v1004
    %v1006 = vrot.slane %v1001, %v1005
    %v1007 = vlaneseq
    %v1008 = vshrl.u32 %v1007, 7
    %v1009 = vsub.s32 1, %v1008
    %v1010 = vrot.slane %v1001, %v1009
    %v1011 = vlaneseq
    %v1012 = vshrl.u32 %v1011, 7
    %v1013 = vsub.s32 2, %v1012
    %v1014 = vrot.slane %v1001, %v1013
    %vm1018 = vcmask 195584
    %v1020 = vsel %vm1018, %v991, 0
    %1022 = vmatprep.subr.mxu0 0.0
    %1023 = vmatpush1.msra.mxu0 0.0
    %1024 = vmatprep.subr.mxu0 0.0
    %1025 = vmatpush1.msra.mxu0 0.0
    %1026 = vmatprep.subr.mxu0 0.0
    %1027 = vmatpush1.msra.mxu0 0.0
    %1028 = vmatprep.subr.mxu0 0.0
    %1029 = vmatpush1.msra.mxu0 0.0
    %1030 = vmatprep.subr.mxu0 0.0
    %1031 = vmatpush1.msra.mxu0 0.0
    %1032 = vmatprep.subr.mxu0 0.0
    %1033 = vmatpush1.msra.mxu0 0.0
    %1034 = vmatprep.subr.mxu0 0.0
    %1035 = vmatpush1.msra.mxu0 0.0
    %1036 = vmatprep.subr.mxu0 0.0
    %1037 = vmatpush1.msra.mxu0 0.0
    %1038 = vmatprep.subr.mxu0 0.0
    %1039 = vmatpush1.msra.mxu0 0.0
    %1040 = vmatprep.subr.mxu0 0.0
    %1041 = vmatpush1.msra.mxu0 0.0
    %1042 = vmatprep.subr.mxu0 0.0
    %1043 = vmatpush1.msra.mxu0 0.0
    %1044 = vmatprep.subr.mxu0 0.0
    %1045 = vmatpush1.msra.mxu0 0.0
    %1046 = vmatprep.subr.mxu0 0.0
    %1047 = vmatpush1.msra.mxu0 0.0
    %1048 = vmatprep.subr.mxu0 %v999
    %1049 = vmatpush1.msra.mxu0 %v998
    %1050 = vmatprep.subr.mxu0 %v996
    %1051 = vmatpush1.msra.mxu0 %v995
    %1052 = vmatprep.subr.mxu0 %v993
    %1053 = vmatpush1.msra.mxu0 %v992
    %1054 = vmatprep.subr.mxu0 0.0
    %1055 = vmatpush2.msra.mxu0 0.0
    %1056 = vmatprep.subr.mxu0 0.0
    %1057 = vmatpush2.msra.mxu0 0.0
    %1058 = vmatprep.subr.mxu0 0.0
    %1059 = vmatpush2.msra.mxu0 0.0
    %1060 = vmatprep.subr.mxu0 0.0
    %1061 = vmatpush2.msra.mxu0 0.0
    %1062 = vmatprep.subr.mxu0 0.0
    %1063 = vmatpush2.msra.mxu0 0.0
    %1064 = vmatprep.subr.mxu0 0.0
    %1065 = vmatpush2.msra.mxu0 0.0
    %1066 = vmatprep.subr.mxu0 0.0
    %1067 = vmatpush2.msra.mxu0 0.0
    %1068 = vmatprep.subr.mxu0 0.0
    %1069 = vmatpush2.msra.mxu0 0.0
    %1070 = vmatprep.subr.mxu0 0.0
    %1071 = vmatpush2.msra.mxu0 0.0
    %1072 = vmatprep.subr.mxu0 0.0
    %1073 = vmatpush2.msra.mxu0 0.0
    %1074 = vmatprep.subr.mxu0 0.0
    %1075 = vmatpush2.msra.mxu0 0.0
    %1076 = vmatprep.subr.mxu0 0.0
    %1077 = vmatpush2.msra.mxu0 0.0
    %1078 = vmatprep.subr.mxu0 0.0
    %1079 = vmatpush2.msra.mxu0 0.0
    %1080 = vmatprep.subr.mxu0 0.0
    %1081 = vmatpush2.msra.mxu0 0.0
    %1082 = vmatprep.subr.mxu0 0.0
    %1083 = vmatpush2.msra.mxu0 0.0
    %1084 = vmatprep.subr.mxu0 0.0
    %1085 = vmatpush2.msra.mxu0 0.0
    %1086 = vmatprep.mubr.f32.mxu0 0.0
    %1087 = vmatmul.mubr.f32.gmra.mxu0 %v1020
    %v1088 = vpop.f32.mrf.mxu0
    %v1089 = vadd.f32 %v1006, %v1088
    %v1090 = vpop.f32.mrf.mxu0
    %v1091 = vadd.f32 %v1010, %v1090
    %1092 = vdwg.mxu0
    %1093 = vmatprep.subr.mxu0 0.0
    %1094 = vmatpush1.msra.mxu0 0.0
    %1095 = vmatprep.subr.mxu0 0.0
    %1096 = vmatpush1.msra.mxu0 0.0
    %1097 = vmatprep.subr.mxu0 0.0
    %1098 = vmatpush1.msra.mxu0 0.0
    %1099 = vmatprep.subr.mxu0 0.0
    %1100 = vmatpush1.msra.mxu0 0.0
    %1101 = vmatprep.subr.mxu0 0.0
    %1102 = vmatpush1.msra.mxu0 0.0
    %1103 = vmatprep.subr.mxu0 0.0
    %1104 = vmatpush1.msra.mxu0 0.0
    %1105 = vmatprep.subr.mxu0 0.0
    %1106 = vmatpush1.msra.mxu0 0.0
    %1107 = vmatprep.subr.mxu0 0.0
    %1108 = vmatpush1.msra.mxu0 0.0
    %1109 = vmatprep.subr.mxu0 0.0
    %1110 = vmatpush1.msra.mxu0 0.0
    %1111 = vmatprep.subr.mxu0 0.0
    %1112 = vmatpush1.msra.mxu0 0.0
    %1113 = vmatprep.subr.mxu0 0.0
    %1114 = vmatpush1.msra.mxu0 0.0
    %1115 = vmatprep.subr.mxu0 0.0
    %1116 = vmatpush1.msra.mxu0 0.0
    %1117 = vmatprep.subr.mxu0 0.0
    %1118 = vmatpush1.msra.mxu0 0.0
    %1119 = vmatprep.subr.mxu0 0.0
    %1120 = vmatpush1.msra.mxu0 %v1000
    %1121 = vmatprep.subr.mxu0 0.0
    %1122 = vmatpush1.msra.mxu0 %v997
    %1123 = vmatprep.subr.mxu0 0.0
    %1124 = vmatpush1.msra.mxu0 %v994
    %1125 = vmatprep.subr.mxu0 0.0
    %1126 = vmatpush2.msra.mxu0 0.0
    %1127 = vmatprep.subr.mxu0 0.0
    %1128 = vmatpush2.msra.mxu0 0.0
    %1129 = vmatprep.subr.mxu0 0.0
    %1130 = vmatpush2.msra.mxu0 0.0
    %1131 = vmatprep.subr.mxu0 0.0
    %1132 = vmatpush2.msra.mxu0 0.0
    %1133 = vmatprep.subr.mxu0 0.0
    %1134 = vmatpush2.msra.mxu0 0.0
    %1135 = vmatprep.subr.mxu0 0.0
    %1136 = vmatpush2.msra.mxu0 0.0
    %1137 = vmatprep.subr.mxu0 0.0
    %1138 = vmatpush2.msra.mxu0 0.0
    %1139 = vmatprep.subr.mxu0 0.0
    %1140 = vmatpush2.msra.mxu0 0.0
    %1141 = vmatprep.subr.mxu0 0.0
    %1142 = vmatpush2.msra.mxu0 0.0
    %1143 = vmatprep.subr.mxu0 0.0
    %1144 = vmatpush2.msra.mxu0 0.0
    %1145 = vmatprep.subr.mxu0 0.0
    %1146 = vmatpush2.msra.mxu0 0.0
    %1147 = vmatprep.subr.mxu0 0.0
    %1148 = vmatpush2.msra.mxu0 0.0
    %1149 = vmatprep.subr.mxu0 0.0
    %1150 = vmatpush2.msra.mxu0 0.0
    %1151 = vmatprep.subr.mxu0 0.0
    %1152 = vmatpush2.msra.mxu0 0.0
    %1153 = vmatprep.subr.mxu0 0.0
    %1154 = vmatpush2.msra.mxu0 0.0
    %1155 = vmatprep.subr.mxu0 0.0
    %1156 = vmatpush2.msra.mxu0 0.0
    %1157 = vmatprep.mubr.f32.mxu0 0.0
    %1158 = vmatmul.mubr.f32.gmra.mxu0 %v1020
    %v1159 = vpop.f32.mrf.mxu0
    %v1160 = vadd.f32 %v1014, %v1159
    %v1161 = vpop.f32.mrf.mxu0
    %1162 = vdwg.mxu0
    %v1163 = vld [vmem:[%s41] sm:$0xff]
    %v1164 = vld [vmem:[%s37] sm:$0xff]
    %v1165 = vld [vmem:[%s37 + $0x8] sm:$0xff]
    %v1166 = vld [vmem:[%s37 + $0x10] sm:$0xff]
    %v1167 = vld [vmem:[%s37 + $0x18] sm:$0xff]
    %v1168 = vld [vmem:[%s37 + $0x20] sm:$0xff]
    %v1169 = vld [vmem:[%s37 + $0x28] sm:$0xff]
    %v1170 = vld [vmem:[%s37 + $0x30] sm:$0xff]
    %v1171 = vld [vmem:[%s37 + $0x38] sm:$0xff]
    %v1172 = vld [vmem:[%s37 + $0x40] sm:$0xff]
    %v1173 = vld [vmem:[%s37 + $0x48] sm:$0xff]
    %v1174 = vld [vmem:[%s37 + $0x50] sm:$0xff]
    %v1175 = vld [vmem:[%s37 + $0x58] sm:$0xff]
    %v1176 = vld [vmem:[%s37 + $0x60] sm:$0xff]
    %v1177 = vld [vmem:[%s37 + $0x68] sm:$0xff]
    %v1178 = vld [vmem:[%s37 + $0x70] sm:$0xff]
    %v1179 = vld [vmem:[%s37 + $0x78] sm:$0xff]
    %v1181 = vsel %vm711, %v1089, 0
    %v1184 = vsel %vm711, %v1091, 0
    %1186 = vmatprep.subr.mxu0 0.0
    %1187 = vmatpush1.xpose.msra.mxu0 0.0
    %1188 = vmatprep.subr.mxu0 0.0
    %1189 = vmatpush1.xpose.msra.mxu0 0.0
    %1190 = vmatprep.subr.mxu0 0.0
    %1191 = vmatpush1.xpose.msra.mxu0 0.0
    %1192 = vmatprep.subr.mxu0 0.0
    %1193 = vmatpush1.xpose.msra.mxu0 0.0
    %1194 = vmatprep.subr.mxu0 0.0
    %1195 = vmatpush1.xpose.msra.mxu0 0.0
    %1196 = vmatprep.subr.mxu0 0.0
    %1197 = vmatpush1.xpose.msra.mxu0 0.0
    %1198 = vmatprep.subr.mxu0 0.0
    %1199 = vmatpush1.xpose.msra.mxu0 0.0
    %1200 = vmatprep.subr.mxu0 0.0
    %1201 = vmatpush1.xpose.msra.mxu0 0.0
    %1202 = vmatprep.subr.mxu0 0.0
    %1203 = vmatpush1.xpose.msra.mxu0 0.0
    %1204 = vmatprep.subr.mxu0 0.0
    %1205 = vmatpush1.xpose.msra.mxu0 0.0
    %1206 = vmatprep.subr.mxu0 0.0
    %1207 = vmatpush1.xpose.msra.mxu0 0.0
    %1208 = vmatprep.subr.mxu0 0.0
    %1209 = vmatpush1.xpose.msra.mxu0 0.0
    %1210 = vmatprep.subr.mxu0 0.0
    %1211 = vmatpush1.xpose.msra.mxu0 0.0
    %1212 = vmatprep.subr.mxu0 0.0
    %1213 = vmatpush1.xpose.msra.mxu0 0.0
    %1214 = vmatprep.subr.mxu0 0.0
    %1215 = vmatpush1.xpose.msra.mxu0 0.0
    %1216 = vmatprep.subr.mxu0 0.0
    %1217 = vmatpush1.xpose.msra.mxu0 %v1184
    %1218 = vmatprep.subr.mxu0 0.0
    %1219 = vmatpush2.xpose.msra.mxu0 0.0
    %1220 = vmatprep.subr.mxu0 0.0
    %1221 = vmatpush2.xpose.msra.mxu0 0.0
    %1222 = vmatprep.subr.mxu0 0.0
    %1223 = vmatpush2.xpose.msra.mxu0 0.0
    %1224 = vmatprep.subr.mxu0 0.0
    %1225 = vmatpush2.xpose.msra.mxu0 0.0
    %1226 = vmatprep.subr.mxu0 0.0
    %1227 = vmatpush2.xpose.msra.mxu0 0.0
    %1228 = vmatprep.subr.mxu0 0.0
    %1229 = vmatpush2.xpose.msra.mxu0 0.0
    %1230 = vmatprep.subr.mxu0 0.0
    %1231 = vmatpush2.xpose.msra.mxu0 0.0
    %1232 = vmatprep.subr.mxu0 0.0
    %1233 = vmatpush2.xpose.msra.mxu0 0.0
    %1234 = vmatprep.subr.mxu0 0.0
    %1235 = vmatpush2.xpose.msra.mxu0 0.0
    %1236 = vmatprep.subr.mxu0 0.0
    %1237 = vmatpush2.xpose.msra.mxu0 0.0
    %1238 = vmatprep.subr.mxu0 0.0
    %1239 = vmatpush2.xpose.msra.mxu0 0.0
    %1240 = vmatprep.subr.mxu0 0.0
    %1241 = vmatpush2.xpose.msra.mxu0 0.0
    %1242 = vmatprep.subr.mxu0 0.0
    %1243 = vmatpush2.xpose.msra.mxu0 0.0
    %1244 = vmatprep.subr.mxu0 0.0
    %1245 = vmatpush2.xpose.msra.mxu0 0.0
    %1246 = vmatprep.subr.mxu0 0.0
    %1247 = vmatpush2.xpose.msra.mxu0 0.0
    %1248 = vmatprep.subr.mxu0 0.0
    %1249 = vmatpush2.xpose.msra.mxu0 0.0
    %1250 = vmatprep.mubr.f32.mxu0 0.0
    %1251 = vmatmul.mubr.f32.gmra.mxu0 %v1181
    %v1252 = vpop.f32.mrf.mxu0
    %v1253 = vadd.f32 0.0, %v1252
    %v1254 = vpop.f32.mrf.mxu0
    %1255 = vdwg.mxu0
    %v1256 = vmul.f32 %v1253, 0.17677669
    %v1257 = vadd.f32 %v1256, %v1163
    %v1258 = vsel %vm522, %v1257, -inf
    %1259 = vmax.xlane.f32.xlu0 %v1258
    %v1260 = vpop.xlane.xlu0 %1259
    %v1261 = vsub.f32 %v1257, %v1260
    %v1262 = vmul.f32 %v1261, 1.442695
    %v1263 = vpow.pop %v1262
    %v1264 = vsel %vm522, %v1263, 0.0
    %1265 = vadd.xlane.f32.xlu0 %v1264
    %v1266 = vpop.xlane.xlu0 %1265
    %v1267 = vrcp.pop %v1266
    %v1268 = vmul.f32 %v1263, %v1267
    %v1270 = vsel %vm522, %v1268, 0
    %1272 = vmatprep.subr.mxu0 0.0
    %1273 = vmatpush1.msra.mxu0 0.0
    %1274 = vmatprep.subr.mxu0 0.0
    %1275 = vmatpush1.msra.mxu0 0.0
    %1276 = vmatprep.subr.mxu0 0.0
    %1277 = vmatpush1.msra.mxu0 0.0
    %1278 = vmatprep.subr.mxu0 0.0
    %1279 = vmatpush1.msra.mxu0 0.0
    %1280 = vmatprep.subr.mxu0 0.0
    %1281 = vmatpush1.msra.mxu0 0.0
    %1282 = vmatprep.subr.mxu0 0.0
    %1283 = vmatpush1.msra.mxu0 0.0
    %1284 = vmatprep.subr.mxu0 0.0
    %1285 = vmatpush1.msra.mxu0 0.0
    %1286 = vmatprep.subr.mxu0 0.0
    %1287 = vmatpush1.msra.mxu0 0.0
    %1288 = vmatprep.subr.mxu0 0.0
    %1289 = vmatpush1.msra.mxu0 0.0
    %1290 = vmatprep.subr.mxu0 0.0
    %1291 = vmatpush1.msra.mxu0 0.0
    %1292 = vmatprep.subr.mxu0 0.0
    %1293 = vmatpush1.msra.mxu0 0.0
    %1294 = vmatprep.subr.mxu0 0.0
    %1295 = vmatpush1.msra.mxu0 0.0
    %1296 = vmatprep.subr.mxu0 0.0
    %1297 = vmatpush1.msra.mxu0 0.0
    %1298 = vmatprep.subr.mxu0 0.0
    %1299 = vmatpush1.msra.mxu0 0.0
    %1300 = vmatprep.subr.mxu0 0.0
    %1301 = vmatpush1.msra.mxu0 0.0
    %1302 = vmatprep.subr.mxu0 0.0
    %1303 = vmatpush1.msra.mxu0 %v1160
    %1304 = vmatprep.subr.mxu0 0.0
    %1305 = vmatpush2.msra.mxu0 0.0
    %1306 = vmatprep.subr.mxu0 0.0
    %1307 = vmatpush2.msra.mxu0 0.0
    %1308 = vmatprep.subr.mxu0 0.0
    %1309 = vmatpush2.msra.mxu0 0.0
    %1310 = vmatprep.subr.mxu0 0.0
    %1311 = vmatpush2.msra.mxu0 0.0
    %1312 = vmatprep.subr.mxu0 0.0
    %1313 = vmatpush2.msra.mxu0 0.0
    %1314 = vmatprep.subr.mxu0 0.0
    %1315 = vmatpush2.msra.mxu0 0.0
    %1316 = vmatprep.subr.mxu0 0.0
    %1317 = vmatpush2.msra.mxu0 0.0
    %1318 = vmatprep.subr.mxu0 0.0
    %1319 = vmatpush2.msra.mxu0 0.0
    %1320 = vmatprep.subr.mxu0 0.0
    %1321 = vmatpush2.msra.mxu0 0.0
    %1322 = vmatprep.subr.mxu0 0.0
    %1323 = vmatpush2.msra.mxu0 0.0
    %1324 = vmatprep.subr.mxu0 0.0
    %1325 = vmatpush2.msra.mxu0 0.0
    %1326 = vmatprep.subr.mxu0 0.0
    %1327 = vmatpush2.msra.mxu0 0.0
    %1328 = vmatprep.subr.mxu0 0.0
    %1329 = vmatpush2.msra.mxu0 0.0
    %1330 = vmatprep.subr.mxu0 0.0
    %1331 = vmatpush2.msra.mxu0 0.0
    %1332 = vmatprep.subr.mxu0 0.0
    %1333 = vmatpush2.msra.mxu0 0.0
    %1334 = vmatprep.subr.mxu0 0.0
    %1335 = vmatpush2.msra.mxu0 0.0
    %1336 = vmatprep.mubr.f32.mxu0 0.0
    %1337 = vmatmul.mubr.f32.gmra.mxu0 %v1270
    %v1338 = vpop.f32.mrf.mxu0
    %v1339 = vadd.f32 0.0, %v1338
    %v1340 = vpop.f32.mrf.mxu0
    %1341 = vdwg.mxu0
    %1342 = vrot.lane.b32.xlu0 %v1089, 96
    %v1343 = vpop.permute.xlu0 %1342
    %1344 = vrot.lane.b32.xlu0 %v1091, 96
    %v1345 = vpop.permute.xlu0 %1344
    %v1346 = vsel %vm711, %v1343, 0
    %v1348 = vsel %vm711, %v1345, 0
    %1350 = vmatprep.subr.mxu0 0.0
    %1351 = vmatpush1.xpose.msra.mxu0 0.0
    %1352 = vmatprep.subr.mxu0 0.0
    %1353 = vmatpush1.xpose.msra.mxu0 0.0
    %1354 = vmatprep.subr.mxu0 0.0
    %1355 = vmatpush1.xpose.msra.mxu0 0.0
    %1356 = vmatprep.subr.mxu0 0.0
    %1357 = vmatpush1.xpose.msra.mxu0 0.0
    %1358 = vmatprep.subr.mxu0 0.0
    %1359 = vmatpush1.xpose.msra.mxu0 0.0
    %1360 = vmatprep.subr.mxu0 0.0
    %1361 = vmatpush1.xpose.msra.mxu0 0.0
    %1362 = vmatprep.subr.mxu0 0.0
    %1363 = vmatpush1.xpose.msra.mxu0 0.0
    %1364 = vmatprep.subr.mxu0 0.0
    %1365 = vmatpush1.xpose.msra.mxu0 0.0
    %1366 = vmatprep.subr.mxu0 0.0
    %1367 = vmatpush1.xpose.msra.mxu0 0.0
    %1368 = vmatprep.subr.mxu0 0.0
    %1369 = vmatpush1.xpose.msra.mxu0 0.0
    %1370 = vmatprep.subr.mxu0 0.0
    %1371 = vmatpush1.xpose.msra.mxu0 0.0
    %1372 = vmatprep.subr.mxu0 0.0
    %1373 = vmatpush1.xpose.msra.mxu0 0.0
    %1374 = vmatprep.subr.mxu0 0.0
    %1375 = vmatpush1.xpose.msra.mxu0 0.0
    %1376 = vmatprep.subr.mxu0 0.0
    %1377 = vmatpush1.xpose.msra.mxu0 0.0
    %1378 = vmatprep.subr.mxu0 0.0
    %1379 = vmatpush1.xpose.msra.mxu0 0.0
    %1380 = vmatprep.subr.mxu0 0.0
    %1381 = vmatpush1.xpose.msra.mxu0 %v1348
    %1382 = vmatprep.subr.mxu0 0.0
    %1383 = vmatpush2.xpose.msra.mxu0 0.0
    %1384 = vmatprep.subr.mxu0 0.0
    %1385 = vmatpush2.xpose.msra.mxu0 0.0
    %1386 = vmatprep.subr.mxu0 0.0
    %1387 = vmatpush2.xpose.msra.mxu0 0.0
    %1388 = vmatprep.subr.mxu0 0.0
    %1389 = vmatpush2.xpose.msra.mxu0 0.0
    %1390 = vmatprep.subr.mxu0 0.0
    %1391 = vmatpush2.xpose.msra.mxu0 0.0
    %1392 = vmatprep.subr.mxu0 0.0
    %1393 = vmatpush2.xpose.msra.mxu0 0.0
    %1394 = vmatprep.subr.mxu0 0.0
    %1395 = vmatpush2.xpose.msra.mxu0 0.0
    %1396 = vmatprep.subr.mxu0 0.0
    %1397 = vmatpush2.xpose.msra.mxu0 0.0
    %1398 = vmatprep.subr.mxu0 0.0
    %1399 = vmatpush2.xpose.msra.mxu0 0.0
    %1400 = vmatprep.subr.mxu0 0.0
    %1401 = vmatpush2.xpose.msra.mxu0 0.0
    %1402 = vmatprep.subr.mxu0 0.0
    %1403 = vmatpush2.xpose.msra.mxu0 0.0
    %1404 = vmatprep.subr.mxu0 0.0
    %1405 = vmatpush2.xpose.msra.mxu0 0.0
    %1406 = vmatprep.subr.mxu0 0.0
    %1407 = vmatpush2.xpose.msra.mxu0 0.0
    %1408 = vmatprep.subr.mxu0 0.0
    %1409 = vmatpush2.xpose.msra.mxu0 0.0
    %1410 = vmatprep.subr.mxu0 0.0
    %1411 = vmatpush2.xpose.msra.mxu0 0.0
    %1412 = vmatprep.subr.mxu0 0.0
    %1413 = vmatpush2.xpose.msra.mxu0 0.0
    %1414 = vmatprep.mubr.f32.mxu0 0.0
    %1415 = vmatmul.mubr.f32.gmra.mxu0 %v1346
    %v1416 = vpop.f32.mrf.mxu0
    %v1417 = vadd.f32 0.0, %v1416
    %v1418 = vpop.f32.mrf.mxu0
    %1419 = vdwg.mxu0
    %v1420 = vmul.f32 %v1417, 0.17677669
    %v1421 = vadd.f32 %v1420, %v1163
    %v1422 = vsel %vm522, %v1421, -inf
    %1423 = vmax.xlane.f32.xlu0 %v1422
    %v1424 = vpop.xlane.xlu0 %1423
    %v1425 = vsub.f32 %v1421, %v1424
    %v1426 = vmul.f32 %v1425, 1.442695
    %v1427 = vpow.pop %v1426
    %v1428 = vsel %vm522, %v1427, 0.0
    %1429 = vadd.xlane.f32.xlu0 %v1428
    %v1430 = vpop.xlane.xlu0 %1429
    %v1431 = vrcp.pop %v1430
    %v1432 = vmul.f32 %v1427, %v1431
    %1434 = vrot.lane.b32.xlu0 %v1160, 96
    %v1435 = vpop.permute.xlu0 %1434
    %v1438 = vsel %vm522, %v1432, 0
    %1440 = vmatprep.subr.mxu0 0.0
    %1441 = vmatpush1.msra.mxu0 0.0
    %1442 = vmatprep.subr.mxu0 0.0
    %1443 = vmatpush1.msra.mxu0 0.0
    %1444 = vmatprep.subr.mxu0 0.0
    %1445 = vmatpush1.msra.mxu0 0.0
    %1446 = vmatprep.subr.mxu0 0.0
    %1447 = vmatpush1.msra.mxu0 0.0
    %1448 = vmatprep.subr.mxu0 0.0
    %1449 = vmatpush1.msra.mxu0 0.0
    %1450 = vmatprep.subr.mxu0 0.0
    %1451 = vmatpush1.msra.mxu0 0.0
    %1452 = vmatprep.subr.mxu0 0.0
    %1453 = vmatpush1.msra.mxu0 0.0
    %1454 = vmatprep.subr.mxu0 0.0
    %1455 = vmatpush1.msra.mxu0 0.0
    %1456 = vmatprep.subr.mxu0 0.0
    %1457 = vmatpush1.msra.mxu0 0.0
    %1458 = vmatprep.subr.mxu0 0.0
    %1459 = vmatpush1.msra.mxu0 0.0
    %1460 = vmatprep.subr.mxu0 0.0
    %1461 = vmatpush1.msra.mxu0 0.0
    %1462 = vmatprep.subr.mxu0 0.0
    %1463 = vmatpush1.msra.mxu0 0.0
    %1464 = vmatprep.subr.mxu0 0.0
    %1465 = vmatpush1.msra.mxu0 0.0
    %1466 = vmatprep.subr.mxu0 0.0
    %1467 = vmatpush1.msra.mxu0 0.0
    %1468 = vmatprep.subr.mxu0 0.0
    %1469 = vmatpush1.msra.mxu0 0.0
    %1470 = vmatprep.subr.mxu0 0.0
    %1471 = vmatpush1.msra.mxu0 %v1435
    %1472 = vmatprep.subr.mxu0 0.0
    %1473 = vmatpush2.msra.mxu0 0.0
    %1474 = vmatprep.subr.mxu0 0.0
    %1475 = vmatpush2.msra.mxu0 0.0
    %1476 = vmatprep.subr.mxu0 0.0
    %1477 = vmatpush2.msra.mxu0 0.0
    %1478 = vmatprep.subr.mxu0 0.0
    %1479 = vmatpush2.msra.mxu0 0.0
    %1480 = vmatprep.subr.mxu0 0.0
    %1481 = vmatpush2.msra.mxu0 0.0
    %1482 = vmatprep.subr.mxu0 0.0
    %1483 = vmatpush2.msra.mxu0 0.0
    %1484 = vmatprep.subr.mxu0 0.0
    %1485 = vmatpush2.msra.mxu0 0.0
    %1486 = vmatprep.subr.mxu0 0.0
    %1487 = vmatpush2.msra.mxu0 0.0
    %1488 = vmatprep.subr.mxu0 0.0
    %1489 = vmatpush2.msra.mxu0 0.0
    %1490 = vmatprep.subr.mxu0 0.0
    %1491 = vmatpush2.msra.mxu0 0.0
    %1492 = vmatprep.subr.mxu0 0.0
    %1493 = vmatpush2.msra.mxu0 0.0
    %1494 = vmatprep.subr.mxu0 0.0
    %1495 = vmatpush2.msra.mxu0 0.0
    %1496 = vmatprep.subr.mxu0 0.0
    %1497 = vmatpush2.msra.mxu0 0.0
    %1498 = vmatprep.subr.mxu0 0.0
    %1499 = vmatpush2.msra.mxu0 0.0
    %1500 = vmatprep.subr.mxu0 0.0
    %1501 = vmatpush2.msra.mxu0 0.0
    %1502 = vmatprep.subr.mxu0 0.0
    %1503 = vmatpush2.msra.mxu0 0.0
    %1504 = vmatprep.mubr.f32.mxu0 0.0
    %1505 = vmatmul.mubr.f32.gmra.mxu0 %v1438
    %v1506 = vpop.f32.mrf.mxu0
    %v1507 = vadd.f32 0.0, %v1506
    %v1508 = vpop.f32.mrf.mxu0
    %1509 = vdwg.mxu0
    %v1511 = vsel %vm711, %v1507, 0
    %1513 = vmatprep.subr.mxu0 0.0
    %1514 = vmatpush1.msra.mxu0 0.0
    %1515 = vmatprep.subr.mxu0 0.0
    %1516 = vmatpush1.msra.mxu0 0.0
    %1517 = vmatprep.subr.mxu0 0.0
    %1518 = vmatpush1.msra.mxu0 0.0
    %1519 = vmatprep.subr.mxu0 0.0
    %1520 = vmatpush1.msra.mxu0 0.0
    %1521 = vmatprep.subr.mxu0 0.0
    %1522 = vmatpush1.msra.mxu0 0.0
    %1523 = vmatprep.subr.mxu0 0.0
    %1524 = vmatpush1.msra.mxu0 0.0
    %1525 = vmatprep.subr.mxu0 0.0
    %1526 = vmatpush1.msra.mxu0 0.0
    %1527 = vmatprep.subr.mxu0 0.0
    %1528 = vmatpush1.msra.mxu0 0.0
    %1529 = vmatprep.subr.mxu0 0.0
    %1530 = vmatpush1.msra.mxu0 0.0
    %1531 = vmatprep.subr.mxu0 0.0
    %1532 = vmatpush1.msra.mxu0 0.0
    %1533 = vmatprep.subr.mxu0 0.0
    %1534 = vmatpush1.msra.mxu0 0.0
    %1535 = vmatprep.subr.mxu0 0.0
    %1536 = vmatpush1.msra.mxu0 0.0
    %1537 = vmatprep.subr.mxu0 0.0
    %1538 = vmatpush1.msra.mxu0 %v1171
    %1539 = vmatprep.subr.mxu0 0.0
    %1540 = vmatpush1.msra.mxu0 %v1170
    %1541 = vmatprep.subr.mxu0 0.0
    %1542 = vmatpush1.msra.mxu0 %v1169
    %1543 = vmatprep.subr.mxu0 0.0
    %1544 = vmatpush1.msra.mxu0 %v1168
    %1545 = vmatprep.subr.mxu0 0.0
    %1546 = vmatpush2.msra.mxu0 0.0
    %1547 = vmatprep.subr.mxu0 0.0
    %1548 = vmatpush2.msra.mxu0 0.0
    %1549 = vmatprep.subr.mxu0 0.0
    %1550 = vmatpush2.msra.mxu0 0.0
    %1551 = vmatprep.subr.mxu0 0.0
    %1552 = vmatpush2.msra.mxu0 0.0
    %1553 = vmatprep.subr.mxu0 0.0
    %1554 = vmatpush2.msra.mxu0 0.0
    %1555 = vmatprep.subr.mxu0 0.0
    %1556 = vmatpush2.msra.mxu0 0.0
    %1557 = vmatprep.subr.mxu0 0.0
    %1558 = vmatpush2.msra.mxu0 0.0
    %1559 = vmatprep.subr.mxu0 0.0
    %1560 = vmatpush2.msra.mxu0 0.0
    %1561 = vmatprep.subr.mxu0 0.0
    %1562 = vmatpush2.msra.mxu0 0.0
    %1563 = vmatprep.subr.mxu0 0.0
    %1564 = vmatpush2.msra.mxu0 0.0
    %1565 = vmatprep.subr.mxu0 0.0
    %1566 = vmatpush2.msra.mxu0 0.0
    %1567 = vmatprep.subr.mxu0 0.0
    %1568 = vmatpush2.msra.mxu0 0.0
    %1569 = vmatprep.subr.mxu0 0.0
    %1570 = vmatpush2.msra.mxu0 0.0
    %1571 = vmatprep.subr.mxu0 0.0
    %1572 = vmatpush2.msra.mxu0 0.0
    %1573 = vmatprep.subr.mxu0 0.0
    %1574 = vmatpush2.msra.mxu0 0.0
    %1575 = vmatprep.subr.mxu0 0.0
    %1576 = vmatpush2.msra.mxu0 0.0
    %1577 = vmatprep.mubr.f32.mxu0 0.0
    %1578 = vmatmul.mubr.f32.gmra.mxu0 %v1511
    %v1579 = vpop.f32.mrf.mxu0
    %v1580 = vadd.f32 0.0, %v1579
    %v1581 = vpop.f32.mrf.mxu0
    %1582 = vdwg.mxu0
    %v1584 = vsel %vm711, %v1339, 0
    %1586 = vmatprep.subr.mxu0 0.0
    %1587 = vmatpush1.msra.mxu0 0.0
    %1588 = vmatprep.subr.mxu0 0.0
    %1589 = vmatpush1.msra.mxu0 0.0
    %1590 = vmatprep.subr.mxu0 0.0
    %1591 = vmatpush1.msra.mxu0 0.0
    %1592 = vmatprep.subr.mxu0 0.0
    %1593 = vmatpush1.msra.mxu0 0.0
    %1594 = vmatprep.subr.mxu0 0.0
    %1595 = vmatpush1.msra.mxu0 0.0
    %1596 = vmatprep.subr.mxu0 0.0
    %1597 = vmatpush1.msra.mxu0 0.0
    %1598 = vmatprep.subr.mxu0 0.0
    %1599 = vmatpush1.msra.mxu0 0.0
    %1600 = vmatprep.subr.mxu0 0.0
    %1601 = vmatpush1.msra.mxu0 0.0
    %1602 = vmatprep.subr.mxu0 0.0
    %1603 = vmatpush1.msra.mxu0 0.0
    %1604 = vmatprep.subr.mxu0 0.0
    %1605 = vmatpush1.msra.mxu0 0.0
    %1606 = vmatprep.subr.mxu0 0.0
    %1607 = vmatpush1.msra.mxu0 0.0
    %1608 = vmatprep.subr.mxu0 0.0
    %1609 = vmatpush1.msra.mxu0 0.0
    %1610 = vmatprep.subr.mxu0 0.0
    %1611 = vmatpush1.msra.mxu0 %v1167
    %1612 = vmatprep.subr.mxu0 0.0
    %1613 = vmatpush1.msra.mxu0 %v1166
    %1614 = vmatprep.subr.mxu0 0.0
    %1615 = vmatpush1.msra.mxu0 %v1165
    %1616 = vmatprep.subr.mxu0 0.0
    %1617 = vmatpush1.msra.mxu0 %v1164
    %1618 = vmatprep.subr.mxu0 0.0
    %1619 = vmatpush2.msra.mxu0 0.0
    %1620 = vmatprep.subr.mxu0 0.0
    %1621 = vmatpush2.msra.mxu0 0.0
    %1622 = vmatprep.subr.mxu0 0.0
    %1623 = vmatpush2.msra.mxu0 0.0
    %1624 = vmatprep.subr.mxu0 0.0
    %1625 = vmatpush2.msra.mxu0 0.0
    %1626 = vmatprep.subr.mxu0 0.0
    %1627 = vmatpush2.msra.mxu0 0.0
    %1628 = vmatprep.subr.mxu0 0.0
    %1629 = vmatpush2.msra.mxu0 0.0
    %1630 = vmatprep.subr.mxu0 0.0
    %1631 = vmatpush2.msra.mxu0 0.0
    %1632 = vmatprep.subr.mxu0 0.0
    %1633 = vmatpush2.msra.mxu0 0.0
    %1634 = vmatprep.subr.mxu0 0.0
    %1635 = vmatpush2.msra.mxu0 0.0
    %1636 = vmatprep.subr.mxu0 0.0
    %1637 = vmatpush2.msra.mxu0 0.0
    %1638 = vmatprep.subr.mxu0 0.0
    %1639 = vmatpush2.msra.mxu0 0.0
    %1640 = vmatprep.subr.mxu0 0.0
    %1641 = vmatpush2.msra.mxu0 0.0
    %1642 = vmatprep.subr.mxu0 0.0
    %1643 = vmatpush2.msra.mxu0 0.0
    %1644 = vmatprep.subr.mxu0 0.0
    %1645 = vmatpush2.msra.mxu0 0.0
    %1646 = vmatprep.subr.mxu0 0.0
    %1647 = vmatpush2.msra.mxu0 0.0
    %1648 = vmatprep.subr.mxu0 0.0
    %1649 = vmatpush2.msra.mxu0 0.0
    %1650 = vmatprep.mubr.f32.mxu0 0.0
    %1651 = vmatmul.mubr.f32.gmra.mxu0 %v1584
    %v1652 = vpop.f32.mrf.mxu0
    %v1653 = vadd.f32 %v1580, %v1652
    %v1654 = vpop.f32.mrf.mxu0
    %1655 = vdwg.mxu0
    %1656 = vrot.lane.b32.xlu0 %v1089, 64
    %v1657 = vpop.permute.xlu0 %1656
    %1658 = vrot.lane.b32.xlu0 %v1091, 64
    %v1659 = vpop.permute.xlu0 %1658
    %v1660 = vsel %vm711, %v1657, 0
    %v1662 = vsel %vm711, %v1659, 0
    %1664 = vmatprep.subr.mxu0 0.0
    %1665 = vmatpush1.xpose.msra.mxu0 0.0
    %1666 = vmatprep.subr.mxu0 0.0
    %1667 = vmatpush1.xpose.msra.mxu0 0.0
    %1668 = vmatprep.subr.mxu0 0.0
    %1669 = vmatpush1.xpose.msra.mxu0 0.0
    %1670 = vmatprep.subr.mxu0 0.0
    %1671 = vmatpush1.xpose.msra.mxu0 0.0
    %1672 = vmatprep.subr.mxu0 0.0
    %1673 = vmatpush1.xpose.msra.mxu0 0.0
    %1674 = vmatprep.subr.mxu0 0.0
    %1675 = vmatpush1.xpose.msra.mxu0 0.0
    %1676 = vmatprep.subr.mxu0 0.0
    %1677 = vmatpush1.xpose.msra.mxu0 0.0
    %1678 = vmatprep.subr.mxu0 0.0
    %1679 = vmatpush1.xpose.msra.mxu0 0.0
    %1680 = vmatprep.subr.mxu0 0.0
    %1681 = vmatpush1.xpose.msra.mxu0 0.0
    %1682 = vmatprep.subr.mxu0 0.0
    %1683 = vmatpush1.xpose.msra.mxu0 0.0
    %1684 = vmatprep.subr.mxu0 0.0
    %1685 = vmatpush1.xpose.msra.mxu0 0.0
    %1686 = vmatprep.subr.mxu0 0.0
    %1687 = vmatpush1.xpose.msra.mxu0 0.0
    %1688 = vmatprep.subr.mxu0 0.0
    %1689 = vmatpush1.xpose.msra.mxu0 0.0
    %1690 = vmatprep.subr.mxu0 0.0
    %1691 = vmatpush1.xpose.msra.mxu0 0.0
    %1692 = vmatprep.subr.mxu0 0.0
    %1693 = vmatpush1.xpose.msra.mxu0 0.0
    %1694 = vmatprep.subr.mxu0 0.0
    %1695 = vmatpush1.xpose.msra.mxu0 %v1662
    %1696 = vmatprep.subr.mxu0 0.0
    %1697 = vmatpush2.xpose.msra.mxu0 0.0
    %1698 = vmatprep.subr.mxu0 0.0
    %1699 = vmatpush2.xpose.msra.mxu0 0.0
    %1700 = vmatprep.subr.mxu0 0.0
    %1701 = vmatpush2.xpose.msra.mxu0 0.0
    %1702 = vmatprep.subr.mxu0 0.0
    %1703 = vmatpush2.xpose.msra.mxu0 0.0
    %1704 = vmatprep.subr.mxu0 0.0
    %1705 = vmatpush2.xpose.msra.mxu0 0.0
    %1706 = vmatprep.subr.mxu0 0.0
    %1707 = vmatpush2.xpose.msra.mxu0 0.0
    %1708 = vmatprep.subr.mxu0 0.0
    %1709 = vmatpush2.xpose.msra.mxu0 0.0
    %1710 = vmatprep.subr.mxu0 0.0
    %1711 = vmatpush2.xpose.msra.mxu0 0.0
    %1712 = vmatprep.subr.mxu0 0.0
    %1713 = vmatpush2.xpose.msra.mxu0 0.0
    %1714 = vmatprep.subr.mxu0 0.0
    %1715 = vmatpush2.xpose.msra.mxu0 0.0
    %1716 = vmatprep.subr.mxu0 0.0
    %1717 = vmatpush2.xpose.msra.mxu0 0.0
    %1718 = vmatprep.subr.mxu0 0.0
    %1719 = vmatpush2.xpose.msra.mxu0 0.0
    %1720 = vmatprep.subr.mxu0 0.0
    %1721 = vmatpush2.xpose.msra.mxu0 0.0
    %1722 = vmatprep.subr.mxu0 0.0
    %1723 = vmatpush2.xpose.msra.mxu0 0.0
    %1724 = vmatprep.subr.mxu0 0.0
    %1725 = vmatpush2.xpose.msra.mxu0 0.0
    %1726 = vmatprep.subr.mxu0 0.0
    %1727 = vmatpush2.xpose.msra.mxu0 0.0
    %1728 = vmatprep.mubr.f32.mxu0 0.0
    %1729 = vmatmul.mubr.f32.gmra.mxu0 %v1660
    %v1730 = vpop.f32.mrf.mxu0
    %v1731 = vadd.f32 0.0, %v1730
    %v1732 = vpop.f32.mrf.mxu0
    %1733 = vdwg.mxu0
    %v1734 = vmul.f32 %v1731, 0.17677669
    %v1735 = vadd.f32 %v1734, %v1163
    %v1736 = vsel %vm522, %v1735, -inf
    %1737 = vmax.xlane.f32.xlu0 %v1736
    %v1738 = vpop.xlane.xlu0 %1737
    %v1739 = vsub.f32 %v1735, %v1738
    %v1740 = vmul.f32 %v1739, 1.442695
    %v1741 = vpow.pop %v1740
    %v1742 = vsel %vm522, %v1741, 0.0
    %1743 = vadd.xlane.f32.xlu0 %v1742
    %v1744 = vpop.xlane.xlu0 %1743
    %v1745 = vrcp.pop %v1744
    %v1746 = vmul.f32 %v1741, %v1745
    %1747 = vrot.lane.b32.xlu0 %v1160, 64
    %v1748 = vpop.permute.xlu0 %1747
    %v1751 = vsel %vm522, %v1746, 0
    %1753 = vmatprep.subr.mxu0 0.0
    %1754 = vmatpush1.msra.mxu0 0.0
    %1755 = vmatprep.subr.mxu0 0.0
    %1756 = vmatpush1.msra.mxu0 0.0
    %1757 = vmatprep.subr.mxu0 0.0
    %1758 = vmatpush1.msra.mxu0 0.0
    %1759 = vmatprep.subr.mxu0 0.0
    %1760 = vmatpush1.msra.mxu0 0.0
    %1761 = vmatprep.subr.mxu0 0.0
    %1762 = vmatpush1.msra.mxu0 0.0
    %1763 = vmatprep.subr.mxu0 0.0
    %1764 = vmatpush1.msra.mxu0 0.0
    %1765 = vmatprep.subr.mxu0 0.0
    %1766 = vmatpush1.msra.mxu0 0.0
    %1767 = vmatprep.subr.mxu0 0.0
    %1768 = vmatpush1.msra.mxu0 0.0
    %1769 = vmatprep.subr.mxu0 0.0
    %1770 = vmatpush1.msra.mxu0 0.0
    %1771 = vmatprep.subr.mxu0 0.0
    %1772 = vmatpush1.msra.mxu0 0.0
    %1773 = vmatprep.subr.mxu0 0.0
    %1774 = vmatpush1.msra.mxu0 0.0
    %1775 = vmatprep.subr.mxu0 0.0
    %1776 = vmatpush1.msra.mxu0 0.0
    %1777 = vmatprep.subr.mxu0 0.0
    %1778 = vmatpush1.msra.mxu0 0.0
    %1779 = vmatprep.subr.mxu0 0.0
    %1780 = vmatpush1.msra.mxu0 0.0
    %1781 = vmatprep.subr.mxu0 0.0
    %1782 = vmatpush1.msra.mxu0 0.0
    %1783 = vmatprep.subr.mxu0 0.0
    %1784 = vmatpush1.msra.mxu0 %v1748
    %1785 = vmatprep.subr.mxu0 0.0
    %1786 = vmatpush2.msra.mxu0 0.0
    %1787 = vmatprep.subr.mxu0 0.0
    %1788 = vmatpush2.msra.mxu0 0.0
    %1789 = vmatprep.subr.mxu0 0.0
    %1790 = vmatpush2.msra.mxu0 0.0
    %1791 = vmatprep.subr.mxu0 0.0
    %1792 = vmatpush2.msra.mxu0 0.0
    %1793 = vmatprep.subr.mxu0 0.0
    %1794 = vmatpush2.msra.mxu0 0.0
    %1795 = vmatprep.subr.mxu0 0.0
    %1796 = vmatpush2.msra.mxu0 0.0
    %1797 = vmatprep.subr.mxu0 0.0
    %1798 = vmatpush2.msra.mxu0 0.0
    %1799 = vmatprep.subr.mxu0 0.0
    %1800 = vmatpush2.msra.mxu0 0.0
    %1801 = vmatprep.subr.mxu0 0.0
    %1802 = vmatpush2.msra.mxu0 0.0
    %1803 = vmatprep.subr.mxu0 0.0
    %1804 = vmatpush2.msra.mxu0 0.0
    %1805 = vmatprep.subr.mxu0 0.0
    %1806 = vmatpush2.msra.mxu0 0.0
    %1807 = vmatprep.subr.mxu0 0.0
    %1808 = vmatpush2.msra.mxu0 0.0
    %1809 = vmatprep.subr.mxu0 0.0
    %1810 = vmatpush2.msra.mxu0 0.0
    %1811 = vmatprep.subr.mxu0 0.0
    %1812 = vmatpush2.msra.mxu0 0.0
    %1813 = vmatprep.subr.mxu0 0.0
    %1814 = vmatpush2.msra.mxu0 0.0
    %1815 = vmatprep.subr.mxu0 0.0
    %1816 = vmatpush2.msra.mxu0 0.0
    %1817 = vmatprep.mubr.f32.mxu0 0.0
    %1818 = vmatmul.mubr.f32.gmra.mxu0 %v1751
    %v1819 = vpop.f32.mrf.mxu0
    %v1820 = vadd.f32 0.0, %v1819
    %v1821 = vpop.f32.mrf.mxu0
    %1822 = vdwg.mxu0
    %v1824 = vsel %vm711, %v1820, 0
    %1826 = vmatprep.subr.mxu0 0.0
    %1827 = vmatpush1.msra.mxu0 0.0
    %1828 = vmatprep.subr.mxu0 0.0
    %1829 = vmatpush1.msra.mxu0 0.0
    %1830 = vmatprep.subr.mxu0 0.0
    %1831 = vmatpush1.msra.mxu0 0.0
    %1832 = vmatprep.subr.mxu0 0.0
    %1833 = vmatpush1.msra.mxu0 0.0
    %1834 = vmatprep.subr.mxu0 0.0
    %1835 = vmatpush1.msra.mxu0 0.0
    %1836 = vmatprep.subr.mxu0 0.0
    %1837 = vmatpush1.msra.mxu0 0.0
    %1838 = vmatprep.subr.mxu0 0.0
    %1839 = vmatpush1.msra.mxu0 0.0
    %1840 = vmatprep.subr.mxu0 0.0
    %1841 = vmatpush1.msra.mxu0 0.0
    %1842 = vmatprep.subr.mxu0 0.0
    %1843 = vmatpush1.msra.mxu0 0.0
    %1844 = vmatprep.subr.mxu0 0.0
    %1845 = vmatpush1.msra.mxu0 0.0
    %1846 = vmatprep.subr.mxu0 0.0
    %1847 = vmatpush1.msra.mxu0 0.0
    %1848 = vmatprep.subr.mxu0 0.0
    %1849 = vmatpush1.msra.mxu0 0.0
    %1850 = vmatprep.subr.mxu0 0.0
    %1851 = vmatpush1.msra.mxu0 %v1175
    %1852 = vmatprep.subr.mxu0 0.0
    %1853 = vmatpush1.msra.mxu0 %v1174
    %1854 = vmatprep.subr.mxu0 0.0
    %1855 = vmatpush1.msra.mxu0 %v1173
    %1856 = vmatprep.subr.mxu0 0.0
    %1857 = vmatpush1.msra.mxu0 %v1172
    %1858 = vmatprep.subr.mxu0 0.0
    %1859 = vmatpush2.msra.mxu0 0.0
    %1860 = vmatprep.subr.mxu0 0.0
    %1861 = vmatpush2.msra.mxu0 0.0
    %1862 = vmatprep.subr.mxu0 0.0
    %1863 = vmatpush2.msra.mxu0 0.0
    %1864 = vmatprep.subr.mxu0 0.0
    %1865 = vmatpush2.msra.mxu0 0.0
    %1866 = vmatprep.subr.mxu0 0.0
    %1867 = vmatpush2.msra.mxu0 0.0
    %1868 = vmatprep.subr.mxu0 0.0
    %1869 = vmatpush2.msra.mxu0 0.0
    %1870 = vmatprep.subr.mxu0 0.0
    %1871 = vmatpush2.msra.mxu0 0.0
    %1872 = vmatprep.subr.mxu0 0.0
    %1873 = vmatpush2.msra.mxu0 0.0
    %1874 = vmatprep.subr.mxu0 0.0
    %1875 = vmatpush2.msra.mxu0 0.0
    %1876 = vmatprep.subr.mxu0 0.0
    %1877 = vmatpush2.msra.mxu0 0.0
    %1878 = vmatprep.subr.mxu0 0.0
    %1879 = vmatpush2.msra.mxu0 0.0
    %1880 = vmatprep.subr.mxu0 0.0
    %1881 = vmatpush2.msra.mxu0 0.0
    %1882 = vmatprep.subr.mxu0 0.0
    %1883 = vmatpush2.msra.mxu0 0.0
    %1884 = vmatprep.subr.mxu0 0.0
    %1885 = vmatpush2.msra.mxu0 0.0
    %1886 = vmatprep.subr.mxu0 0.0
    %1887 = vmatpush2.msra.mxu0 0.0
    %1888 = vmatprep.subr.mxu0 0.0
    %1889 = vmatpush2.msra.mxu0 0.0
    %1890 = vmatprep.mubr.f32.mxu0 0.0
    %1891 = vmatmul.mubr.f32.gmra.mxu0 %v1824
    %v1892 = vpop.f32.mrf.mxu0
    %v1893 = vadd.f32 0.0, %v1892
    %v1894 = vpop.f32.mrf.mxu0
    %1895 = vdwg.mxu0
    %v1896 = vadd.f32 %v1653, %v1893
    %1897 = vrot.lane.b32.xlu0 %v1089, 32
    %v1898 = vpop.permute.xlu0 %1897
    %1899 = vrot.lane.b32.xlu0 %v1091, 32
    %v1900 = vpop.permute.xlu0 %1899
    %v1901 = vsel %vm711, %v1898, 0
    %v1903 = vsel %vm711, %v1900, 0
    %1905 = vmatprep.subr.mxu0 0.0
    %1906 = vmatpush1.xpose.msra.mxu0 0.0
    %1907 = vmatprep.subr.mxu0 0.0
    %1908 = vmatpush1.xpose.msra.mxu0 0.0
    %1909 = vmatprep.subr.mxu0 0.0
    %1910 = vmatpush1.xpose.msra.mxu0 0.0
    %1911 = vmatprep.subr.mxu0 0.0
    %1912 = vmatpush1.xpose.msra.mxu0 0.0
    %1913 = vmatprep.subr.mxu0 0.0
    %1914 = vmatpush1.xpose.msra.mxu0 0.0
    %1915 = vmatprep.subr.mxu0 0.0
    %1916 = vmatpush1.xpose.msra.mxu0 0.0
    %1917 = vmatprep.subr.mxu0 0.0
    %1918 = vmatpush1.xpose.msra.mxu0 0.0
    %1919 = vmatprep.subr.mxu0 0.0
    %1920 = vmatpush1.xpose.msra.mxu0 0.0
    %1921 = vmatprep.subr.mxu0 0.0
    %1922 = vmatpush1.xpose.msra.mxu0 0.0
    %1923 = vmatprep.subr.mxu0 0.0
    %1924 = vmatpush1.xpose.msra.mxu0 0.0
    %1925 = vmatprep.subr.mxu0 0.0
    %1926 = vmatpush1.xpose.msra.mxu0 0.0
    %1927 = vmatprep.subr.mxu0 0.0
    %1928 = vmatpush1.xpose.msra.mxu0 0.0
    %1929 = vmatprep.subr.mxu0 0.0
    %1930 = vmatpush1.xpose.msra.mxu0 0.0
    %1931 = vmatprep.subr.mxu0 0.0
    %1932 = vmatpush1.xpose.msra.mxu0 0.0
    %1933 = vmatprep.subr.mxu0 0.0
    %1934 = vmatpush1.xpose.msra.mxu0 0.0
    %1935 = vmatprep.subr.mxu0 0.0
    %1936 = vmatpush1.xpose.msra.mxu0 %v1903
    %1937 = vmatprep.subr.mxu0 0.0
    %1938 = vmatpush2.xpose.msra.mxu0 0.0
    %1939 = vmatprep.subr.mxu0 0.0
    %1940 = vmatpush2.xpose.msra.mxu0 0.0
    %1941 = vmatprep.subr.mxu0 0.0
    %1942 = vmatpush2.xpose.msra.mxu0 0.0
    %1943 = vmatprep.subr.mxu0 0.0
    %1944 = vmatpush2.xpose.msra.mxu0 0.0
    %1945 = vmatprep.subr.mxu0 0.0
    %1946 = vmatpush2.xpose.msra.mxu0 0.0
    %1947 = vmatprep.subr.mxu0 0.0
    %1948 = vmatpush2.xpose.msra.mxu0 0.0
    %1949 = vmatprep.subr.mxu0 0.0
    %1950 = vmatpush2.xpose.msra.mxu0 0.0
    %1951 = vmatprep.subr.mxu0 0.0
    %1952 = vmatpush2.xpose.msra.mxu0 0.0
    %1953 = vmatprep.subr.mxu0 0.0
    %1954 = vmatpush2.xpose.msra.mxu0 0.0
    %1955 = vmatprep.subr.mxu0 0.0
    %1956 = vmatpush2.xpose.msra.mxu0 0.0
    %1957 = vmatprep.subr.mxu0 0.0
    %1958 = vmatpush2.xpose.msra.mxu0 0.0
    %1959 = vmatprep.subr.mxu0 0.0
    %1960 = vmatpush2.xpose.msra.mxu0 0.0
    %1961 = vmatprep.subr.mxu0 0.0
    %1962 = vmatpush2.xpose.msra.mxu0 0.0
    %1963 = vmatprep.subr.mxu0 0.0
    %1964 = vmatpush2.xpose.msra.mxu0 0.0
    %1965 = vmatprep.subr.mxu0 0.0
    %1966 = vmatpush2.xpose.msra.mxu0 0.0
    %1967 = vmatprep.subr.mxu0 0.0
    %1968 = vmatpush2.xpose.msra.mxu0 0.0
    %1969 = vmatprep.mubr.f32.mxu0 0.0
    %1970 = vmatmul.mubr.f32.gmra.mxu0 %v1901
    %v1971 = vpop.f32.mrf.mxu0
    %v1972 = vadd.f32 0.0, %v1971
    %v1973 = vpop.f32.mrf.mxu0
    %1974 = vdwg.mxu0
    %v1975 = vmul.f32 %v1972, 0.17677669
    %v1976 = vadd.f32 %v1975, %v1163
    %v1977 = vsel %vm522, %v1976, -inf
    %1978 = vmax.xlane.f32.xlu0 %v1977
    %v1979 = vpop.xlane.xlu0 %1978
    %v1980 = vsub.f32 %v1976, %v1979
    %v1981 = vmul.f32 %v1980, 1.442695
    %v1982 = vpow.pop %v1981
    %v1983 = vsel %vm522, %v1982, 0.0
    %1984 = vadd.xlane.f32.xlu0 %v1983
    %v1985 = vpop.xlane.xlu0 %1984
    %v1986 = vrcp.pop %v1985
    %v1987 = vmul.f32 %v1982, %v1986
    %1988 = vrot.lane.b32.xlu0 %v1160, 32
    %v1989 = vpop.permute.xlu0 %1988
    %v1992 = vsel %vm522, %v1987, 0
    %1994 = vmatprep.subr.mxu0 0.0
    %1995 = vmatpush1.msra.mxu0 0.0
    %1996 = vmatprep.subr.mxu0 0.0
    %1997 = vmatpush1.msra.mxu0 0.0
    %1998 = vmatprep.subr.mxu0 0.0
    %1999 = vmatpush1.msra.mxu0 0.0
    %2000 = vmatprep.subr.mxu0 0.0
    %2001 = vmatpush1.msra.mxu0 0.0
    %2002 = vmatprep.subr.mxu0 0.0
    %2003 = vmatpush1.msra.mxu0 0.0
    %2004 = vmatprep.subr.mxu0 0.0
    %2005 = vmatpush1.msra.mxu0 0.0
    %2006 = vmatprep.subr.mxu0 0.0
    %2007 = vmatpush1.msra.mxu0 0.0
    %2008 = vmatprep.subr.mxu0 0.0
    %2009 = vmatpush1.msra.mxu0 0.0
    %2010 = vmatprep.subr.mxu0 0.0
    %2011 = vmatpush1.msra.mxu0 0.0
    %2012 = vmatprep.subr.mxu0 0.0
    %2013 = vmatpush1.msra.mxu0 0.0
    %2014 = vmatprep.subr.mxu0 0.0
    %2015 = vmatpush1.msra.mxu0 0.0
    %2016 = vmatprep.subr.mxu0 0.0
    %2017 = vmatpush1.msra.mxu0 0.0
    %2018 = vmatprep.subr.mxu0 0.0
    %2019 = vmatpush1.msra.mxu0 0.0
    %2020 = vmatprep.subr.mxu0 0.0
    %2021 = vmatpush1.msra.mxu0 0.0
    %2022 = vmatprep.subr.mxu0 0.0
    %2023 = vmatpush1.msra.mxu0 0.0
    %2024 = vmatprep.subr.mxu0 0.0
    %2025 = vmatpush1.msra.mxu0 %v1989
    %2026 = vmatprep.subr.mxu0 0.0
    %2027 = vmatpush2.msra.mxu0 0.0
    %2028 = vmatprep.subr.mxu0 0.0
    %2029 = vmatpush2.msra.mxu0 0.0
    %2030 = vmatprep.subr.mxu0 0.0
    %2031 = vmatpush2.msra.mxu0 0.0
    %2032 = vmatprep.subr.mxu0 0.0
    %2033 = vmatpush2.msra.mxu0 0.0
    %2034 = vmatprep.subr.mxu0 0.0
    %2035 = vmatpush2.msra.mxu0 0.0
    %2036 = vmatprep.subr.mxu0 0.0
    %2037 = vmatpush2.msra.mxu0 0.0
    %2038 = vmatprep.subr.mxu0 0.0
    %2039 = vmatpush2.msra.mxu0 0.0
    %2040 = vmatprep.subr.mxu0 0.0
    %2041 = vmatpush2.msra.mxu0 0.0
    %2042 = vmatprep.subr.mxu0 0.0
    %2043 = vmatpush2.msra.mxu0 0.0
    %2044 = vmatprep.subr.mxu0 0.0
    %2045 = vmatpush2.msra.mxu0 0.0
    %2046 = vmatprep.subr.mxu0 0.0
    %2047 = vmatpush2.msra.mxu0 0.0
    %2048 = vmatprep.subr.mxu0 0.0
    %2049 = vmatpush2.msra.mxu0 0.0
    %2050 = vmatprep.subr.mxu0 0.0
    %2051 = vmatpush2.msra.mxu0 0.0
    %2052 = vmatprep.subr.mxu0 0.0
    %2053 = vmatpush2.msra.mxu0 0.0
    %2054 = vmatprep.subr.mxu0 0.0
    %2055 = vmatpush2.msra.mxu0 0.0
    %2056 = vmatprep.subr.mxu0 0.0
    %2057 = vmatpush2.msra.mxu0 0.0
    %2058 = vmatprep.mubr.f32.mxu0 0.0
    %2059 = vmatmul.mubr.f32.gmra.mxu0 %v1992
    %v2060 = vpop.f32.mrf.mxu0
    %v2061 = vadd.f32 0.0, %v2060
    %v2062 = vpop.f32.mrf.mxu0
    %2063 = vdwg.mxu0
    %v2065 = vsel %vm711, %v2061, 0
    %2067 = vmatprep.subr.mxu0 0.0
    %2068 = vmatpush1.msra.mxu0 0.0
    %2069 = vmatprep.subr.mxu0 0.0
    %2070 = vmatpush1.msra.mxu0 0.0
    %2071 = vmatprep.subr.mxu0 0.0
    %2072 = vmatpush1.msra.mxu0 0.0
    %2073 = vmatprep.subr.mxu0 0.0
    %2074 = vmatpush1.msra.mxu0 0.0
    %2075 = vmatprep.subr.mxu0 0.0
    %2076 = vmatpush1.msra.mxu0 0.0
    %2077 = vmatprep.subr.mxu0 0.0
    %2078 = vmatpush1.msra.mxu0 0.0
    %2079 = vmatprep.subr.mxu0 0.0
    %2080 = vmatpush1.msra.mxu0 0.0
    %2081 = vmatprep.subr.mxu0 0.0
    %2082 = vmatpush1.msra.mxu0 0.0
    %2083 = vmatprep.subr.mxu0 0.0
    %2084 = vmatpush1.msra.mxu0 0.0
    %2085 = vmatprep.subr.mxu0 0.0
    %2086 = vmatpush1.msra.mxu0 0.0
    %2087 = vmatprep.subr.mxu0 0.0
    %2088 = vmatpush1.msra.mxu0 0.0
    %2089 = vmatprep.subr.mxu0 0.0
    %2090 = vmatpush1.msra.mxu0 0.0
    %2091 = vmatprep.subr.mxu0 0.0
    %2092 = vmatpush1.msra.mxu0 %v1179
    %2093 = vmatprep.subr.mxu0 0.0
    %2094 = vmatpush1.msra.mxu0 %v1178
    %2095 = vmatprep.subr.mxu0 0.0
    %2096 = vmatpush1.msra.mxu0 %v1177
    %2097 = vmatprep.subr.mxu0 0.0
    %2098 = vmatpush1.msra.mxu0 %v1176
    %2099 = vmatprep.subr.mxu0 0.0
    %2100 = vmatpush2.msra.mxu0 0.0
    %2101 = vmatprep.subr.mxu0 0.0
    %2102 = vmatpush2.msra.mxu0 0.0
    %2103 = vmatprep.subr.mxu0 0.0
    %2104 = vmatpush2.msra.mxu0 0.0
    %2105 = vmatprep.subr.mxu0 0.0
    %2106 = vmatpush2.msra.mxu0 0.0
    %2107 = vmatprep.subr.mxu0 0.0
    %2108 = vmatpush2.msra.mxu0 0.0
    %2109 = vmatprep.subr.mxu0 0.0
    %2110 = vmatpush2.msra.mxu0 0.0
    %2111 = vmatprep.subr.mxu0 0.0
    %2112 = vmatpush2.msra.mxu0 0.0
    %2113 = vmatprep.subr.mxu0 0.0
    %2114 = vmatpush2.msra.mxu0 0.0
    %2115 = vmatprep.subr.mxu0 0.0
    %2116 = vmatpush2.msra.mxu0 0.0
    %2117 = vmatprep.subr.mxu0 0.0
    %2118 = vmatpush2.msra.mxu0 0.0
    %2119 = vmatprep.subr.mxu0 0.0
    %2120 = vmatpush2.msra.mxu0 0.0
    %2121 = vmatprep.subr.mxu0 0.0
    %2122 = vmatpush2.msra.mxu0 0.0
    %2123 = vmatprep.subr.mxu0 0.0
    %2124 = vmatpush2.msra.mxu0 0.0
    %2125 = vmatprep.subr.mxu0 0.0
    %2126 = vmatpush2.msra.mxu0 0.0
    %2127 = vmatprep.subr.mxu0 0.0
    %2128 = vmatpush2.msra.mxu0 0.0
    %2129 = vmatprep.subr.mxu0 0.0
    %2130 = vmatpush2.msra.mxu0 0.0
    %2131 = vmatprep.mubr.f32.mxu0 0.0
    %2132 = vmatmul.mubr.f32.gmra.mxu0 %v2065
    %v2133 = vpop.f32.mrf.mxu0
    %v2134 = vadd.f32 0.0, %v2133
    %v2135 = vpop.f32.mrf.mxu0
    %2136 = vdwg.mxu0
    %v2137 = vadd.f32 %v1896, %v2134
    %v2138 = vadd.f32 %v991, %v2137
    %v2139 = vld [vmem:[%s39] sm:$0x1]
    %v2141 = vlaneseq
    %v2142 = vshrl.u32 %v2141, 7
    %v2143 = vsub.s32 0, %v2142
    %v2144 = vrot.slane %v2139, %v2143
    %v2146 = vadd.f32 %v2138, %v2144
    %v2147 = vrot.slane %v889, 6
    %v2149 = vrot.slane %v889, 4
    %v2151 = vrot.slane %v889, 2
    %v2153 = vsel %vm353, %v889, %v2147
    %v2154 = vsel %vm259, %v2153, %v2149
    %v2155 = vsel %vm990, %v2154, %v2151
    %v2156 = vld [vmem:[%s43] sm:$0xff]
    %v2157 = vld [vmem:[%s43 + $0x8] sm:$0xff]
    %v2158 = vld [vmem:[%s43 + $0x10] sm:$0xff]
    %v2159 = vld [vmem:[%s43 + $0x18] sm:$0xff]
    %v2160 = vld [vmem:[%s43 + $0x20] sm:$0xff]
    %v2161 = vld [vmem:[%s43 + $0x28] sm:$0xff]
    %v2162 = vld [vmem:[%s43 + $0x30] sm:$0xff]
    %v2163 = vld [vmem:[%s43 + $0x38] sm:$0xff]
    %v2164 = vld [vmem:[%s43 + $0x40] sm:$0xff]
    %v2165 = vld [vmem:[%s43 + $0x48] sm:$0xff]
    %v2166 = vld [vmem:[%s43 + $0x50] sm:$0xff]
    %v2167 = vld [vmem:[%s43 + $0x58] sm:$0xff]
    %v2168 = vld [vmem:[%s45] sm:$0xff]
    %v2169 = vld [vmem:[%s45 + $0x8] sm:$0xff]
    %v2170 = vld [vmem:[%s45 + $0x10] sm:$0xff]
    %v2171 = vld [vmem:[%s45 + $0x18] sm:$0xff]
    %v2172 = vld [vmem:[%s45 + $0x20] sm:$0xff]
    %v2173 = vld [vmem:[%s45 + $0x28] sm:$0xff]
    %v2174 = vld [vmem:[%s45 + $0x30] sm:$0xff]
    %v2175 = vld [vmem:[%s45 + $0x38] sm:$0xff]
    %v2176 = vld [vmem:[%s45 + $0x40] sm:$0xff]
    %v2177 = vld [vmem:[%s45 + $0x48] sm:$0xff]
    %v2178 = vld [vmem:[%s45 + $0x50] sm:$0xff]
    %v2179 = vld [vmem:[%s45 + $0x58] sm:$0xff]
    %v2180 = vld [vmem:[%s45 + $0x60] sm:$0xff]
    %v2181 = vld [vmem:[%s45 + $0x68] sm:$0xff]
    %v2182 = vld [vmem:[%s45 + $0x70] sm:$0xff]
    %v2183 = vld [vmem:[%s45 + $0x78] sm:$0xff]
    %v2185 = vsel %vm711, %v2155, 0
    %2187 = vmatprep.subr.mxu0 0.0
    %2188 = vmatpush1.msra.mxu0 0.0
    %2189 = vmatprep.subr.mxu0 0.0
    %2190 = vmatpush1.msra.mxu0 0.0
    %2191 = vmatprep.subr.mxu0 0.0
    %2192 = vmatpush1.msra.mxu0 0.0
    %2193 = vmatprep.subr.mxu0 0.0
    %2194 = vmatpush1.msra.mxu0 0.0
    %2195 = vmatprep.subr.mxu0 0.0
    %2196 = vmatpush1.msra.mxu0 0.0
    %2197 = vmatprep.subr.mxu0 0.0
    %2198 = vmatpush1.msra.mxu0 0.0
    %2199 = vmatprep.subr.mxu0 0.0
    %2200 = vmatpush1.msra.mxu0 0.0
    %2201 = vmatprep.subr.mxu0 0.0
    %2202 = vmatpush1.msra.mxu0 0.0
    %2203 = vmatprep.subr.mxu0 0.0
    %2204 = vmatpush1.msra.mxu0 0.0
    %2205 = vmatprep.subr.mxu0 0.0
    %2206 = vmatpush1.msra.mxu0 0.0
    %2207 = vmatprep.subr.mxu0 0.0
    %2208 = vmatpush1.msra.mxu0 0.0
    %2209 = vmatprep.subr.mxu0 0.0
    %2210 = vmatpush1.msra.mxu0 0.0
    %2211 = vmatprep.subr.mxu0 %v2181
    %2212 = vmatpush1.msra.mxu0 %v2180
    %2213 = vmatprep.subr.mxu0 %v2177
    %2214 = vmatpush1.msra.mxu0 %v2176
    %2215 = vmatprep.subr.mxu0 %v2173
    %2216 = vmatpush1.msra.mxu0 %v2172
    %2217 = vmatprep.subr.mxu0 %v2169
    %2218 = vmatpush1.msra.mxu0 %v2168
    %2219 = vmatprep.subr.mxu0 0.0
    %2220 = vmatpush2.msra.mxu0 0.0
    %2221 = vmatprep.subr.mxu0 0.0
    %2222 = vmatpush2.msra.mxu0 0.0
    %2223 = vmatprep.subr.mxu0 0.0
    %2224 = vmatpush2.msra.mxu0 0.0
    %2225 = vmatprep.subr.mxu0 0.0
    %2226 = vmatpush2.msra.mxu0 0.0
    %2227 = vmatprep.subr.mxu0 0.0
    %2228 = vmatpush2.msra.mxu0 0.0
    %2229 = vmatprep.subr.mxu0 0.0
    %2230 = vmatpush2.msra.mxu0 0.0
    %2231 = vmatprep.subr.mxu0 0.0
    %2232 = vmatpush2.msra.mxu0 0.0
    %2233 = vmatprep.subr.mxu0 0.0
    %2234 = vmatpush2.msra.mxu0 0.0
    %2235 = vmatprep.subr.mxu0 0.0
    %2236 = vmatpush2.msra.mxu0 0.0
    %2237 = vmatprep.subr.mxu0 0.0
    %2238 = vmatpush2.msra.mxu0 0.0
    %2239 = vmatprep.subr.mxu0 0.0
    %2240 = vmatpush2.msra.mxu0 0.0
    %2241 = vmatprep.subr.mxu0 0.0
    %2242 = vmatpush2.msra.mxu0 0.0
    %2243 = vmatprep.subr.mxu0 0.0
    %2244 = vmatpush2.msra.mxu0 0.0
    %2245 = vmatprep.subr.mxu0 0.0
    %2246 = vmatpush2.msra.mxu0 0.0
    %2247 = vmatprep.subr.mxu0 0.0
    %2248 = vmatpush2.msra.mxu0 0.0
    %2249 = vmatprep.subr.mxu0 0.0
    %2250 = vmatpush2.msra.mxu0 0.0
    %2251 = vmatprep.mubr.f32.mxu0 0.0
    %2252 = vmatmul.mubr.f32.gmra.mxu0 %v2185
    %v2253 = vpop.f32.mrf.mxu0
    %v2254 = vadd.f32 0.0, %v2253
    %v2255 = vpop.f32.mrf.mxu0
    %v2256 = vadd.f32 0.0, %v2255
    %2257 = vdwg.mxu0
    %2258 = vmatprep.subr.mxu0 0.0
    %2259 = vmatpush1.msra.mxu0 0.0
    %2260 = vmatprep.subr.mxu0 0.0
    %2261 = vmatpush1.msra.mxu0 0.0
    %2262 = vmatprep.subr.mxu0 0.0
    %2263 = vmatpush1.msra.mxu0 0.0
    %2264 = vmatprep.subr.mxu0 0.0
    %2265 = vmatpush1.msra.mxu0 0.0
    %2266 = vmatprep.subr.mxu0 0.0
    %2267 = vmatpush1.msra.mxu0 0.0
    %2268 = vmatprep.subr.mxu0 0.0
    %2269 = vmatpush1.msra.mxu0 0.0
    %2270 = vmatprep.subr.mxu0 0.0
    %2271 = vmatpush1.msra.mxu0 0.0
    %2272 = vmatprep.subr.mxu0 0.0
    %2273 = vmatpush1.msra.mxu0 0.0
    %2274 = vmatprep.subr.mxu0 0.0
    %2275 = vmatpush1.msra.mxu0 0.0
    %2276 = vmatprep.subr.mxu0 0.0
    %2277 = vmatpush1.msra.mxu0 0.0
    %2278 = vmatprep.subr.mxu0 0.0
    %2279 = vmatpush1.msra.mxu0 0.0
    %2280 = vmatprep.subr.mxu0 0.0
    %2281 = vmatpush1.msra.mxu0 0.0
    %2282 = vmatprep.subr.mxu0 %v2183
    %2283 = vmatpush1.msra.mxu0 %v2182
    %2284 = vmatprep.subr.mxu0 %v2179
    %2285 = vmatpush1.msra.mxu0 %v2178
    %2286 = vmatprep.subr.mxu0 %v2175
    %2287 = vmatpush1.msra.mxu0 %v2174
    %2288 = vmatprep.subr.mxu0 %v2171
    %2289 = vmatpush1.msra.mxu0 %v2170
    %2290 = vmatprep.subr.mxu0 0.0
    %2291 = vmatpush2.msra.mxu0 0.0
    %2292 = vmatprep.subr.mxu0 0.0
    %2293 = vmatpush2.msra.mxu0 0.0
    %2294 = vmatprep.subr.mxu0 0.0
    %2295 = vmatpush2.msra.mxu0 0.0
    %2296 = vmatprep.subr.mxu0 0.0
    %2297 = vmatpush2.msra.mxu0 0.0
    %2298 = vmatprep.subr.mxu0 0.0
    %2299 = vmatpush2.msra.mxu0 0.0
    %2300 = vmatprep.subr.mxu0 0.0
    %2301 = vmatpush2.msra.mxu0 0.0
    %2302 = vmatprep.subr.mxu0 0.0
    %2303 = vmatpush2.msra.mxu0 0.0
    %2304 = vmatprep.subr.mxu0 0.0
    %2305 = vmatpush2.msra.mxu0 0.0
    %2306 = vmatprep.subr.mxu0 0.0
    %2307 = vmatpush2.msra.mxu0 0.0
    %2308 = vmatprep.subr.mxu0 0.0
    %2309 = vmatpush2.msra.mxu0 0.0
    %2310 = vmatprep.subr.mxu0 0.0
    %2311 = vmatpush2.msra.mxu0 0.0
    %2312 = vmatprep.subr.mxu0 0.0
    %2313 = vmatpush2.msra.mxu0 0.0
    %2314 = vmatprep.subr.mxu0 0.0
    %2315 = vmatpush2.msra.mxu0 0.0
    %2316 = vmatprep.subr.mxu0 0.0
    %2317 = vmatpush2.msra.mxu0 0.0
    %2318 = vmatprep.subr.mxu0 0.0
    %2319 = vmatpush2.msra.mxu0 0.0
    %2320 = vmatprep.subr.mxu0 0.0
    %2321 = vmatpush2.msra.mxu0 0.0
    %2322 = vmatprep.mubr.f32.mxu0 0.0
    %2323 = vmatmul.mubr.f32.gmra.mxu0 %v2185
    %v2324 = vpop.f32.mrf.mxu0
    %v2325 = vadd.f32 0.0, %v2324
    %v2326 = vpop.f32.mrf.mxu0
    %v2327 = vadd.f32 0.0, %v2326
    %2328 = vdwg.mxu0
    %v2330 = vsel %vm1018, %v2146, 0
    %2332 = vmatprep.subr.mxu0 0.0
    %2333 = vmatpush1.msra.mxu0 0.0
    %2334 = vmatprep.subr.mxu0 0.0
    %2335 = vmatpush1.msra.mxu0 0.0
    %2336 = vmatprep.subr.mxu0 0.0
    %2337 = vmatpush1.msra.mxu0 0.0
    %2338 = vmatprep.subr.mxu0 0.0
    %2339 = vmatpush1.msra.mxu0 0.0
    %2340 = vmatprep.subr.mxu0 0.0
    %2341 = vmatpush1.msra.mxu0 0.0
    %2342 = vmatprep.subr.mxu0 0.0
    %2343 = vmatpush1.msra.mxu0 0.0
    %2344 = vmatprep.subr.mxu0 0.0
    %2345 = vmatpush1.msra.mxu0 0.0
    %2346 = vmatprep.subr.mxu0 0.0
    %2347 = vmatpush1.msra.mxu0 0.0
    %2348 = vmatprep.subr.mxu0 0.0
    %2349 = vmatpush1.msra.mxu0 0.0
    %2350 = vmatprep.subr.mxu0 0.0
    %2351 = vmatpush1.msra.mxu0 0.0
    %2352 = vmatprep.subr.mxu0 0.0
    %2353 = vmatpush1.msra.mxu0 0.0
    %2354 = vmatprep.subr.mxu0 0.0
    %2355 = vmatpush1.msra.mxu0 0.0
    %2356 = vmatprep.subr.mxu0 0.0
    %2357 = vmatpush1.msra.mxu0 0.0
    %2358 = vmatprep.subr.mxu0 %v2165
    %2359 = vmatpush1.msra.mxu0 %v2164
    %2360 = vmatprep.subr.mxu0 %v2161
    %2361 = vmatpush1.msra.mxu0 %v2160
    %2362 = vmatprep.subr.mxu0 %v2157
    %2363 = vmatpush1.msra.mxu0 %v2156
    %2364 = vmatprep.subr.mxu0 0.0
    %2365 = vmatpush2.msra.mxu0 0.0
    %2366 = vmatprep.subr.mxu0 0.0
    %2367 = vmatpush2.msra.mxu0 0.0
    %2368 = vmatprep.subr.mxu0 0.0
    %2369 = vmatpush2.msra.mxu0 0.0
    %2370 = vmatprep.subr.mxu0 0.0
    %2371 = vmatpush2.msra.mxu0 0.0
    %2372 = vmatprep.subr.mxu0 0.0
    %2373 = vmatpush2.msra.mxu0 0.0
    %2374 = vmatprep.subr.mxu0 0.0
    %2375 = vmatpush2.msra.mxu0 0.0
    %2376 = vmatprep.subr.mxu0 0.0
    %2377 = vmatpush2.msra.mxu0 0.0
    %2378 = vmatprep.subr.mxu0 0.0
    %2379 = vmatpush2.msra.mxu0 0.0
    %2380 = vmatprep.subr.mxu0 0.0
    %2381 = vmatpush2.msra.mxu0 0.0
    %2382 = vmatprep.subr.mxu0 0.0
    %2383 = vmatpush2.msra.mxu0 0.0
    %2384 = vmatprep.subr.mxu0 0.0
    %2385 = vmatpush2.msra.mxu0 0.0
    %2386 = vmatprep.subr.mxu0 0.0
    %2387 = vmatpush2.msra.mxu0 0.0
    %2388 = vmatprep.subr.mxu0 0.0
    %2389 = vmatpush2.msra.mxu0 0.0
    %2390 = vmatprep.subr.mxu0 0.0
    %2391 = vmatpush2.msra.mxu0 0.0
    %2392 = vmatprep.subr.mxu0 0.0
    %2393 = vmatpush2.msra.mxu0 0.0
    %2394 = vmatprep.subr.mxu0 0.0
    %2395 = vmatpush2.msra.mxu0 0.0
    %2396 = vmatprep.mubr.f32.mxu0 0.0
    %2397 = vmatmul.mubr.f32.gmra.mxu0 %v2330
    %v2398 = vpop.f32.mrf.mxu0
    %v2399 = vadd.f32 %v2254, %v2398
    %v2400 = vpop.f32.mrf.mxu0
    %v2401 = vadd.f32 %v2256, %v2400
    %2402 = vdwg.mxu0
    %2403 = vmatprep.subr.mxu0 0.0
    %2404 = vmatpush1.msra.mxu0 0.0
    %2405 = vmatprep.subr.mxu0 0.0
    %2406 = vmatpush1.msra.mxu0 0.0
    %2407 = vmatprep.subr.mxu0 0.0
    %2408 = vmatpush1.msra.mxu0 0.0
    %2409 = vmatprep.subr.mxu0 0.0
    %2410 = vmatpush1.msra.mxu0 0.0
    %2411 = vmatprep.subr.mxu0 0.0
    %2412 = vmatpush1.msra.mxu0 0.0
    %2413 = vmatprep.subr.mxu0 0.0
    %2414 = vmatpush1.msra.mxu0 0.0
    %2415 = vmatprep.subr.mxu0 0.0
    %2416 = vmatpush1.msra.mxu0 0.0
    %2417 = vmatprep.subr.mxu0 0.0
    %2418 = vmatpush1.msra.mxu0 0.0
    %2419 = vmatprep.subr.mxu0 0.0
    %2420 = vmatpush1.msra.mxu0 0.0
    %2421 = vmatprep.subr.mxu0 0.0
    %2422 = vmatpush1.msra.mxu0 0.0
    %2423 = vmatprep.subr.mxu0 0.0
    %2424 = vmatpush1.msra.mxu0 0.0
    %2425 = vmatprep.subr.mxu0 0.0
    %2426 = vmatpush1.msra.mxu0 0.0
    %2427 = vmatprep.subr.mxu0 0.0
    %2428 = vmatpush1.msra.mxu0 0.0
    %2429 = vmatprep.subr.mxu0 %v2167
    %2430 = vmatpush1.msra.mxu0 %v2166
    %2431 = vmatprep.subr.mxu0 %v2163
    %2432 = vmatpush1.msra.mxu0 %v2162
    %2433 = vmatprep.subr.mxu0 %v2159
    %2434 = vmatpush1.msra.mxu0 %v2158
    %2435 = vmatprep.subr.mxu0 0.0
    %2436 = vmatpush2.msra.mxu0 0.0
    %2437 = vmatprep.subr.mxu0 0.0
    %2438 = vmatpush2.msra.mxu0 0.0
    %2439 = vmatprep.subr.mxu0 0.0
    %2440 = vmatpush2.msra.mxu0 0.0
    %2441 = vmatprep.subr.mxu0 0.0
    %2442 = vmatpush2.msra.mxu0 0.0
    %2443 = vmatprep.subr.mxu0 0.0
    %2444 = vmatpush2.msra.mxu0 0.0
    %2445 = vmatprep.subr.mxu0 0.0
    %2446 = vmatpush2.msra.mxu0 0.0
    %2447 = vmatprep.subr.mxu0 0.0
    %2448 = vmatpush2.msra.mxu0 0.0
    %2449 = vmatprep.subr.mxu0 0.0
    %2450 = vmatpush2.msra.mxu0 0.0
    %2451 = vmatprep.subr.mxu0 0.0
    %2452 = vmatpush2.msra.mxu0 0.0
    %2453 = vmatprep.subr.mxu0 0.0
    %2454 = vmatpush2.msra.mxu0 0.0
    %2455 = vmatprep.subr.mxu0 0.0
    %2456 = vmatpush2.msra.mxu0 0.0
    %2457 = vmatprep.subr.mxu0 0.0
    %2458 = vmatpush2.msra.mxu0 0.0
    %2459 = vmatprep.subr.mxu0 0.0
    %2460 = vmatpush2.msra.mxu0 0.0
    %2461 = vmatprep.subr.mxu0 0.0
    %2462 = vmatpush2.msra.mxu0 0.0
    %2463 = vmatprep.subr.mxu0 0.0
    %2464 = vmatpush2.msra.mxu0 0.0
    %2465 = vmatprep.subr.mxu0 0.0
    %2466 = vmatpush2.msra.mxu0 0.0
    %2467 = vmatprep.mubr.f32.mxu0 0.0
    %2468 = vmatmul.mubr.f32.gmra.mxu0 %v2330
    %v2469 = vpop.f32.mrf.mxu0
    %v2470 = vadd.f32 %v2325, %v2469
    %v2471 = vpop.f32.mrf.mxu0
    %v2472 = vadd.f32 %v2327, %v2471
    %2473 = vdwg.mxu0
    %v2474 = vld [vmem:[%s47] sm:$0xf]
    %v2476 = vlaneseq
    %v2477 = vshrl.u32 %v2476, 7
    %v2478 = vsub.s32 0, %v2477
    %v2479 = vrot.slane %v2474, %v2478
    %v2480 = vlaneseq
    %v2481 = vshrl.u32 %v2480, 7
    %v2482 = vsub.s32 1, %v2481
    %v2483 = vrot.slane %v2474, %v2482
    %v2484 = vlaneseq
    %v2485 = vshrl.u32 %v2484, 7
    %v2486 = vsub.s32 2, %v2485
    %v2487 = vrot.slane %v2474, %v2486
    %v2488 = vlaneseq
    %v2489 = vshrl.u32 %v2488, 7
    %v2490 = vsub.s32 3, %v2489
    %v2491 = vrot.slane %v2474, %v2490
    %v2496 = vadd.f32 %v2399, %v2479
    %v2497 = vadd.f32 %v2401, %v2483
    %v2498 = vadd.f32 %v2470, %v2487
    %v2499 = vadd.f32 %v2472, %v2491
    %vm2500 = vcmp.ge.f32.partialorder %v2496, 0.0
    %vm2501 = vcmp.ge.f32.partialorder %v2497, 0.0
    %vm2502 = vcmp.ge.f32.partialorder %v2498, 0.0
    %vm2503 = vcmp.ge.f32.partialorder %v2499, 0.0
    %v2504 = vmul.f32 %v2496, 0.01
    %v2505 = vmul.f32 %v2497, 0.01
    %v2506 = vmul.f32 %v2498, 0.01
    %v2507 = vmul.f32 %v2499, 0.01
    %v2508 = vsel %vm2500, %v2496, %v2504
    %v2509 = vsel %vm2501, %v2497, %v2505
    %v2510 = vsel %vm2502, %v2498, %v2506
    %v2511 = vsel %vm2503, %v2499, %v2507
    %v2512 = vld [vmem:[%s49] sm:$0xff]
    %v2513 = vld [vmem:[%s49 + $0x8] sm:$0xff]
    %v2514 = vld [vmem:[%s49 + $0x10] sm:$0xff]
    %v2515 = vld [vmem:[%s49 + $0x18] sm:$0xff]
    %v2516 = vld [vmem:[%s49 + $0x20] sm:$0xff]
    %v2517 = vld [vmem:[%s49 + $0x28] sm:$0xff]
    %v2518 = vld [vmem:[%s49 + $0x30] sm:$0xff]
    %v2519 = vld [vmem:[%s49 + $0x38] sm:$0xff]
    %v2520 = vld [vmem:[%s49 + $0x40] sm:$0xff]
    %v2521 = vld [vmem:[%s49 + $0x48] sm:$0xff]
    %v2522 = vld [vmem:[%s49 + $0x50] sm:$0xff]
    %v2523 = vld [vmem:[%s49 + $0x58] sm:$0xff]
    %v2524 = vld [vmem:[%s49 + $0x60] sm:$0xff]
    %v2525 = vld [vmem:[%s49 + $0x68] sm:$0xff]
    %v2526 = vld [vmem:[%s49 + $0x70] sm:$0xff]
    %v2527 = vld [vmem:[%s49 + $0x78] sm:$0xff]
    %v2528 = vld [vmem:[%s49 + $0x80] sm:$0xff]
    %v2529 = vld [vmem:[%s49 + $0x88] sm:$0xff]
    %v2530 = vld [vmem:[%s49 + $0x90] sm:$0xff]
    %v2531 = vld [vmem:[%s49 + $0x98] sm:$0xff]
    %v2532 = vld [vmem:[%s49 + $0xa0] sm:$0xff]
    %v2533 = vld [vmem:[%s49 + $0xa8] sm:$0xff]
    %v2534 = vld [vmem:[%s49 + $0xb0] sm:$0xff]
    %v2535 = vld [vmem:[%s49 + $0xb8] sm:$0xff]
    %v2536 = vld [vmem:[%s49 + $0xc0] sm:$0xff]
    %v2537 = vld [vmem:[%s49 + $0xc8] sm:$0xff]
    %v2538 = vld [vmem:[%s49 + $0xd0] sm:$0xff]
    %v2539 = vld [vmem:[%s49 + $0xd8] sm:$0xff]
    %v2540 = vld [vmem:[%s49 + $0xe0] sm:$0xff]
    %v2541 = vld [vmem:[%s49 + $0xe8] sm:$0xff]
    %v2542 = vld [vmem:[%s49 + $0xf0] sm:$0xff]
    %v2543 = vld [vmem:[%s49 + $0xf8] sm:$0xff]
    %v2544 = vld [vmem:[%s49 + $0x100] sm:$0xff]
    %v2545 = vld [vmem:[%s49 + $0x108] sm:$0xff]
    %v2546 = vld [vmem:[%s49 + $0x110] sm:$0xff]
    %v2547 = vld [vmem:[%s49 + $0x118] sm:$0xff]
    %v2548 = vld [vmem:[%s49 + $0x120] sm:$0xff]
    %v2549 = vld [vmem:[%s49 + $0x128] sm:$0xff]
    %v2550 = vld [vmem:[%s49 + $0x130] sm:$0xff]
    %v2551 = vld [vmem:[%s49 + $0x138] sm:$0xff]
    %v2552 = vld [vmem:[%s49 + $0x140] sm:$0xff]
    %v2553 = vld [vmem:[%s49 + $0x148] sm:$0xff]
    %v2554 = vld [vmem:[%s49 + $0x150] sm:$0xff]
    %v2555 = vld [vmem:[%s49 + $0x158] sm:$0xff]
    %v2556 = vld [vmem:[%s49 + $0x160] sm:$0xff]
    %v2557 = vld [vmem:[%s49 + $0x168] sm:$0xff]
    %v2558 = vld [vmem:[%s49 + $0x170] sm:$0xff]
    %v2559 = vld [vmem:[%s49 + $0x178] sm:$0xff]
    %v2560 = vld [vmem:[%s49 + $0x180] sm:$0xff]
    %v2561 = vld [vmem:[%s49 + $0x188] sm:$0xff]
    %v2562 = vld [vmem:[%s49 + $0x190] sm:$0xff]
    %v2563 = vld [vmem:[%s49 + $0x198] sm:$0xff]
    %v2564 = vld [vmem:[%s49 + $0x1a0] sm:$0xff]
    %v2565 = vld [vmem:[%s49 + $0x1a8] sm:$0xff]
    %v2566 = vld [vmem:[%s49 + $0x1b0] sm:$0xff]
    %v2567 = vld [vmem:[%s49 + $0x1b8] sm:$0xff]
    %v2568 = vld [vmem:[%s49 + $0x1c0] sm:$0xff]
    %v2569 = vld [vmem:[%s49 + $0x1c8] sm:$0xff]
    %v2570 = vld [vmem:[%s49 + $0x1d0] sm:$0xff]
    %v2571 = vld [vmem:[%s49 + $0x1d8] sm:$0xff]
    %v2572 = vld [vmem:[%s49 + $0x1e0] sm:$0xff]
    %v2573 = vld [vmem:[%s49 + $0x1e8] sm:$0xff]
    %v2574 = vld [vmem:[%s49 + $0x1f0] sm:$0xff]
    %v2575 = vld [vmem:[%s49 + $0x1f8] sm:$0xff]
    %v2576 = vld [vmem:[%s51] sm:$0x1]
    %v2578 = vlaneseq
    %v2579 = vshrl.u32 %v2578, 7
    %v2580 = vsub.s32 0, %v2579
    %v2581 = vrot.slane %v2576, %v2580
    %2583 = vmatprep.subr.mxu0 0.0
    %2584 = vmatpush1.msra.mxu0 %v2527
    %2585 = vmatprep.subr.mxu0 0.0
    %2586 = vmatpush1.msra.mxu0 %v2526
    %2587 = vmatprep.subr.mxu0 0.0
    %2588 = vmatpush1.msra.mxu0 %v2525
    %2589 = vmatprep.subr.mxu0 0.0
    %2590 = vmatpush1.msra.mxu0 %v2524
    %2591 = vmatprep.subr.mxu0 0.0
    %2592 = vmatpush1.msra.mxu0 %v2523
    %2593 = vmatprep.subr.mxu0 0.0
    %2594 = vmatpush1.msra.mxu0 %v2522
    %2595 = vmatprep.subr.mxu0 0.0
    %2596 = vmatpush1.msra.mxu0 %v2521
    %2597 = vmatprep.subr.mxu0 0.0
    %2598 = vmatpush1.msra.mxu0 %v2520
    %2599 = vmatprep.subr.mxu0 0.0
    %2600 = vmatpush1.msra.mxu0 %v2519
    %2601 = vmatprep.subr.mxu0 0.0
    %2602 = vmatpush1.msra.mxu0 %v2518
    %2603 = vmatprep.subr.mxu0 0.0
    %2604 = vmatpush1.msra.mxu0 %v2517
    %2605 = vmatprep.subr.mxu0 0.0
    %2606 = vmatpush1.msra.mxu0 %v2516
    %2607 = vmatprep.subr.mxu0 0.0
    %2608 = vmatpush1.msra.mxu0 %v2515
    %2609 = vmatprep.subr.mxu0 0.0
    %2610 = vmatpush1.msra.mxu0 %v2514
    %2611 = vmatprep.subr.mxu0 0.0
    %2612 = vmatpush1.msra.mxu0 %v2513
    %2613 = vmatprep.subr.mxu0 0.0
    %2614 = vmatpush1.msra.mxu0 %v2512
    %2615 = vmatprep.subr.mxu0 0.0
    %2616 = vmatpush2.msra.mxu0 %v2543
    %2617 = vmatprep.subr.mxu0 0.0
    %2618 = vmatpush2.msra.mxu0 %v2542
    %2619 = vmatprep.subr.mxu0 0.0
    %2620 = vmatpush2.msra.mxu0 %v2541
    %2621 = vmatprep.subr.mxu0 0.0
    %2622 = vmatpush2.msra.mxu0 %v2540
    %2623 = vmatprep.subr.mxu0 0.0
    %2624 = vmatpush2.msra.mxu0 %v2539
    %2625 = vmatprep.subr.mxu0 0.0
    %2626 = vmatpush2.msra.mxu0 %v2538
    %2627 = vmatprep.subr.mxu0 0.0
    %2628 = vmatpush2.msra.mxu0 %v2537
    %2629 = vmatprep.subr.mxu0 0.0
    %2630 = vmatpush2.msra.mxu0 %v2536
    %2631 = vmatprep.subr.mxu0 0.0
    %2632 = vmatpush2.msra.mxu0 %v2535
    %2633 = vmatprep.subr.mxu0 0.0
    %2634 = vmatpush2.msra.mxu0 %v2534
    %2635 = vmatprep.subr.mxu0 0.0
    %2636 = vmatpush2.msra.mxu0 %v2533
    %2637 = vmatprep.subr.mxu0 0.0
    %2638 = vmatpush2.msra.mxu0 %v2532
    %2639 = vmatprep.subr.mxu0 0.0
    %2640 = vmatpush2.msra.mxu0 %v2531
    %2641 = vmatprep.subr.mxu0 0.0
    %2642 = vmatpush2.msra.mxu0 %v2530
    %2643 = vmatprep.subr.mxu0 0.0
    %2644 = vmatpush2.msra.mxu0 %v2529
    %2645 = vmatprep.subr.mxu0 0.0
    %2646 = vmatpush2.msra.mxu0 %v2528
    %2647 = vmatprep.mubr.f32.mxu0 %v2509
    %2648 = vmatmul.mubr.f32.gmra.mxu0 %v2508
    %v2649 = vpop.f32.mrf.mxu0
    %v2650 = vadd.f32 %v2581, %v2649
    %v2651 = vpop.f32.mrf.mxu0
    %2652 = vdwg.mxu0
    %2653 = vmatprep.subr.mxu0 0.0
    %2654 = vmatpush1.msra.mxu0 %v2559
    %2655 = vmatprep.subr.mxu0 0.0
    %2656 = vmatpush1.msra.mxu0 %v2558
    %2657 = vmatprep.subr.mxu0 0.0
    %2658 = vmatpush1.msra.mxu0 %v2557
    %2659 = vmatprep.subr.mxu0 0.0
    %2660 = vmatpush1.msra.mxu0 %v2556
    %2661 = vmatprep.subr.mxu0 0.0
    %2662 = vmatpush1.msra.mxu0 %v2555
    %2663 = vmatprep.subr.mxu0 0.0
    %2664 = vmatpush1.msra.mxu0 %v2554
    %2665 = vmatprep.subr.mxu0 0.0
    %2666 = vmatpush1.msra.mxu0 %v2553
    %2667 = vmatprep.subr.mxu0 0.0
    %2668 = vmatpush1.msra.mxu0 %v2552
    %2669 = vmatprep.subr.mxu0 0.0
    %2670 = vmatpush1.msra.mxu0 %v2551
    %2671 = vmatprep.subr.mxu0 0.0
    %2672 = vmatpush1.msra.mxu0 %v2550
    %2673 = vmatprep.subr.mxu0 0.0
    %2674 = vmatpush1.msra.mxu0 %v2549
    %2675 = vmatprep.subr.mxu0 0.0
    %2676 = vmatpush1.msra.mxu0 %v2548
    %2677 = vmatprep.subr.mxu0 0.0
    %2678 = vmatpush1.msra.mxu0 %v2547
    %2679 = vmatprep.subr.mxu0 0.0
    %2680 = vmatpush1.msra.mxu0 %v2546
    %2681 = vmatprep.subr.mxu0 0.0
    %2682 = vmatpush1.msra.mxu0 %v2545
    %2683 = vmatprep.subr.mxu0 0.0
    %2684 = vmatpush1.msra.mxu0 %v2544
    %2685 = vmatprep.subr.mxu0 0.0
    %2686 = vmatpush2.msra.mxu0 %v2575
    %2687 = vmatprep.subr.mxu0 0.0
    %2688 = vmatpush2.msra.mxu0 %v2574
    %2689 = vmatprep.subr.mxu0 0.0
    %2690 = vmatpush2.msra.mxu0 %v2573
    %2691 = vmatprep.subr.mxu0 0.0
    %2692 = vmatpush2.msra.mxu0 %v2572
    %2693 = vmatprep.subr.mxu0 0.0
    %2694 = vmatpush2.msra.mxu0 %v2571
    %2695 = vmatprep.subr.mxu0 0.0
    %2696 = vmatpush2.msra.mxu0 %v2570
    %2697 = vmatprep.subr.mxu0 0.0
    %2698 = vmatpush2.msra.mxu0 %v2569
    %2699 = vmatprep.subr.mxu0 0.0
    %2700 = vmatpush2.msra.mxu0 %v2568
    %2701 = vmatprep.subr.mxu0 0.0
    %2702 = vmatpush2.msra.mxu0 %v2567
    %2703 = vmatprep.subr.mxu0 0.0
    %2704 = vmatpush2.msra.mxu0 %v2566
    %2705 = vmatprep.subr.mxu0 0.0
    %2706 = vmatpush2.msra.mxu0 %v2565
    %2707 = vmatprep.subr.mxu0 0.0
    %2708 = vmatpush2.msra.mxu0 %v2564
    %2709 = vmatprep.subr.mxu0 0.0
    %2710 = vmatpush2.msra.mxu0 %v2563
    %2711 = vmatprep.subr.mxu0 0.0
    %2712 = vmatpush2.msra.mxu0 %v2562
    %2713 = vmatprep.subr.mxu0 0.0
    %2714 = vmatpush2.msra.mxu0 %v2561
    %2715 = vmatprep.subr.mxu0 0.0
    %2716 = vmatpush2.msra.mxu0 %v2560
    %2717 = vmatprep.mubr.f32.mxu0 %v2511
    %2718 = vmatmul.mubr.f32.gmra.mxu0 %v2510
    %v2719 = vpop.f32.mrf.mxu0
    %v2720 = vadd.f32 %v2650, %v2719
    %v2721 = vpop.f32.mrf.mxu0
    %2722 = vdwg.mxu0
    %vm2723 = vcmp.ge.f32.partialorder %v2720, 0.0
    %v2724 = vmul.f32 %v2720, 0.01
    %v2725 = vsel %vm2723, %v2720, %v2724
    %v2726 = vld [vmem:[%s53] sm:$0xff]
    %v2727 = vld [vmem:[%s53 + $0x8] sm:$0xff]
    %v2728 = vld [vmem:[%s53 + $0x10] sm:$0xff]
    %v2729 = vld [vmem:[%s53 + $0x18] sm:$0xff]
    %v2730 = vld [vmem:[%s53 + $0x20] sm:$0xff]
    %v2731 = vld [vmem:[%s53 + $0x28] sm:$0xff]
    %v2732 = vld [vmem:[%s53 + $0x30] sm:$0xff]
    %v2733 = vld [vmem:[%s53 + $0x38] sm:$0xff]
    %v2734 = vld [vmem:[%s55] sm:$0xff]
    %v2735 = vld [vmem:[%s55 + $0x8] sm:$0xff]
    %v2736 = vld [vmem:[%s55 + $0x10] sm:$0xff]
    %v2737 = vld [vmem:[%s55 + $0x18] sm:$0xff]
    %v2738 = vld [vmem:[%s55 + $0x20] sm:$0xff]
    %v2739 = vld [vmem:[%s55 + $0x28] sm:$0xff]
    %v2740 = vld [vmem:[%s55 + $0x30] sm:$0xff]
    %v2741 = vld [vmem:[%s55 + $0x38] sm:$0xff]
    %2743 = vset.pattern.permute.xlu0 0
    %2744 = vperm.xlu0 %2743, %v2734
    %v2745 = vpop.permute.xlu0 %2744
    %2748 = vset.pattern.permute.xlu0 0
    %2749 = vperm.xlu0 %2748, %v2735
    %v2750 = vpop.permute.xlu0 %2749
    %2753 = vset.pattern.permute.xlu0 0
    %2754 = vperm.xlu0 %2753, %v2736
    %v2755 = vpop.permute.xlu0 %2754
    %2758 = vset.pattern.permute.xlu0 0
    %2759 = vperm.xlu0 %2758, %v2737
    %v2760 = vpop.permute.xlu0 %2759
    %2763 = vset.pattern.permute.xlu0 0
    %2764 = vperm.xlu0 %2763, %v2738
    %v2765 = vpop.permute.xlu0 %2764
    %2768 = vset.pattern.permute.xlu0 0
    %2769 = vperm.xlu0 %2768, %v2739
    %v2770 = vpop.permute.xlu0 %2769
    %2773 = vset.pattern.permute.xlu0 0
    %2774 = vperm.xlu0 %2773, %v2740
    %v2775 = vpop.permute.xlu0 %2774
    %2778 = vset.pattern.permute.xlu0 0
    %2779 = vperm.xlu0 %2778, %v2741
    %v2780 = vpop.permute.xlu0 %2779
    %v2783 = vsel %vm522, %v2726, 0
    %v2786 = vsel %vm522, %v2727, 0
    %v2789 = vsel %vm522, %v2728, 0
    %v2792 = vsel %vm522, %v2729, 0
    %v2795 = vsel %vm522, %v2730, 0
    %v2798 = vsel %vm522, %v2731, 0
    %v2801 = vsel %vm522, %v2732, 0
    %v2804 = vsel %vm522, %v2733, 0
    %2806 = vmatprep.subr.mxu0 0.0
    %2807 = vmatpush1.msra.mxu0 0.0
    %2808 = vmatprep.subr.mxu0 0.0
    %2809 = vmatpush1.msra.mxu0 0.0
    %2810 = vmatprep.subr.mxu0 0.0
    %2811 = vmatpush1.msra.mxu0 0.0
    %2812 = vmatprep.subr.mxu0 0.0
    %2813 = vmatpush1.msra.mxu0 0.0
    %2814 = vmatprep.subr.mxu0 0.0
    %2815 = vmatpush1.msra.mxu0 0.0
    %2816 = vmatprep.subr.mxu0 0.0
    %2817 = vmatpush1.msra.mxu0 0.0
    %2818 = vmatprep.subr.mxu0 0.0
    %2819 = vmatpush1.msra.mxu0 0.0
    %2820 = vmatprep.subr.mxu0 0.0
    %2821 = vmatpush1.msra.mxu0 0.0
    %2822 = vmatprep.subr.mxu0 0.0
    %2823 = vmatpush1.msra.mxu0 0.0
    %2824 = vmatprep.subr.mxu0 0.0
    %2825 = vmatpush1.msra.mxu0 0.0
    %2826 = vmatprep.subr.mxu0 0.0
    %2827 = vmatpush1.msra.mxu0 0.0
    %2828 = vmatprep.subr.mxu0 0.0
    %2829 = vmatpush1.msra.mxu0 0.0
    %2830 = vmatprep.subr.mxu0 0.0
    %2831 = vmatpush1.msra.mxu0 0.0
    %2832 = vmatprep.subr.mxu0 0.0
    %2833 = vmatpush1.msra.mxu0 0.0
    %2834 = vmatprep.subr.mxu0 0.0
    %2835 = vmatpush1.msra.mxu0 0.0
    %2836 = vmatprep.subr.mxu0 0.0
    %2837 = vmatpush1.msra.mxu0 %v2725
    %2838 = vmatprep.subr.mxu0 0.0
    %2839 = vmatpush2.msra.mxu0 0.0
    %2840 = vmatprep.subr.mxu0 0.0
    %2841 = vmatpush2.msra.mxu0 0.0
    %2842 = vmatprep.subr.mxu0 0.0
    %2843 = vmatpush2.msra.mxu0 0.0
    %2844 = vmatprep.subr.mxu0 0.0
    %2845 = vmatpush2.msra.mxu0 0.0
    %2846 = vmatprep.subr.mxu0 0.0
    %2847 = vmatpush2.msra.mxu0 0.0
    %2848 = vmatprep.subr.mxu0 0.0
    %2849 = vmatpush2.msra.mxu0 0.0
    %2850 = vmatprep.subr.mxu0 0.0
    %2851 = vmatpush2.msra.mxu0 0.0
    %2852 = vmatprep.subr.mxu0 0.0
    %2853 = vmatpush2.msra.mxu0 0.0
    %2854 = vmatprep.subr.mxu0 0.0
    %2855 = vmatpush2.msra.mxu0 0.0
    %2856 = vmatprep.subr.mxu0 0.0
    %2857 = vmatpush2.msra.mxu0 0.0
    %2858 = vmatprep.subr.mxu0 0.0
    %2859 = vmatpush2.msra.mxu0 0.0
    %2860 = vmatprep.subr.mxu0 0.0
    %2861 = vmatpush2.msra.mxu0 0.0
    %2862 = vmatprep.subr.mxu0 0.0
    %2863 = vmatpush2.msra.mxu0 0.0
    %2864 = vmatprep.subr.mxu0 0.0
    %2865 = vmatpush2.msra.mxu0 0.0
    %2866 = vmatprep.subr.mxu0 0.0
    %2867 = vmatpush2.msra.mxu0 0.0
    %2868 = vmatprep.subr.mxu0 0.0
    %2869 = vmatpush2.msra.mxu0 0.0
    %2870 = vmatprep.mubr.f32.mxu0 0.0
    %2871 = vmatmul.mubr.f32.gmra.mxu0 %v2783
    %v2872 = vpop.f32.mrf.mxu0
    %v2873 = vadd.f32 %v2745, %v2872
    %v2874 = vpop.f32.mrf.mxu0
    %2875 = vmatprep.mubr.f32.mxu0 0.0
    %2876 = vmatmul.mubr.f32.gmra.mxu0 %v2786
    %v2877 = vpop.f32.mrf.mxu0
    %v2878 = vadd.f32 %v2750, %v2877
    %v2879 = vpop.f32.mrf.mxu0
    %2880 = vmatprep.mubr.f32.mxu0 0.0
    %2881 = vmatmul.mubr.f32.gmra.mxu0 %v2789
    %v2882 = vpop.f32.mrf.mxu0
    %v2883 = vadd.f32 %v2755, %v2882
    %v2884 = vpop.f32.mrf.mxu0
    %2885 = vmatprep.mubr.f32.mxu0 0.0
    %2886 = vmatmul.mubr.f32.gmra.mxu0 %v2792
    %v2887 = vpop.f32.mrf.mxu0
    %v2888 = vadd.f32 %v2760, %v2887
    %v2889 = vpop.f32.mrf.mxu0
    %2890 = vmatprep.mubr.f32.mxu0 0.0
    %2891 = vmatmul.mubr.f32.gmra.mxu0 %v2795
    %v2892 = vpop.f32.mrf.mxu0
    %v2893 = vadd.f32 %v2765, %v2892
    %v2894 = vpop.f32.mrf.mxu0
    %2895 = vmatprep.mubr.f32.mxu0 0.0
    %2896 = vmatmul.mubr.f32.gmra.mxu0 %v2798
    %v2897 = vpop.f32.mrf.mxu0
    %v2898 = vadd.f32 %v2770, %v2897
    %v2899 = vpop.f32.mrf.mxu0
    %2900 = vmatprep.mubr.f32.mxu0 0.0
    %2901 = vmatmul.mubr.f32.gmra.mxu0 %v2801
    %v2902 = vpop.f32.mrf.mxu0
    %v2903 = vadd.f32 %v2775, %v2902
    %v2904 = vpop.f32.mrf.mxu0
    %2905 = vmatprep.mubr.f32.mxu0 0.0
    %2906 = vmatmul.mubr.f32.gmra.mxu0 %v2804
    %v2907 = vpop.f32.mrf.mxu0
    %v2908 = vadd.f32 %v2780, %v2907
    %v2909 = vpop.f32.mrf.mxu0
    %2910 = vdwg.mxu0
    %vm2911 = vcmp.ge.f32.partialorder %v2873, 0.0
    %vm2912 = vcmp.ge.f32.partialorder %v2878, 0.0
    %vm2913 = vcmp.ge.f32.partialorder %v2883, 0.0
    %vm2914 = vcmp.ge.f32.partialorder %v2888, 0.0
    %vm2915 = vcmp.ge.f32.partialorder %v2893, 0.0
    %vm2916 = vcmp.ge.f32.partialorder %v2898, 0.0
    %vm2917 = vcmp.ge.f32.partialorder %v2903, 0.0
    %vm2918 = vcmp.ge.f32.partialorder %v2908, 0.0
    %v2919 = vmul.f32 %v2873, 0.01
    %v2920 = vmul.f32 %v2878, 0.01
    %v2921 = vmul.f32 %v2883, 0.01
    %v2922 = vmul.f32 %v2888, 0.01
    %v2923 = vmul.f32 %v2893, 0.01
    %v2924 = vmul.f32 %v2898, 0.01
    %v2925 = vmul.f32 %v2903, 0.01
    %v2926 = vmul.f32 %v2908, 0.01
    %v2927 = vsel %vm2911, %v2873, %v2919
    %v2928 = vsel %vm2912, %v2878, %v2920
    %v2929 = vsel %vm2913, %v2883, %v2921
    %v2930 = vsel %vm2914, %v2888, %v2922
    %v2931 = vsel %vm2915, %v2893, %v2923
    %v2932 = vsel %vm2916, %v2898, %v2924
    %v2933 = vsel %vm2917, %v2903, %v2925
    %v2934 = vsel %vm2918, %v2908, %v2926
    %v2935 = vld [vmem:[%s57] sm:$0x3]
    %v2936 = vld [vmem:[%s59] sm:$0x1]
    %v2938 = vsel %vm711, %v2936, 0
    %2940 = vmatprep.subr.mxu0 0.0
    %2941 = vmatpush1.msra.mxu0 0.0
    %2942 = vmatprep.subr.mxu0 0.0
    %2943 = vmatpush1.msra.mxu0 0.0
    %2944 = vmatprep.subr.mxu0 0.0
    %2945 = vmatpush1.msra.mxu0 0.0
    %2946 = vmatprep.subr.mxu0 0.0
    %2947 = vmatpush1.msra.mxu0 0.0
    %2948 = vmatprep.subr.mxu0 0.0
    %2949 = vmatpush1.msra.mxu0 0.0
    %2950 = vmatprep.subr.mxu0 0.0
    %2951 = vmatpush1.msra.mxu0 0.0
    %2952 = vmatprep.subr.mxu0 0.0
    %2953 = vmatpush1.msra.mxu0 0.0
    %2954 = vmatprep.subr.mxu0 0.0
    %2955 = vmatpush1.msra.mxu0 0.0
    %2956 = vmatprep.subr.mxu0 0.0
    %2957 = vmatpush1.msra.mxu0 0.0
    %2958 = vmatprep.subr.mxu0 0.0
    %2959 = vmatpush1.msra.mxu0 0.0
    %2960 = vmatprep.subr.mxu0 0.0
    %2961 = vmatpush1.msra.mxu0 0.0
    %2962 = vmatprep.subr.mxu0 0.0
    %2963 = vmatpush1.msra.mxu0 0.0
    %2964 = vmatprep.subr.mxu0 0.0
    %2965 = vmatpush1.msra.mxu0 %v893
    %2966 = vmatprep.subr.mxu0 0.0
    %2967 = vmatpush1.msra.mxu0 %v892
    %2968 = vmatprep.subr.mxu0 0.0
    %2969 = vmatpush1.msra.mxu0 %v891
    %2970 = vmatprep.subr.mxu0 0.0
    %2971 = vmatpush1.msra.mxu0 %v890
    %2972 = vmatprep.subr.mxu0 0.0
    %2973 = vmatpush2.msra.mxu0 0.0
    %2974 = vmatprep.subr.mxu0 0.0
    %2975 = vmatpush2.msra.mxu0 0.0
    %2976 = vmatprep.subr.mxu0 0.0
    %2977 = vmatpush2.msra.mxu0 0.0
    %2978 = vmatprep.subr.mxu0 0.0
    %2979 = vmatpush2.msra.mxu0 0.0
    %2980 = vmatprep.subr.mxu0 0.0
    %2981 = vmatpush2.msra.mxu0 0.0
    %2982 = vmatprep.subr.mxu0 0.0
    %2983 = vmatpush2.msra.mxu0 0.0
    %2984 = vmatprep.subr.mxu0 0.0
    %2985 = vmatpush2.msra.mxu0 0.0
    %2986 = vmatprep.subr.mxu0 0.0
    %2987 = vmatpush2.msra.mxu0 0.0
    %2988 = vmatprep.subr.mxu0 0.0
    %2989 = vmatpush2.msra.mxu0 0.0
    %2990 = vmatprep.subr.mxu0 0.0
    %2991 = vmatpush2.msra.mxu0 0.0
    %2992 = vmatprep.subr.mxu0 0.0
    %2993 = vmatpush2.msra.mxu0 0.0
    %2994 = vmatprep.subr.mxu0 0.0
    %2995 = vmatpush2.msra.mxu0 0.0
    %2996 = vmatprep.subr.mxu0 0.0
    %2997 = vmatpush2.msra.mxu0 0.0
    %2998 = vmatprep.subr.mxu0 0.0
    %2999 = vmatpush2.msra.mxu0 0.0
    %3000 = vmatprep.subr.mxu0 0.0
    %3001 = vmatpush2.msra.mxu0 0.0
    %3002 = vmatprep.subr.mxu0 0.0
    %3003 = vmatpush2.msra.mxu0 0.0
    %3004 = vmatprep.mubr.f32.mxu0 0.0
    %3005 = vmatmul.mubr.f32.gmra.mxu0 %v2938
    %v3006 = vpop.f32.mrf.mxu0
    %v3007 = vadd.f32 0.0, %v3006
    %v3008 = vpop.f32.mrf.mxu0
    %3009 = vdwg.mxu0
    %v3010 = vlaneseq
    %v3011 = vshrl.u32 %v3010, 7
    %v3012 = vsub.s32 0, %v3011
    %v3013 = vrot.slane %v3007, %v3012
    %vm3014 = vcmask 523264
    %v3016 = vsel %vm3014, %v2935, 0
    %3018 = vmatprep.subr.mxu0 0.0
    %3019 = vmatpush1.msra.mxu0 0.0
    %3020 = vmatprep.subr.mxu0 0.0
    %3021 = vmatpush1.msra.mxu0 0.0
    %3022 = vmatprep.subr.mxu0 0.0
    %3023 = vmatpush1.msra.mxu0 0.0
    %3024 = vmatprep.subr.mxu0 0.0
    %3025 = vmatpush1.msra.mxu0 0.0
    %3026 = vmatprep.subr.mxu0 0.0
    %3027 = vmatpush1.msra.mxu0 0.0
    %3028 = vmatprep.subr.mxu0 0.0
    %3029 = vmatpush1.msra.mxu0 0.0
    %3030 = vmatprep.subr.mxu0 0.0
    %3031 = vmatpush1.msra.mxu0 0.0
    %3032 = vmatprep.subr.mxu0 0.0
    %3033 = vmatpush1.msra.mxu0 0.0
    %3034 = vmatprep.subr.mxu0 0.0
    %3035 = vmatpush1.msra.mxu0 %v2934
    %3036 = vmatprep.subr.mxu0 0.0
    %3037 = vmatpush1.msra.mxu0 %v2933
    %3038 = vmatprep.subr.mxu0 0.0
    %3039 = vmatpush1.msra.mxu0 %v2932
    %3040 = vmatprep.subr.mxu0 0.0
    %3041 = vmatpush1.msra.mxu0 %v2931
    %3042 = vmatprep.subr.mxu0 0.0
    %3043 = vmatpush1.msra.mxu0 %v2930
    %3044 = vmatprep.subr.mxu0 0.0
    %3045 = vmatpush1.msra.mxu0 %v2929
    %3046 = vmatprep.subr.mxu0 0.0
    %3047 = vmatpush1.msra.mxu0 %v2928
    %3048 = vmatprep.subr.mxu0 0.0
    %3049 = vmatpush1.msra.mxu0 %v2927
    %3050 = vmatprep.subr.mxu0 0.0
    %3051 = vmatpush2.msra.mxu0 0.0
    %3052 = vmatprep.subr.mxu0 0.0
    %3053 = vmatpush2.msra.mxu0 0.0
    %3054 = vmatprep.subr.mxu0 0.0
    %3055 = vmatpush2.msra.mxu0 0.0
    %3056 = vmatprep.subr.mxu0 0.0
    %3057 = vmatpush2.msra.mxu0 0.0
    %3058 = vmatprep.subr.mxu0 0.0
    %3059 = vmatpush2.msra.mxu0 0.0
    %3060 = vmatprep.subr.mxu0 0.0
    %3061 = vmatpush2.msra.mxu0 0.0
    %3062 = vmatprep.subr.mxu0 0.0
    %3063 = vmatpush2.msra.mxu0 0.0
    %3064 = vmatprep.subr.mxu0 0.0
    %3065 = vmatpush2.msra.mxu0 0.0
    %3066 = vmatprep.subr.mxu0 0.0
    %3067 = vmatpush2.msra.mxu0 0.0
    %3068 = vmatprep.subr.mxu0 0.0
    %3069 = vmatpush2.msra.mxu0 0.0
    %3070 = vmatprep.subr.mxu0 0.0
    %3071 = vmatpush2.msra.mxu0 0.0
    %3072 = vmatprep.subr.mxu0 0.0
    %3073 = vmatpush2.msra.mxu0 0.0
    %3074 = vmatprep.subr.mxu0 0.0
    %3075 = vmatpush2.msra.mxu0 0.0
    %3076 = vmatprep.subr.mxu0 0.0
    %3077 = vmatpush2.msra.mxu0 0.0
    %3078 = vmatprep.subr.mxu0 0.0
    %3079 = vmatpush2.msra.mxu0 0.0
    %3080 = vmatprep.subr.mxu0 0.0
    %3081 = vmatpush2.msra.mxu0 0.0
    %3082 = vmatprep.mubr.f32.mxu0 0.0
    %3083 = vmatmul.mubr.f32.gmra.mxu0 %v3016
    %v3084 = vpop.f32.mrf.mxu0
    %v3085 = vadd.f32 %v3013, %v3084
    %v3086 = vpop.f32.mrf.mxu0
    %3087 = vdwg.mxu0
    %v3088 = vld [vmem:[#allocation3] sm:$0x1]
    %v3090 = vlaneseq
    %v3091 = vshrl.u32 %v3090, 7
    %v3092 = vsub.s32 0, %v3091
    %v3093 = vrot.slane %v3088, %v3092
    %3094 = vset.pattern.permute.xlu0 0
    %3095 = vperm.xlu0 %3094, %v3093
    %v3096 = vpop.permute.xlu0 %3095
    %v3098 = vadd.f32 %v3085, %v3096
    %3099 = vst [vmem:[#allocation4] sm:$0x3] %v3098
    %3100 = vrot.lane.b32.xlu0 %v2155, 24
    %v3101 = vpop.permute.xlu0 %3100
    %v3103 = vsel %vm1018, %v2146, %v3101
    %vm3104 = vcmask 457728
    %v3105 = vsel %vm3104, %v3103, 0.0
    %3106 = vst [vmem:[%s65] sm:$0xff] %v3105
    // Predicated region
    $region126: #{pasgen_forward.1} parent=1 // pred_check
      _
    $region127: #{pasgen_forward.1} parent=1 // pred_check_branch
      %3108 = sbr.rel (0) target = $region129
    $region128: #{pasgen_forward.1} parent=1 // pred_region
      %s3110 = ssub.s32 32, 32
      %3111 = vsyncadd [#allocation5], %s3110
      %s3113 = sshll.u32 [#allocation4], 4
      %s3114 = int_to_ptr.vmem [resolvable:$true] %s3113
      %3116 = dma.vmem_to_hbm [thread:$0]  %s3114, 32, %s63, [#allocation5]
    $region129: #{pasgen_forward.1} parent=1 // pred_fallthru
      _
    // Predicated region
    $region130: #{pasgen_forward.1} parent=1 // pred_check
      _
    $region131: #{pasgen_forward.1} parent=1 // pred_check_branch
      %3118 = sbr.rel (0) target = $region133
    $region132: #{pasgen_forward.1} parent=1 // pred_region
      _
    $region133: #{pasgen_forward.1} parent=1 // pred_fallthru
      _
    // Predicated region
    $region134: #{pasgen_forward.1} parent=1 // pred_check
      _
    $region135: #{pasgen_forward.1} parent=1 // pred_check_branch
      %3120 = sbr.rel (0) target = $region137
    $region136: #{pasgen_forward.1} parent=1 // pred_region
      %3121 = dma.done [#allocation5], 32
    $region137: #{pasgen_forward.1} parent=1 // pred_fallthru
      _
    // Predicated region
    $region138: #{pasgen_forward.1} parent=1 // pred_check
      _
    $region139: #{pasgen_forward.1} parent=1 // pred_check_branch
      %3123 = sbr.rel (0) target = $region141
    $region140: #{pasgen_forward.1} parent=1 // pred_region
      _
    $region141: #{pasgen_forward.1} parent=1 // pred_fallthru
      _
    %3124 = vsyncpa [#allocation5], 1

</llo_original>
